<compile_context>
chip_gen: v6e
topology: v6e:2x2x1
jax: 0.10.0
libtpu: 0.0.40
codegen_flags: <defaults>
</compile_context>

<pallas_src>
import functools

import jax
import jax.numpy as jnp
from jax.experimental import pallas as pl
from jax.experimental.pallas import tpu as pltpu


def _conv3x3_acc(x4, w_ref, wm_lo, wm_hi, *, bb, H, W, C):
    """3x3 SAME conv as 9 accumulating MXU matmuls of K=C.

    x4     : (bb, H, W, C) value in the compute dtype.
    w_ref  : (9, C, C) weight Ref, row j = kh*3 + kw, each (Cin, Cout).
    wm_lo  : (bb*H*W, C) bool, rows with w >= 1      (valid for the dw=-1 tap)
    wm_hi  : (bb*H*W, C) bool, rows with w <= W - 2  (valid for the dw=+1 tap)
    returns (bb*H*W, C) float32 accumulator.
    """
    N = bb * H * W
    f32 = jnp.float32
    acc = None
    for kh in range(3):
        dh = kh - 1
        # ---- H-direction shift with zero fill: major-dim slice + concat ----
        if dh == 0:
            v4 = x4
        else:
            zrow = jnp.zeros((bb, 1, W, C), x4.dtype)
            if dh == 1:      # out[h] = x[h+1], zero at h = H-1
                v4 = jnp.concatenate([x4[:, 1:, :, :], zrow], axis=1)
            else:            # out[h] = x[h-1], zero at h = 0
                v4 = jnp.concatenate([zrow, x4[:, :H - 1, :, :]], axis=1)
        # leading-dim merge only (last dim unchanged) -> layout-free.
        v2 = v4.reshape(N, C)
        for kw in range(3):
            dw = kw - 1
            # ---- W-direction shift: sublane roll on the flat view + mask ----
            if dw == 0:
                t = v2
            elif dw == 1:    # out[w] = v[w+1]; wrapped rows (w = W-1) masked
                t = jnp.where(wm_hi, pltpu.roll(v2, N - 1, 0), 0)
            else:            # out[w] = v[w-1]; wrapped rows (w = 0) masked
                t = jnp.where(wm_lo, pltpu.roll(v2, 1, 0), 0)
            part = jnp.dot(t, w_ref[kh * 3 + kw], preferred_element_type=f32)
            acc = part if acc is None else acc + part
    return acc


def _residual_kernel(x_ref, w1_ref, s1_ref, b1_ref, w2_ref, s2_ref, b2_ref,
                     out_ref, *, bb, H, W, C, cdt):
    """One grid step processes `bb` images.

    x_ref  : (bb, H, W, C) input block (compute dtype)
    w*_ref : (9, C, C)     conv weights, tap-major (compute dtype)
    s*/b*  : (1, C) f32    folded BN scale / bias
    out_ref: (bb, H, W, C) output block
    """
    f32 = jnp.float32
    N = bb * H * W

    # W-boundary masks, hoisted once and reused by both convs (3 taps each).
    # Built from a 2-D sublane iota + leading-dim broadcast + leading-dim
    # merge (no major-dim iota, no integer div/mod).
    w_iota = jax.lax.broadcasted_iota(jnp.int32, (W, C), 0)
    w_idx = jnp.broadcast_to(w_iota[None, None], (bb, H, W, C)).reshape(N, C)
    wm_lo = w_idx >= 1
    wm_hi = w_idx < (W - 1)

    # ---- conv1 -> folded bn1 -> relu (post-matmul elementwise stays f32) ----
    x4 = x_ref[...]                                       # (bb, H, W, C) cdt
    acc1 = _conv3x3_acc(x4, w1_ref, wm_lo, wm_hi, bb=bb, H=H, W=W, C=C)
    mid = jnp.maximum(acc1 * s1_ref[...] + b1_ref[...], 0.0).astype(cdt)

    # ---- conv2 -> folded bn2 ----
    acc2 = _conv3x3_acc(mid.reshape(bb, H, W, C), w2_ref, wm_lo, wm_hi,
                        bb=bb, H=H, W=W, C=C)
    out2 = acc2 * s2_ref[...] + b2_ref[...]

    # ---- residual add + relu (re-read x from VMEM so x4 need not stay live) -
    resid = x_ref[...].reshape(N, C).astype(f32)
    res = jnp.maximum(resid + out2, 0.0)
    out_ref[...] = res.reshape(bb, H, W, C).astype(out_ref.dtype)


def _pick_images_per_step(B, H, W, C, itemsize):
    """Largest divisor of B whose per-step footprint fits a v7x-safe budget,
    keeping >=2 grid steps when possible (megacore sharding / pipelining)."""
    per_img = H * W * C * (5 * itemsize + 5 * 4)   # blocks + live values, rough
    budget = 24 << 20                              # conservative for v7x 64 MiB
    bb = max(1, min(B, budget // max(per_img, 1)))
    if B > 1:
        bb = min(bb, max(1, B // 2))
    while B % bb:
        bb -= 1
    return int(bb)


def residual_forward_nhwc(x_nhwc, w1, s1, b1, w2, s2, b2, *,
                          compute_dtype=None, images_per_step=None,
                          out_dtype=jnp.float32):
    """x_nhwc: (B,H,W,C); w*: (3,3,C,C) HWIO; s*/b*: per-channel folded BN."""
    B, H, W, C = x_nhwc.shape
    if compute_dtype is None:
        # bf16 MXU operands on TPU (full-rate on v6e/v7x, halves HBM/VMEM
        # traffic everywhere); accumulation + elementwise stay f32.
        compute_dtype = (jnp.bfloat16 if jax.default_backend() == "tpu"
                         else jnp.float32)
    itemsize = jnp.dtype(compute_dtype).itemsize
    bb = (images_per_step if images_per_step is not None
          else _pick_images_per_step(B, H, W, C, itemsize))
    assert B % bb == 0, "images_per_step must divide the batch"

    xc = x_nhwc.astype(compute_dtype)
    # tap-major weights: w[j] = W[kh, kw] with j = kh*3 + kw, each (Cin, Cout)
    w1f = w1.reshape(9, C, C).astype(compute_dtype)
    w2f = w2.reshape(9, C, C).astype(compute_dtype)
    s1f = jnp.asarray(s1, jnp.float32).reshape(1, C)
    b1f = jnp.asarray(b1, jnp.float32).reshape(1, C)
    s2f = jnp.asarray(s2, jnp.float32).reshape(1, C)
    b2f = jnp.asarray(b2, jnp.float32).reshape(1, C)

    kernel = functools.partial(_residual_kernel, bb=bb, H=H, W=W, C=C,
                               cdt=compute_dtype)

    # Explicit scoped-VMEM limit: double-buffered in/out blocks + weights +
    # in-kernel live values, clamped to [32 MiB, 64 MiB] (valid for v5e/v6e's
    # 128 MiB and v7x's 64 MiB physical VMEM).
    est = (2 * bb * H * W * C * (itemsize + jnp.dtype(out_dtype).itemsize)
           + 2 * 2 * 9 * C * C * itemsize
           + bb * H * W * C * (3 * itemsize + 3 * 4)
           + (4 << 20))
    vmem_limit = int(min(64 << 20, max(32 << 20, est)))

    out = pl.pallas_call(
        kernel,
        out_shape=jax.ShapeDtypeStruct((B, H, W, C), out_dtype),
        grid_spec=pltpu.PrefetchScalarGridSpec(
            num_scalar_prefetch=0,
            grid=(B // bb,),
            in_specs=[
                pl.BlockSpec((bb, H, W, C), lambda i: (i, 0, 0, 0)),
                pl.BlockSpec((9, C, C), lambda i: (0, 0, 0)),
                pl.BlockSpec((1, C), lambda i: (0, 0)),
                pl.BlockSpec((1, C), lambda i: (0, 0)),
                pl.BlockSpec((9, C, C), lambda i: (0, 0, 0)),
                pl.BlockSpec((1, C), lambda i: (0, 0)),
                pl.BlockSpec((1, C), lambda i: (0, 0)),
            ],
            out_specs=pl.BlockSpec((bb, H, W, C), lambda i: (i, 0, 0, 0)),
        ),
        # batch axis is independent -> "parallel" lets v7x shard it across
        # both TensorCores; harmless on single-TC v5e/v6e.
        compiler_params=pltpu.CompilerParams(
            dimension_semantics=("parallel",),
            vmem_limit_bytes=vmem_limit),
    )(xc, w1f, s1f, b1f, w2f, s2f, b2f)
    return out


def residual_forward_nchw(x_nchw, params, *, compute_dtype=None,
                          images_per_step=None, out_dtype=jnp.float32):
    """PyTorch-convention entry point: x is NCHW, output is NCHW."""
    x_nhwc = jnp.transpose(x_nchw, (0, 2, 3, 1))
    out = residual_forward_nhwc(x_nhwc, *params, compute_dtype=compute_dtype,
                                images_per_step=images_per_step,
                                out_dtype=out_dtype)
    return jnp.transpose(out, (0, 3, 1, 2))


def fold_bn(gamma, beta, mean, var, eps=1e-5):
    scale = gamma / jnp.sqrt(var + eps)
    bias = beta - mean * scale
    return scale.reshape(1, -1), bias.reshape(1, -1)


def reference_nhwc(x, w1, s1, b1, w2, s2, b2, compute_dtype):
    """Plain-JAX reference that emulates the kernel's operand rounding."""
    f32 = jnp.float32
    dn = ("NHWC", "HWIO", "NHWC")
    hp = jax.lax.Precision.HIGHEST
    xr = x.astype(compute_dtype).astype(f32)
    w1r = w1.astype(compute_dtype).astype(f32)
    w2r = w2.astype(compute_dtype).astype(f32)
    o = jax.lax.conv_general_dilated(xr, w1r, (1, 1), "SAME",
                                     dimension_numbers=dn, precision=hp)
    o = jnp.maximum(o * s1.reshape(1, 1, 1, -1) + b1.reshape(1, 1, 1, -1), 0.0)
    o = o.astype(compute_dtype).astype(f32)
    o = jax.lax.conv_general_dilated(o, w2r, (1, 1), "SAME",
                                     dimension_numbers=dn, precision=hp)
    o = o * s2.reshape(1, 1, 1, -1) + b2.reshape(1, 1, 1, -1)
    return jnp.maximum(xr + o, 0.0)


if __name__ == "__main__":
    B, C, H, W = 2, 4, 16, 16

    key = jax.random.PRNGKey(0)
    ks = jax.random.split(key, 12)

    # deterministic synthetic parameters (no checkpoint load)
    x_nchw = jax.random.normal(ks[0], (B, C, H, W), jnp.float32)

    w1 = jax.random.normal(ks[1], (3, 3, C, C), jnp.float32) * 0.2   # HWIO
    w2 = jax.random.normal(ks[2], (3, 3, C, C), jnp.float32) * 0.2

    g1 = 1.0 + 0.1 * jax.random.normal(ks[3], (C,), jnp.float32)
    be1 = 0.1 * jax.random.normal(ks[4], (C,), jnp.float32)
    m1 = 0.1 * jax.random.normal(ks[5], (C,), jnp.float32)
    v1 = jnp.abs(jax.random.normal(ks[6], (C,), jnp.float32)) + 0.5

    g2 = 1.0 + 0.1 * jax.random.normal(ks[7], (C,), jnp.float32)
    be2 = 0.1 * jax.random.normal(ks[8], (C,), jnp.float32)
    m2 = 0.1 * jax.random.normal(ks[9], (C,), jnp.float32)
    v2 = jnp.abs(jax.random.normal(ks[10], (C,), jnp.float32)) + 0.5

    s1, b1 = fold_bn(g1, be1, m1, v1)
    s2, b2 = fold_bn(g2, be2, m2, v2)
    params = (w1, s1, b1, w2, s2, b2)

    compute_dtype = (jnp.bfloat16 if jax.default_backend() == "tpu"
                     else jnp.float32)

    out = residual_forward_nchw(x_nchw, params, compute_dtype=compute_dtype)
    out = jax.block_until_ready(out)

    # correctness check against a plain-JAX reference (same operand rounding)
    x_nhwc = jnp.transpose(x_nchw, (0, 2, 3, 1))
    ref = reference_nhwc(x_nhwc, w1, s1, b1, w2, s2, b2, compute_dtype)
    ref_nchw = jnp.transpose(ref, (0, 3, 1, 2))

    tol = 1e-4 if compute_dtype == jnp.float32 else 2e-3
    assert out.shape == (B, C, H, W)
    assert jnp.allclose(out, ref_nchw, atol=tol, rtol=tol), (
        float(jnp.max(jnp.abs(out - ref_nchw))))

    print("KERNEL_OK")
</pallas_src>

<mosaic_0001>
module attributes {stable_mosaic.version = 11 : i64} {
  func.func @_residual_kernel(%arg0: i32, %arg1: memref<1x16x16x4xf32, #tpu.memory_space<vmem>>, %arg2: memref<9x4x4xf32, #tpu.memory_space<vmem>>, %arg3: memref<1x4xf32, #tpu.memory_space<vmem>>, %arg4: memref<1x4xf32, #tpu.memory_space<vmem>>, %arg5: memref<9x4x4xf32, #tpu.memory_space<vmem>>, %arg6: memref<1x4xf32, #tpu.memory_space<vmem>>, %arg7: memref<1x4xf32, #tpu.memory_space<vmem>>, %arg8: memref<1x16x16x4xf32, #tpu.memory_space<vmem>>) attributes {dimension_semantics = [#tpu.dimension_semantics<parallel>], iteration_bounds = array<i64: 2>, scalar_prefetch = 0 : i64, scratch_operands = 0 : i64, tpu.core_type = #tpu.core_type<tc>, window_params = [{transform_indices = @transform_0, window_bounds = array<i64: 1, 16, 16, 4>}, {pipeline_mode = #tpu.pipeline_mode<synchronous>, transform_indices = @transform_1, window_bounds = array<i64: 9, 4, 4>}, {pipeline_mode = #tpu.pipeline_mode<synchronous>, transform_indices = @transform_2, window_bounds = array<i64: 1, 4>}, {pipeline_mode = #tpu.pipeline_mode<synchronous>, transform_indices = @transform_3, window_bounds = array<i64: 1, 4>}, {pipeline_mode = #tpu.pipeline_mode<synchronous>, transform_indices = @transform_4, window_bounds = array<i64: 9, 4, 4>}, {pipeline_mode = #tpu.pipeline_mode<synchronous>, transform_indices = @transform_5, window_bounds = array<i64: 1, 4>}, {pipeline_mode = #tpu.pipeline_mode<synchronous>, transform_indices = @transform_6, window_bounds = array<i64: 1, 4>}, {transform_indices = @transform_7, window_bounds = array<i64: 1, 16, 16, 4>}]} {
    %0 = tpu.iota {dimensions = array<i32: 0>} : vector<16x4xi32>
    %1 = vector.shape_cast %0 : vector<16x4xi32> to vector<1x1x16x4xi32>
    %2 = vector.shape_cast %1 : vector<1x1x16x4xi32> to vector<1x1x16x4xi32>
    %3 = vector.broadcast %2 : vector<1x1x16x4xi32> to vector<1x16x16x4xi32>
    %4 = vector.shape_cast %3 : vector<1x16x16x4xi32> to vector<256x4xi32>
    %c1_i32 = arith.constant 1 : i32
    %5 = vector.broadcast %c1_i32 : i32 to vector<256x4xi32>
    %6 = arith.cmpi sge, %4, %5 : vector<256x4xi32>
    %c15_i32 = arith.constant 15 : i32
    %7 = vector.broadcast %c15_i32 : i32 to vector<256x4xi32>
    %8 = arith.cmpi slt, %4, %7 : vector<256x4xi32>
    %c0 = arith.constant 0 : index
    %c0_0 = arith.constant 0 : index
    %c0_1 = arith.constant 0 : index
    %c0_2 = arith.constant 0 : index
    %9 = vector.load %arg1[%c0, %c0_0, %c0_1, %c0_2] : memref<1x16x16x4xf32, #tpu.memory_space<vmem>>, vector<1x16x16x4xf32>
    %cst = arith.constant 0.000000e+00 : f32
    %10 = vector.broadcast %cst : f32 to vector<1x1x16x4xf32>
    %11 = vector.extract_strided_slice %9 {offsets = [0, 0, 0, 0], sizes = [1, 15, 16, 4], strides = [1, 1, 1, 1]} : vector<1x16x16x4xf32> to vector<1x15x16x4xf32>
    %12 = tpu.concatenate %10, %11 in 1 : vector<1x1x16x4xf32>, vector<1x15x16x4xf32> -> vector<1x16x16x4xf32>
    %13 = vector.shape_cast %12 : vector<1x16x16x4xf32> to vector<256x4xf32>
    %c1_i32_3 = arith.constant 1 : i32
    %14 = tpu.dynamic_rotate %13 by %c1_i32_3 dim 0 : vector<256x4xf32>, i32 -> vector<256x4xf32>
    %c0_i32 = arith.constant 0 : i32
    %15 = arith.sitofp %c0_i32 : i32 to f32
    %16 = vector.broadcast %15 : f32 to vector<256x4xf32>
    %17 = arith.select %6, %14, %16 : vector<256x4xi1>, vector<256x4xf32>
    %c0_4 = arith.constant 0 : index
    %c0_5 = arith.constant 0 : index
    %c0_6 = arith.constant 0 : index
    %18 = vector.load %arg2[%c0_4, %c0_5, %c0_6] : memref<9x4x4xf32, #tpu.memory_space<vmem>>, vector<1x4x4xf32>
    %19 = vector.shape_cast %18 : vector<1x4x4xf32> to vector<4x4xf32>
    %cst_7 = arith.constant dense<0.000000e+00> : vector<256x4xf32>
    %20 = tpu.matmul %17, %19, %cst_7 {dimension_numbers = #tpu.dot_dimension_numbers<[1], [0], [0], [1], [0, 0, 1, 1], [], []>} : vector<256x4xf32>, vector<4x4xf32>, vector<256x4xf32> -> vector<256x4xf32>
    %c1 = arith.constant 1 : index
    %c0_8 = arith.constant 0 : index
    %c0_9 = arith.constant 0 : index
    %21 = vector.load %arg2[%c1, %c0_8, %c0_9] : memref<9x4x4xf32, #tpu.memory_space<vmem>>, vector<1x4x4xf32>
    %22 = vector.shape_cast %21 : vector<1x4x4xf32> to vector<4x4xf32>
    %cst_10 = arith.constant dense<0.000000e+00> : vector<256x4xf32>
    %23 = tpu.matmul %13, %22, %cst_10 {dimension_numbers = #tpu.dot_dimension_numbers<[1], [0], [0], [1], [0, 0, 1, 1], [], []>} : vector<256x4xf32>, vector<4x4xf32>, vector<256x4xf32> -> vector<256x4xf32>
    %24 = arith.addf %20, %23 : vector<256x4xf32>
    %c255_i32 = arith.constant 255 : i32
    %25 = tpu.dynamic_rotate %13 by %c255_i32 dim 0 : vector<256x4xf32>, i32 -> vector<256x4xf32>
    %c0_i32_11 = arith.constant 0 : i32
    %26 = arith.sitofp %c0_i32_11 : i32 to f32
    %27 = vector.broadcast %26 : f32 to vector<256x4xf32>
    %28 = arith.select %8, %25, %27 : vector<256x4xi1>, vector<256x4xf32>
    %c2 = arith.constant 2 : index
    %c0_12 = arith.constant 0 : index
    %c0_13 = arith.constant 0 : index
    %29 = vector.load %arg2[%c2, %c0_12, %c0_13] : memref<9x4x4xf32, #tpu.memory_space<vmem>>, vector<1x4x4xf32>
    %30 = vector.shape_cast %29 : vector<1x4x4xf32> to vector<4x4xf32>
    %cst_14 = arith.constant dense<0.000000e+00> : vector<256x4xf32>
    %31 = tpu.matmul %28, %30, %cst_14 {dimension_numbers = #tpu.dot_dimension_numbers<[1], [0], [0], [1], [0, 0, 1, 1], [], []>} : vector<256x4xf32>, vector<4x4xf32>, vector<256x4xf32> -> vector<256x4xf32>
    %32 = arith.addf %24, %31 : vector<256x4xf32>
    %33 = vector.shape_cast %9 : vector<1x16x16x4xf32> to vector<256x4xf32>
    %c1_i32_15 = arith.constant 1 : i32
    %34 = tpu.dynamic_rotate %33 by %c1_i32_15 dim 0 : vector<256x4xf32>, i32 -> vector<256x4xf32>
    %c0_i32_16 = arith.constant 0 : i32
    %35 = arith.sitofp %c0_i32_16 : i32 to f32
    %36 = vector.broadcast %35 : f32 to vector<256x4xf32>
    %37 = arith.select %6, %34, %36 : vector<256x4xi1>, vector<256x4xf32>
    %c3 = arith.constant 3 : index
    %c0_17 = arith.constant 0 : index
    %c0_18 = arith.constant 0 : index
    %38 = vector.load %arg2[%c3, %c0_17, %c0_18] : memref<9x4x4xf32, #tpu.memory_space<vmem>>, vector<1x4x4xf32>
    %39 = vector.shape_cast %38 : vector<1x4x4xf32> to vector<4x4xf32>
    %cst_19 = arith.constant dense<0.000000e+00> : vector<256x4xf32>
    %40 = tpu.matmul %37, %39, %cst_19 {dimension_numbers = #tpu.dot_dimension_numbers<[1], [0], [0], [1], [0, 0, 1, 1], [], []>} : vector<256x4xf32>, vector<4x4xf32>, vector<256x4xf32> -> vector<256x4xf32>
    %41 = arith.addf %32, %40 : vector<256x4xf32>
    %c4 = arith.constant 4 : index
    %c0_20 = arith.constant 0 : index
    %c0_21 = arith.constant 0 : index
    %42 = vector.load %arg2[%c4, %c0_20, %c0_21] : memref<9x4x4xf32, #tpu.memory_space<vmem>>, vector<1x4x4xf32>
    %43 = vector.shape_cast %42 : vector<1x4x4xf32> to vector<4x4xf32>
    %cst_22 = arith.constant dense<0.000000e+00> : vector<256x4xf32>
    %44 = tpu.matmul %33, %43, %cst_22 {dimension_numbers = #tpu.dot_dimension_numbers<[1], [0], [0], [1], [0, 0, 1, 1], [], []>} : vector<256x4xf32>, vector<4x4xf32>, vector<256x4xf32> -> vector<256x4xf32>
    %45 = arith.addf %41, %44 : vector<256x4xf32>
    %c255_i32_23 = arith.constant 255 : i32
    %46 = tpu.dynamic_rotate %33 by %c255_i32_23 dim 0 : vector<256x4xf32>, i32 -> vector<256x4xf32>
    %c0_i32_24 = arith.constant 0 : i32
    %47 = arith.sitofp %c0_i32_24 : i32 to f32
    %48 = vector.broadcast %47 : f32 to vector<256x4xf32>
    %49 = arith.select %8, %46, %48 : vector<256x4xi1>, vector<256x4xf32>
    %c5 = arith.constant 5 : index
    %c0_25 = arith.constant 0 : index
    %c0_26 = arith.constant 0 : index
    %50 = vector.load %arg2[%c5, %c0_25, %c0_26] : memref<9x4x4xf32, #tpu.memory_space<vmem>>, vector<1x4x4xf32>
    %51 = vector.shape_cast %50 : vector<1x4x4xf32> to vector<4x4xf32>
    %cst_27 = arith.constant dense<0.000000e+00> : vector<256x4xf32>
    %52 = tpu.matmul %49, %51, %cst_27 {dimension_numbers = #tpu.dot_dimension_numbers<[1], [0], [0], [1], [0, 0, 1, 1], [], []>} : vector<256x4xf32>, vector<4x4xf32>, vector<256x4xf32> -> vector<256x4xf32>
    %53 = arith.addf %45, %52 : vector<256x4xf32>
    %cst_28 = arith.constant 0.000000e+00 : f32
    %54 = vector.broadcast %cst_28 : f32 to vector<1x1x16x4xf32>
    %55 = vector.extract_strided_slice %9 {offsets = [0, 1, 0, 0], sizes = [1, 15, 16, 4], strides = [1, 1, 1, 1]} : vector<1x16x16x4xf32> to vector<1x15x16x4xf32>
    %56 = tpu.concatenate %55, %54 in 1 : vector<1x15x16x4xf32>, vector<1x1x16x4xf32> -> vector<1x16x16x4xf32>
    %57 = vector.shape_cast %56 : vector<1x16x16x4xf32> to vector<256x4xf32>
    %c1_i32_29 = arith.constant 1 : i32
    %58 = tpu.dynamic_rotate %57 by %c1_i32_29 dim 0 : vector<256x4xf32>, i32 -> vector<256x4xf32>
    %c0_i32_30 = arith.constant 0 : i32
    %59 = arith.sitofp %c0_i32_30 : i32 to f32
    %60 = vector.broadcast %59 : f32 to vector<256x4xf32>
    %61 = arith.select %6, %58, %60 : vector<256x4xi1>, vector<256x4xf32>
    %c6 = arith.constant 6 : index
    %c0_31 = arith.constant 0 : index
    %c0_32 = arith.constant 0 : index
    %62 = vector.load %arg2[%c6, %c0_31, %c0_32] : memref<9x4x4xf32, #tpu.memory_space<vmem>>, vector<1x4x4xf32>
    %63 = vector.shape_cast %62 : vector<1x4x4xf32> to vector<4x4xf32>
    %cst_33 = arith.constant dense<0.000000e+00> : vector<256x4xf32>
    %64 = tpu.matmul %61, %63, %cst_33 {dimension_numbers = #tpu.dot_dimension_numbers<[1], [0], [0], [1], [0, 0, 1, 1], [], []>} : vector<256x4xf32>, vector<4x4xf32>, vector<256x4xf32> -> vector<256x4xf32>
    %65 = arith.addf %53, %64 : vector<256x4xf32>
    %c7 = arith.constant 7 : index
    %c0_34 = arith.constant 0 : index
    %c0_35 = arith.constant 0 : index
    %66 = vector.load %arg2[%c7, %c0_34, %c0_35] : memref<9x4x4xf32, #tpu.memory_space<vmem>>, vector<1x4x4xf32>
    %67 = vector.shape_cast %66 : vector<1x4x4xf32> to vector<4x4xf32>
    %cst_36 = arith.constant dense<0.000000e+00> : vector<256x4xf32>
    %68 = tpu.matmul %57, %67, %cst_36 {dimension_numbers = #tpu.dot_dimension_numbers<[1], [0], [0], [1], [0, 0, 1, 1], [], []>} : vector<256x4xf32>, vector<4x4xf32>, vector<256x4xf32> -> vector<256x4xf32>
    %69 = arith.addf %65, %68 : vector<256x4xf32>
    %c255_i32_37 = arith.constant 255 : i32
    %70 = tpu.dynamic_rotate %57 by %c255_i32_37 dim 0 : vector<256x4xf32>, i32 -> vector<256x4xf32>
    %c0_i32_38 = arith.constant 0 : i32
    %71 = arith.sitofp %c0_i32_38 : i32 to f32
    %72 = vector.broadcast %71 : f32 to vector<256x4xf32>
    %73 = arith.select %8, %70, %72 : vector<256x4xi1>, vector<256x4xf32>
    %c8 = arith.constant 8 : index
    %c0_39 = arith.constant 0 : index
    %c0_40 = arith.constant 0 : index
    %74 = vector.load %arg2[%c8, %c0_39, %c0_40] : memref<9x4x4xf32, #tpu.memory_space<vmem>>, vector<1x4x4xf32>
    %75 = vector.shape_cast %74 : vector<1x4x4xf32> to vector<4x4xf32>
    %cst_41 = arith.constant dense<0.000000e+00> : vector<256x4xf32>
    %76 = tpu.matmul %73, %75, %cst_41 {dimension_numbers = #tpu.dot_dimension_numbers<[1], [0], [0], [1], [0, 0, 1, 1], [], []>} : vector<256x4xf32>, vector<4x4xf32>, vector<256x4xf32> -> vector<256x4xf32>
    %77 = arith.addf %69, %76 : vector<256x4xf32>
    %c0_42 = arith.constant 0 : index
    %c0_43 = arith.constant 0 : index
    %78 = vector.load %arg3[%c0_42, %c0_43] : memref<1x4xf32, #tpu.memory_space<vmem>>, vector<1x4xf32>
    %79 = vector.broadcast %78 : vector<1x4xf32> to vector<256x4xf32>
    %80 = arith.mulf %77, %79 : vector<256x4xf32>
    %c0_44 = arith.constant 0 : index
    %c0_45 = arith.constant 0 : index
    %81 = vector.load %arg4[%c0_44, %c0_45] : memref<1x4xf32, #tpu.memory_space<vmem>>, vector<1x4xf32>
    %82 = vector.broadcast %81 : vector<1x4xf32> to vector<256x4xf32>
    %83 = arith.addf %80, %82 : vector<256x4xf32>
    %cst_46 = arith.constant 0.000000e+00 : f32
    %84 = vector.broadcast %cst_46 : f32 to vector<256x4xf32>
    %85 = arith.maximumf %83, %84 : vector<256x4xf32>
    %86 = vector.shape_cast %85 : vector<256x4xf32> to vector<1x16x16x4xf32>
    %cst_47 = arith.constant 0.000000e+00 : f32
    %87 = vector.broadcast %cst_47 : f32 to vector<1x1x16x4xf32>
    %88 = vector.extract_strided_slice %86 {offsets = [0, 0, 0, 0], sizes = [1, 15, 16, 4], strides = [1, 1, 1, 1]} : vector<1x16x16x4xf32> to vector<1x15x16x4xf32>
    %89 = tpu.concatenate %87, %88 in 1 : vector<1x1x16x4xf32>, vector<1x15x16x4xf32> -> vector<1x16x16x4xf32>
    %90 = vector.shape_cast %89 : vector<1x16x16x4xf32> to vector<256x4xf32>
    %c1_i32_48 = arith.constant 1 : i32
    %91 = tpu.dynamic_rotate %90 by %c1_i32_48 dim 0 : vector<256x4xf32>, i32 -> vector<256x4xf32>
    %c0_i32_49 = arith.constant 0 : i32
    %92 = arith.sitofp %c0_i32_49 : i32 to f32
    %93 = vector.broadcast %92 : f32 to vector<256x4xf32>
    %94 = arith.select %6, %91, %93 : vector<256x4xi1>, vector<256x4xf32>
    %c0_50 = arith.constant 0 : index
    %c0_51 = arith.constant 0 : index
    %c0_52 = arith.constant 0 : index
    %95 = vector.load %arg5[%c0_50, %c0_51, %c0_52] : memref<9x4x4xf32, #tpu.memory_space<vmem>>, vector<1x4x4xf32>
    %96 = vector.shape_cast %95 : vector<1x4x4xf32> to vector<4x4xf32>
    %cst_53 = arith.constant dense<0.000000e+00> : vector<256x4xf32>
    %97 = tpu.matmul %94, %96, %cst_53 {dimension_numbers = #tpu.dot_dimension_numbers<[1], [0], [0], [1], [0, 0, 1, 1], [], []>} : vector<256x4xf32>, vector<4x4xf32>, vector<256x4xf32> -> vector<256x4xf32>
    %c1_54 = arith.constant 1 : index
    %c0_55 = arith.constant 0 : index
    %c0_56 = arith.constant 0 : index
    %98 = vector.load %arg5[%c1_54, %c0_55, %c0_56] : memref<9x4x4xf32, #tpu.memory_space<vmem>>, vector<1x4x4xf32>
    %99 = vector.shape_cast %98 : vector<1x4x4xf32> to vector<4x4xf32>
    %cst_57 = arith.constant dense<0.000000e+00> : vector<256x4xf32>
    %100 = tpu.matmul %90, %99, %cst_57 {dimension_numbers = #tpu.dot_dimension_numbers<[1], [0], [0], [1], [0, 0, 1, 1], [], []>} : vector<256x4xf32>, vector<4x4xf32>, vector<256x4xf32> -> vector<256x4xf32>
    %101 = arith.addf %97, %100 : vector<256x4xf32>
    %c255_i32_58 = arith.constant 255 : i32
    %102 = tpu.dynamic_rotate %90 by %c255_i32_58 dim 0 : vector<256x4xf32>, i32 -> vector<256x4xf32>
    %c0_i32_59 = arith.constant 0 : i32
    %103 = arith.sitofp %c0_i32_59 : i32 to f32
    %104 = vector.broadcast %103 : f32 to vector<256x4xf32>
    %105 = arith.select %8, %102, %104 : vector<256x4xi1>, vector<256x4xf32>
    %c2_60 = arith.constant 2 : index
    %c0_61 = arith.constant 0 : index
    %c0_62 = arith.constant 0 : index
    %106 = vector.load %arg5[%c2_60, %c0_61, %c0_62] : memref<9x4x4xf32, #tpu.memory_space<vmem>>, vector<1x4x4xf32>
    %107 = vector.shape_cast %106 : vector<1x4x4xf32> to vector<4x4xf32>
    %cst_63 = arith.constant dense<0.000000e+00> : vector<256x4xf32>
    %108 = tpu.matmul %105, %107, %cst_63 {dimension_numbers = #tpu.dot_dimension_numbers<[1], [0], [0], [1], [0, 0, 1, 1], [], []>} : vector<256x4xf32>, vector<4x4xf32>, vector<256x4xf32> -> vector<256x4xf32>
    %109 = arith.addf %101, %108 : vector<256x4xf32>
    %110 = vector.shape_cast %86 : vector<1x16x16x4xf32> to vector<256x4xf32>
    %c1_i32_64 = arith.constant 1 : i32
    %111 = tpu.dynamic_rotate %110 by %c1_i32_64 dim 0 : vector<256x4xf32>, i32 -> vector<256x4xf32>
    %c0_i32_65 = arith.constant 0 : i32
    %112 = arith.sitofp %c0_i32_65 : i32 to f32
    %113 = vector.broadcast %112 : f32 to vector<256x4xf32>
    %114 = arith.select %6, %111, %113 : vector<256x4xi1>, vector<256x4xf32>
    %c3_66 = arith.constant 3 : index
    %c0_67 = arith.constant 0 : index
    %c0_68 = arith.constant 0 : index
    %115 = vector.load %arg5[%c3_66, %c0_67, %c0_68] : memref<9x4x4xf32, #tpu.memory_space<vmem>>, vector<1x4x4xf32>
    %116 = vector.shape_cast %115 : vector<1x4x4xf32> to vector<4x4xf32>
    %cst_69 = arith.constant dense<0.000000e+00> : vector<256x4xf32>
    %117 = tpu.matmul %114, %116, %cst_69 {dimension_numbers = #tpu.dot_dimension_numbers<[1], [0], [0], [1], [0, 0, 1, 1], [], []>} : vector<256x4xf32>, vector<4x4xf32>, vector<256x4xf32> -> vector<256x4xf32>
    %118 = arith.addf %109, %117 : vector<256x4xf32>
    %c4_70 = arith.constant 4 : index
    %c0_71 = arith.constant 0 : index
    %c0_72 = arith.constant 0 : index
    %119 = vector.load %arg5[%c4_70, %c0_71, %c0_72] : memref<9x4x4xf32, #tpu.memory_space<vmem>>, vector<1x4x4xf32>
    %120 = vector.shape_cast %119 : vector<1x4x4xf32> to vector<4x4xf32>
    %cst_73 = arith.constant dense<0.000000e+00> : vector<256x4xf32>
    %121 = tpu.matmul %110, %120, %cst_73 {dimension_numbers = #tpu.dot_dimension_numbers<[1], [0], [0], [1], [0, 0, 1, 1], [], []>} : vector<256x4xf32>, vector<4x4xf32>, vector<256x4xf32> -> vector<256x4xf32>
    %122 = arith.addf %118, %121 : vector<256x4xf32>
    %c255_i32_74 = arith.constant 255 : i32
    %123 = tpu.dynamic_rotate %110 by %c255_i32_74 dim 0 : vector<256x4xf32>, i32 -> vector<256x4xf32>
    %c0_i32_75 = arith.constant 0 : i32
    %124 = arith.sitofp %c0_i32_75 : i32 to f32
    %125 = vector.broadcast %124 : f32 to vector<256x4xf32>
    %126 = arith.select %8, %123, %125 : vector<256x4xi1>, vector<256x4xf32>
    %c5_76 = arith.constant 5 : index
    %c0_77 = arith.constant 0 : index
    %c0_78 = arith.constant 0 : index
    %127 = vector.load %arg5[%c5_76, %c0_77, %c0_78] : memref<9x4x4xf32, #tpu.memory_space<vmem>>, vector<1x4x4xf32>
    %128 = vector.shape_cast %127 : vector<1x4x4xf32> to vector<4x4xf32>
    %cst_79 = arith.constant dense<0.000000e+00> : vector<256x4xf32>
    %129 = tpu.matmul %126, %128, %cst_79 {dimension_numbers = #tpu.dot_dimension_numbers<[1], [0], [0], [1], [0, 0, 1, 1], [], []>} : vector<256x4xf32>, vector<4x4xf32>, vector<256x4xf32> -> vector<256x4xf32>
    %130 = arith.addf %122, %129 : vector<256x4xf32>
    %cst_80 = arith.constant 0.000000e+00 : f32
    %131 = vector.broadcast %cst_80 : f32 to vector<1x1x16x4xf32>
    %132 = vector.extract_strided_slice %86 {offsets = [0, 1, 0, 0], sizes = [1, 15, 16, 4], strides = [1, 1, 1, 1]} : vector<1x16x16x4xf32> to vector<1x15x16x4xf32>
    %133 = tpu.concatenate %132, %131 in 1 : vector<1x15x16x4xf32>, vector<1x1x16x4xf32> -> vector<1x16x16x4xf32>
    %134 = vector.shape_cast %133 : vector<1x16x16x4xf32> to vector<256x4xf32>
    %c1_i32_81 = arith.constant 1 : i32
    %135 = tpu.dynamic_rotate %134 by %c1_i32_81 dim 0 : vector<256x4xf32>, i32 -> vector<256x4xf32>
    %c0_i32_82 = arith.constant 0 : i32
    %136 = arith.sitofp %c0_i32_82 : i32 to f32
    %137 = vector.broadcast %136 : f32 to vector<256x4xf32>
    %138 = arith.select %6, %135, %137 : vector<256x4xi1>, vector<256x4xf32>
    %c6_83 = arith.constant 6 : index
    %c0_84 = arith.constant 0 : index
    %c0_85 = arith.constant 0 : index
    %139 = vector.load %arg5[%c6_83, %c0_84, %c0_85] : memref<9x4x4xf32, #tpu.memory_space<vmem>>, vector<1x4x4xf32>
    %140 = vector.shape_cast %139 : vector<1x4x4xf32> to vector<4x4xf32>
    %cst_86 = arith.constant dense<0.000000e+00> : vector<256x4xf32>
    %141 = tpu.matmul %138, %140, %cst_86 {dimension_numbers = #tpu.dot_dimension_numbers<[1], [0], [0], [1], [0, 0, 1, 1], [], []>} : vector<256x4xf32>, vector<4x4xf32>, vector<256x4xf32> -> vector<256x4xf32>
    %142 = arith.addf %130, %141 : vector<256x4xf32>
    %c7_87 = arith.constant 7 : index
    %c0_88 = arith.constant 0 : index
    %c0_89 = arith.constant 0 : index
    %143 = vector.load %arg5[%c7_87, %c0_88, %c0_89] : memref<9x4x4xf32, #tpu.memory_space<vmem>>, vector<1x4x4xf32>
    %144 = vector.shape_cast %143 : vector<1x4x4xf32> to vector<4x4xf32>
    %cst_90 = arith.constant dense<0.000000e+00> : vector<256x4xf32>
    %145 = tpu.matmul %134, %144, %cst_90 {dimension_numbers = #tpu.dot_dimension_numbers<[1], [0], [0], [1], [0, 0, 1, 1], [], []>} : vector<256x4xf32>, vector<4x4xf32>, vector<256x4xf32> -> vector<256x4xf32>
    %146 = arith.addf %142, %145 : vector<256x4xf32>
    %c255_i32_91 = arith.constant 255 : i32
    %147 = tpu.dynamic_rotate %134 by %c255_i32_91 dim 0 : vector<256x4xf32>, i32 -> vector<256x4xf32>
    %c0_i32_92 = arith.constant 0 : i32
    %148 = arith.sitofp %c0_i32_92 : i32 to f32
    %149 = vector.broadcast %148 : f32 to vector<256x4xf32>
    %150 = arith.select %8, %147, %149 : vector<256x4xi1>, vector<256x4xf32>
    %c8_93 = arith.constant 8 : index
    %c0_94 = arith.constant 0 : index
    %c0_95 = arith.constant 0 : index
    %151 = vector.load %arg5[%c8_93, %c0_94, %c0_95] : memref<9x4x4xf32, #tpu.memory_space<vmem>>, vector<1x4x4xf32>
    %152 = vector.shape_cast %151 : vector<1x4x4xf32> to vector<4x4xf32>
    %cst_96 = arith.constant dense<0.000000e+00> : vector<256x4xf32>
    %153 = tpu.matmul %150, %152, %cst_96 {dimension_numbers = #tpu.dot_dimension_numbers<[1], [0], [0], [1], [0, 0, 1, 1], [], []>} : vector<256x4xf32>, vector<4x4xf32>, vector<256x4xf32> -> vector<256x4xf32>
    %154 = arith.addf %146, %153 : vector<256x4xf32>
    %c0_97 = arith.constant 0 : index
    %c0_98 = arith.constant 0 : index
    %155 = vector.load %arg6[%c0_97, %c0_98] : memref<1x4xf32, #tpu.memory_space<vmem>>, vector<1x4xf32>
    %156 = vector.broadcast %155 : vector<1x4xf32> to vector<256x4xf32>
    %157 = arith.mulf %154, %156 : vector<256x4xf32>
    %c0_99 = arith.constant 0 : index
    %c0_100 = arith.constant 0 : index
    %158 = vector.load %arg7[%c0_99, %c0_100] : memref<1x4xf32, #tpu.memory_space<vmem>>, vector<1x4xf32>
    %159 = vector.broadcast %158 : vector<1x4xf32> to vector<256x4xf32>
    %160 = arith.addf %157, %159 : vector<256x4xf32>
    %c0_101 = arith.constant 0 : index
    %c0_102 = arith.constant 0 : index
    %c0_103 = arith.constant 0 : index
    %c0_104 = arith.constant 0 : index
    %161 = vector.load %arg1[%c0_101, %c0_102, %c0_103, %c0_104] : memref<1x16x16x4xf32, #tpu.memory_space<vmem>>, vector<1x16x16x4xf32>
    %162 = vector.shape_cast %161 : vector<1x16x16x4xf32> to vector<256x4xf32>
    %163 = arith.addf %162, %160 : vector<256x4xf32>
    %cst_105 = arith.constant 0.000000e+00 : f32
    %164 = vector.broadcast %cst_105 : f32 to vector<256x4xf32>
    %165 = arith.maximumf %163, %164 : vector<256x4xf32>
    %166 = vector.shape_cast %165 : vector<256x4xf32> to vector<1x16x16x4xf32>
    %c0_106 = arith.constant 0 : index
    %c0_107 = arith.constant 0 : index
    %c0_108 = arith.constant 0 : index
    %c0_109 = arith.constant 0 : index
    %167 = vector.load %arg8[%c0_106, %c0_107, %c0_108, %c0_109] : memref<1x16x16x4xf32, #tpu.memory_space<vmem>>, vector<1x16x16x4xf32>
    tpu.vector_store %arg8[%c0_106, %c0_107, %c0_108, %c0_109], %166 {strides = array<i32>} : memref<1x16x16x4xf32, #tpu.memory_space<vmem>>, vector<1x16x16x4xf32>,
    return
  }
  func.func @transform_0(%arg0: i32) -> (i32, i32, i32, i32) {
    %c0_i32 = arith.constant 0 : i32
    %c0_i32_0 = arith.constant 0 : i32
    %c0_i32_1 = arith.constant 0 : i32
    %c0_i32_2 = arith.constant 0 : i32
    return %arg0, %c0_i32, %c0_i32_0, %c0_i32_1 : i32, i32, i32, i32
  }
  func.func @transform_1(%arg0: i32) -> (i32, i32, i32) {
    %c0_i32 = arith.constant 0 : i32
    %c0_i32_0 = arith.constant 0 : i32
    %c0_i32_1 = arith.constant 0 : i32
    %c0_i32_2 = arith.constant 0 : i32
    return %c0_i32, %c0_i32_0, %c0_i32_1 : i32, i32, i32
  }
  func.func @transform_2(%arg0: i32) -> (i32, i32) {
    %c0_i32 = arith.constant 0 : i32
    %c0_i32_0 = arith.constant 0 : i32
    %c0_i32_1 = arith.constant 0 : i32
    return %c0_i32, %c0_i32_0 : i32, i32
  }
  func.func @transform_3(%arg0: i32) -> (i32, i32) {
    %c0_i32 = arith.constant 0 : i32
    %c0_i32_0 = arith.constant 0 : i32
    %c0_i32_1 = arith.constant 0 : i32
    return %c0_i32, %c0_i32_0 : i32, i32
  }
  func.func @transform_4(%arg0: i32) -> (i32, i32, i32) {
    %c0_i32 = arith.constant 0 : i32
    %c0_i32_0 = arith.constant 0 : i32
    %c0_i32_1 = arith.constant 0 : i32
    %c0_i32_2 = arith.constant 0 : i32
    return %c0_i32, %c0_i32_0, %c0_i32_1 : i32, i32, i32
  }
  func.func @transform_5(%arg0: i32) -> (i32, i32) {
    %c0_i32 = arith.constant 0 : i32
    %c0_i32_0 = arith.constant 0 : i32
    %c0_i32_1 = arith.constant 0 : i32
    return %c0_i32, %c0_i32_0 : i32, i32
  }
  func.func @transform_6(%arg0: i32) -> (i32, i32) {
    %c0_i32 = arith.constant 0 : i32
    %c0_i32_0 = arith.constant 0 : i32
    %c0_i32_1 = arith.constant 0 : i32
    return %c0_i32, %c0_i32_0 : i32, i32
  }
  func.func @transform_7(%arg0: i32) -> (i32, i32, i32, i32) {
    %c0_i32 = arith.constant 0 : i32
    %c0_i32_0 = arith.constant 0 : i32
    %c0_i32_1 = arith.constant 0 : i32
    %c0_i32_2 = arith.constant 0 : i32
    return %arg0, %c0_i32, %c0_i32_0, %c0_i32_1 : i32, i32, i32, i32
  }
}

</mosaic_0001>

<llo_original>
// kernel: tpu_custom_call.1
$region0: #{tpu_custom_call.1}
  #allocation0 [shape = 'u32[]', space=smem, size = 0x4, offset = 0x4, fixed_abs, tag = 'smem constant byte address 0x4 - core index']
  #allocation1 [shape = 'u32[144,128]{1,0:T(1,128)}', space=vmem, size = 0x12000, scoped, tag = 'internal scratch']
  %s0 = inlined_call_operand.vmem [shape: f32[2,16,16,4], index: 0, kind: input, shape index: {}]
  %s1 = inlined_call_operand.vmem [shape: f32[9,4,4], index: 1, kind: input, shape index: {}]
  %s2 = inlined_call_operand.vmem [shape: f32[1,4], index: 2, kind: input, shape index: {}]
  %s3 = inlined_call_operand.vmem [shape: f32[1,4], index: 3, kind: input, shape index: {}]
  %s4 = inlined_call_operand.vmem [shape: f32[9,4,4], index: 4, kind: input, shape index: {}]
  %s5 = inlined_call_operand.vmem [shape: f32[1,4], index: 5, kind: input, shape index: {}]
  %s6 = inlined_call_operand.vmem [shape: f32[1,4], index: 6, kind: input, shape index: {}]
  %s7 = inlined_call_operand.vmem [shape: f32[2,16,16,4], index: 7, kind: output, shape index: {}]
  %s8 = sld [smem:[#allocation0]]
  $region61: #{tpu_custom_call.1} parent=0
    _
  %s10 = ssub.s32 1, %s8
  %s11 = scalar_select 0, %s10, %s8
  loop: start=0, step=1, limit=4
  $region2: #{tpu_custom_call.1} parent=0 // loop_pre_header
    _
  $region3: #{tpu_custom_call.1} parent=0 // loop_header
    %s13 = sphi 0, %s17
    %p14 = scmp.ge.s32.totalorder %s13, 4
    %s23 = sphi 0, %s25
    %s26 = sphi 0, %s23
    %s27 = sphi 0, %s26
    %s43 = sphi 0, %s27
    %s47 = sphi 0, %s47
    %s49 = sphi 0, %s47
    %s50 = sphi 0, %s49
    %s64 = sphi 0, %s50
    %s68 = sphi 0, %s68
    %s70 = sphi 0, %s68
    %s71 = sphi 0, %s70
    %s85 = sphi 0, %s71
    %s89 = sphi 0, %s89
    %s91 = sphi 0, %s89
    %s92 = sphi 0, %s91
    %s106 = sphi 0, %s92
    %s110 = sphi 0, %s110
    %s112 = sphi 0, %s110
    %s113 = sphi 0, %s112
    %s127 = sphi 0, %s113
    %s131 = sphi 0, %s131
    %s133 = sphi 0, %s131
    %s134 = sphi 0, %s133
    %s148 = sphi 0, %s134
    %s152 = sphi 0, %s152
    %s154 = sphi 0, %s152
    %s155 = sphi 0, %s154
    %s169 = sphi 0, %s155
    %s175 = sphi 0, %s177
    %s178 = sphi 0, %s175
    %s179 = sphi 0, %s178
    %s195 = sphi 0, %s179
  $region4: #{tpu_custom_call.1} parent=0 // loop_header_branch
    %16 = sbr.rel (%p14) target = $region8
  $region5: #{tpu_custom_call.1} parent=0 // loop_body
    %s18 = ssub.s32 %s13, 1
    %s19 = ssub.s32 %s13, 2
    %s20 = sadd.s32 %s13, 1
    %s21 = ssub.s32 %s13, %s20
    %p22 = scmp.eq.s32.totalorder %s21, 0
    %s24 = sadd.s32 %s23, 1
    %s25 = scalar_select %p22, %s23, %s24
    %p28 = pneg %p22
    %p29 = scmp.eq.s32.totalorder %s13, 1
    %p30 = por %p28, %p29
    %p31 = scmp.ne.s32.totalorder %s23, %s26
    %p32 = scmp.eq.s32.totalorder %s13, 0
    %p33 = por %p31, %p32
    %p34 = scmp.ne.s32.totalorder %s23, %s26
    %p35 = scmp.eq.s32.totalorder %s18, 1
    %p36 = por %p34, %p35
    %p37 = scmp.ne.s32.totalorder %s26, %s27
    %p38 = scmp.eq.s32.totalorder %s18, 0
    %p39 = por %p37, %p38
    %p40 = scmp.ne.s32.totalorder %s26, %s27
    %p41 = scmp.eq.s32.totalorder %s19, 1
    %p42 = por %p40, %p41
    %p44 = scmp.ne.s32.totalorder %s27, %s43
    %p45 = scmp.eq.s32.totalorder %s19, 0
    %p46 = por %p44, %p45
    %s48 = sadd.s32 %s47, 1
    %p51 = scmp.eq.s32.totalorder %s13, 1
    %p52 = scmp.ne.s32.totalorder %s47, %s49
    %p53 = scmp.eq.s32.totalorder %s13, 0
    %p54 = por %p52, %p53
    %p55 = scmp.ne.s32.totalorder %s47, %s49
    %p56 = scmp.eq.s32.totalorder %s18, 1
    %p57 = por %p55, %p56
    %p58 = scmp.ne.s32.totalorder %s49, %s50
    %p59 = scmp.eq.s32.totalorder %s18, 0
    %p60 = por %p58, %p59
    %p61 = scmp.ne.s32.totalorder %s49, %s50
    %p62 = scmp.eq.s32.totalorder %s19, 1
    %p63 = por %p61, %p62
    %p65 = scmp.ne.s32.totalorder %s50, %s64
    %p66 = scmp.eq.s32.totalorder %s19, 0
    %p67 = por %p65, %p66
    %s69 = sadd.s32 %s68, 1
    %p72 = scmp.eq.s32.totalorder %s13, 1
    %p73 = scmp.ne.s32.totalorder %s68, %s70
    %p74 = scmp.eq.s32.totalorder %s13, 0
    %p75 = por %p73, %p74
    %p76 = scmp.ne.s32.totalorder %s68, %s70
    %p77 = scmp.eq.s32.totalorder %s18, 1
    %p78 = por %p76, %p77
    %p79 = scmp.ne.s32.totalorder %s70, %s71
    %p80 = scmp.eq.s32.totalorder %s18, 0
    %p81 = por %p79, %p80
    %p82 = scmp.ne.s32.totalorder %s70, %s71
    %p83 = scmp.eq.s32.totalorder %s19, 1
    %p84 = por %p82, %p83
    %p86 = scmp.ne.s32.totalorder %s71, %s85
    %p87 = scmp.eq.s32.totalorder %s19, 0
    %p88 = por %p86, %p87
    %s90 = sadd.s32 %s89, 1
    %p93 = scmp.eq.s32.totalorder %s13, 1
    %p94 = scmp.ne.s32.totalorder %s89, %s91
    %p95 = scmp.eq.s32.totalorder %s13, 0
    %p96 = por %p94, %p95
    %p97 = scmp.ne.s32.totalorder %s89, %s91
    %p98 = scmp.eq.s32.totalorder %s18, 1
    %p99 = por %p97, %p98
    %p100 = scmp.ne.s32.totalorder %s91, %s92
    %p101 = scmp.eq.s32.totalorder %s18, 0
    %p102 = por %p100, %p101
    %p103 = scmp.ne.s32.totalorder %s91, %s92
    %p104 = scmp.eq.s32.totalorder %s19, 1
    %p105 = por %p103, %p104
    %p107 = scmp.ne.s32.totalorder %s92, %s106
    %p108 = scmp.eq.s32.totalorder %s19, 0
    %p109 = por %p107, %p108
    %s111 = sadd.s32 %s110, 1
    %p114 = scmp.eq.s32.totalorder %s13, 1
    %p115 = scmp.ne.s32.totalorder %s110, %s112
    %p116 = scmp.eq.s32.totalorder %s13, 0
    %p117 = por %p115, %p116
    %p118 = scmp.ne.s32.totalorder %s110, %s112
    %p119 = scmp.eq.s32.totalorder %s18, 1
    %p120 = por %p118, %p119
    %p121 = scmp.ne.s32.totalorder %s112, %s113
    %p122 = scmp.eq.s32.totalorder %s18, 0
    %p123 = por %p121, %p122
    %p124 = scmp.ne.s32.totalorder %s112, %s113
    %p125 = scmp.eq.s32.totalorder %s19, 1
    %p126 = por %p124, %p125
    %p128 = scmp.ne.s32.totalorder %s113, %s127
    %p129 = scmp.eq.s32.totalorder %s19, 0
    %p130 = por %p128, %p129
    %s132 = sadd.s32 %s131, 1
    %p135 = scmp.eq.s32.totalorder %s13, 1
    %p136 = scmp.ne.s32.totalorder %s131, %s133
    %p137 = scmp.eq.s32.totalorder %s13, 0
    %p138 = por %p136, %p137
    %p139 = scmp.ne.s32.totalorder %s131, %s133
    %p140 = scmp.eq.s32.totalorder %s18, 1
    %p141 = por %p139, %p140
    %p142 = scmp.ne.s32.totalorder %s133, %s134
    %p143 = scmp.eq.s32.totalorder %s18, 0
    %p144 = por %p142, %p143
    %p145 = scmp.ne.s32.totalorder %s133, %s134
    %p146 = scmp.eq.s32.totalorder %s19, 1
    %p147 = por %p145, %p146
    %p149 = scmp.ne.s32.totalorder %s134, %s148
    %p150 = scmp.eq.s32.totalorder %s19, 0
    %p151 = por %p149, %p150
    %s153 = sadd.s32 %s152, 1
    %p156 = scmp.eq.s32.totalorder %s13, 1
    %p157 = scmp.ne.s32.totalorder %s152, %s154
    %p158 = scmp.eq.s32.totalorder %s13, 0
    %p159 = por %p157, %p158
    %p160 = scmp.ne.s32.totalorder %s152, %s154
    %p161 = scmp.eq.s32.totalorder %s18, 1
    %p162 = por %p160, %p161
    %p163 = scmp.ne.s32.totalorder %s154, %s155
    %p164 = scmp.eq.s32.totalorder %s18, 0
    %p165 = por %p163, %p164
    %p166 = scmp.ne.s32.totalorder %s154, %s155
    %p167 = scmp.eq.s32.totalorder %s19, 1
    %p168 = por %p166, %p167
    %p170 = scmp.ne.s32.totalorder %s155, %s169
    %p171 = scmp.eq.s32.totalorder %s19, 0
    %p172 = por %p170, %p171
    %s173 = ssub.s32 %s13, %s20
    %p174 = scmp.eq.s32.totalorder %s173, 0
    %s176 = sadd.s32 %s175, 1
    %s177 = scalar_select %p174, %s175, %s176
    %p180 = pneg %p174
    %p181 = scmp.eq.s32.totalorder %s13, 1
    %p182 = por %p180, %p181
    %p183 = scmp.ne.s32.totalorder %s175, %s178
    %p184 = scmp.eq.s32.totalorder %s13, 0
    %p185 = por %p183, %p184
    %p186 = scmp.ne.s32.totalorder %s175, %s178
    %p187 = scmp.eq.s32.totalorder %s18, 1
    %p188 = por %p186, %p187
    %p189 = scmp.ne.s32.totalorder %s178, %s179
    %p190 = scmp.eq.s32.totalorder %s18, 0
    %p191 = por %p189, %p190
    %p192 = scmp.ne.s32.totalorder %s178, %s179
    %p193 = scmp.eq.s32.totalorder %s19, 1
    %p194 = por %p192, %p193
    %p196 = scmp.ne.s32.totalorder %s179, %s195
    %p197 = scmp.eq.s32.totalorder %s19, 0
    %p198 = por %p196, %p197
    %p199 = scmp.le.s32.totalorder 1, %s13
    %p200 = scmp.lt.s32.totalorder %s13, 3
    %p201 = pnand %p199, %p200
    %p202 = pneg %p201
    // Predicated region
    $region9: #{tpu_custom_call.1} parent=5 // pred_check
      _
    $region10: #{tpu_custom_call.1} parent=5 // pred_check_branch
      %204 = sbr.rel (%p201) target = $region12
    $region11: #{tpu_custom_call.1} parent=5 // pred_region
      %s205 = ssub.s32 %s13, 1
      // Predicated region
      $region13: #{tpu_custom_call.1} parent=11 // pred_check
        %p206 = pneg %p60
      $region14: #{tpu_custom_call.1} parent=11 // pred_check_branch
        %208 = sbr.rel (%p206) target = $region16
      $region15: #{tpu_custom_call.1} parent=11 // pred_region
        _
      $region16: #{tpu_custom_call.1} parent=11 // pred_fallthru
        _
      // Predicated region
      $region17: #{tpu_custom_call.1} parent=11 // pred_check
        %p209 = pneg %p81
      $region18: #{tpu_custom_call.1} parent=11 // pred_check_branch
        %211 = sbr.rel (%p209) target = $region20
      $region19: #{tpu_custom_call.1} parent=11 // pred_region
        _
      $region20: #{tpu_custom_call.1} parent=11 // pred_fallthru
        _
      // Predicated region
      $region21: #{tpu_custom_call.1} parent=11 // pred_check
        %p212 = pneg %p102
      $region22: #{tpu_custom_call.1} parent=11 // pred_check_branch
        %214 = sbr.rel (%p212) target = $region24
      $region23: #{tpu_custom_call.1} parent=11 // pred_region
        _
      $region24: #{tpu_custom_call.1} parent=11 // pred_fallthru
        _
      // Predicated region
      $region25: #{tpu_custom_call.1} parent=11 // pred_check
        %p215 = pneg %p123
      $region26: #{tpu_custom_call.1} parent=11 // pred_check_branch
        %217 = sbr.rel (%p215) target = $region28
      $region27: #{tpu_custom_call.1} parent=11 // pred_region
        _
      $region28: #{tpu_custom_call.1} parent=11 // pred_fallthru
        _
      // Predicated region
      $region29: #{tpu_custom_call.1} parent=11 // pred_check
        %p218 = pneg %p144
      $region30: #{tpu_custom_call.1} parent=11 // pred_check_branch
        %220 = sbr.rel (%p218) target = $region32
      $region31: #{tpu_custom_call.1} parent=11 // pred_region
        _
      $region32: #{tpu_custom_call.1} parent=11 // pred_fallthru
        _
      // Predicated region
      $region33: #{tpu_custom_call.1} parent=11 // pred_check
        %p221 = pneg %p165
      $region34: #{tpu_custom_call.1} parent=11 // pred_check_branch
        %223 = sbr.rel (%p221) target = $region36
      $region35: #{tpu_custom_call.1} parent=11 // pred_region
        _
      $region36: #{tpu_custom_call.1} parent=11 // pred_fallthru
        _
    $region12: #{tpu_custom_call.1} parent=5 // pred_fallthru
      _
    %p224 = scmp.lt.s32.totalorder %s13, 2
    // Predicated region
    $region37: #{tpu_custom_call.1} parent=5 // pred_check
      %p225 = pneg %p224
    $region38: #{tpu_custom_call.1} parent=5 // pred_check_branch
      %227 = sbr.rel (%p225) target = $region40
    $region39: #{tpu_custom_call.1} parent=5 // pred_region
      // Predicated region
      $region41: #{tpu_custom_call.1} parent=39 // pred_check
        %p228 = pneg %p33
      $region42: #{tpu_custom_call.1} parent=39 // pred_check_branch
        %230 = sbr.rel (%p228) target = $region44
      $region43: #{tpu_custom_call.1} parent=39 // pred_region
        %p231 = scmp.lt.s32.totalorder %s13, 1
        %s232 = scalar_select %p231, %s13, 1
        %s233 = smul.addr %s232, 32
        %s234 = smul.addr %s233, 8
        %s235 = scalar_lea.vmem %s0, %s234
      $region44: #{tpu_custom_call.1} parent=39 // pred_fallthru
        _
    $region40: #{tpu_custom_call.1} parent=5 // pred_fallthru
      _
    %p236 = scmp.le.s32.totalorder 1, %s13
    %p237 = scmp.lt.s32.totalorder %s13, 3
    %p238 = pnand %p236, %p237
    %p239 = pneg %p238
    // Predicated region
    $region45: #{tpu_custom_call.1} parent=5 // pred_check
      _
    $region46: #{tpu_custom_call.1} parent=5 // pred_check_branch
      %241 = sbr.rel (%p238) target = $region48
    $region47: #{tpu_custom_call.1} parent=5 // pred_region
      %s242 = ssub.s32 %s13, 1
      %p243 = scmp.lt.s32.totalorder %s18, 1
      %s244 = scalar_select %p243, %s18, 1
      %s245 = smul.addr %s244, 32
      %s246 = smul.addr %s245, 8
      %s247 = scalar_lea.vmem %s0, %s246
      %p248 = pneg %p39
      %p249 = pneg %p36
      %p250 = pneg %p60
      %p251 = pneg %p57
      %p252 = pneg %p81
      %p253 = pneg %p78
      %p254 = pneg %p102
      %p255 = pneg %p99
      %p256 = pneg %p123
      %p257 = pneg %p120
      %p258 = pneg %p144
      %p259 = pneg %p141
      %p260 = pneg %p165
      %p261 = pneg %p162
      %p262 = pneg %p191
      %p263 = pneg %p188
      %p264 = scmp.lt.s32.totalorder %s18, 1
      %s265 = scalar_select %p264, %s18, 1
      %s266 = smul.addr %s265, 32
      %s267 = smul.addr %s266, 8
      %s268 = scalar_lea.vmem %s7, %s267
      %p269 = scmp.lt.s32.totalorder %s18, 1
      %s270 = scalar_select %p269, %s18, 1
      %s271 = smul.addr %s270, 32
      %s272 = smul.addr %s271, 8
      %s273 = scalar_lea.vmem %s0, %s272
      %p274 = scmp.lt.s32.totalorder %s18, 1
      %s275 = scalar_select %p274, %s18, 1
      %s276 = smul.addr %s275, 32
      %s277 = smul.addr %s276, 8
      %s278 = scalar_lea.vmem %s7, %s277
      %v279 = vlaneseq
      %v280 = vshrl.u32 %v279, 7
      %v281 = vadd.s32 %v280, 8
      %vm282 = vcmp.ge.s32.totalorder %v280, 1
      %vm283 = vcmp.ge.s32.totalorder %v281, 1
      %vm284 = vcmp.lt.s32.totalorder %v280, 15
      %vm285 = vcmp.lt.s32.totalorder %v281, 15
      %v286 = vld [vmem:[%s273] sm:$0xff]
      %v287 = vld [vmem:[%s273 + $0x8] sm:$0xff]
      %v288 = vld [vmem:[%s273 + $0x10] sm:$0xff]
      %v289 = vld [vmem:[%s273 + $0x18] sm:$0xff]
      %v290 = vld [vmem:[%s273 + $0x20] sm:$0xff]
      %v291 = vld [vmem:[%s273 + $0x28] sm:$0xff]
      %v292 = vld [vmem:[%s273 + $0x30] sm:$0xff]
      %v293 = vld [vmem:[%s273 + $0x38] sm:$0xff]
      %v294 = vld [vmem:[%s273 + $0x40] sm:$0xff]
      %v295 = vld [vmem:[%s273 + $0x48] sm:$0xff]
      %v296 = vld [vmem:[%s273 + $0x50] sm:$0xff]
      %v297 = vld [vmem:[%s273 + $0x58] sm:$0xff]
      %v298 = vld [vmem:[%s273 + $0x60] sm:$0xff]
      %v299 = vld [vmem:[%s273 + $0x68] sm:$0xff]
      %v300 = vld [vmem:[%s273 + $0x70] sm:$0xff]
      %v301 = vld [vmem:[%s273 + $0x78] sm:$0xff]
      %v302 = vld [vmem:[%s273 + $0x80] sm:$0xff]
      %v303 = vld [vmem:[%s273 + $0x88] sm:$0xff]
      %v304 = vld [vmem:[%s273 + $0x90] sm:$0xff]
      %v305 = vld [vmem:[%s273 + $0x98] sm:$0xff]
      %v306 = vld [vmem:[%s273 + $0xa0] sm:$0xff]
      %v307 = vld [vmem:[%s273 + $0xa8] sm:$0xff]
      %v308 = vld [vmem:[%s273 + $0xb0] sm:$0xff]
      %v309 = vld [vmem:[%s273 + $0xb8] sm:$0xff]
      %v310 = vld [vmem:[%s273 + $0xc0] sm:$0xff]
      %v311 = vld [vmem:[%s273 + $0xc8] sm:$0xff]
      %v312 = vld [vmem:[%s273 + $0xd0] sm:$0xff]
      %v313 = vld [vmem:[%s273 + $0xd8] sm:$0xff]
      %v314 = vld [vmem:[%s273 + $0xe0] sm:$0xff]
      %v315 = vld [vmem:[%s273 + $0xe8] sm:$0xff]
      %v316 = vld [vmem:[%s273 + $0xf0] sm:$0xff]
      %v317 = vld [vmem:[%s273 + $0xf8] sm:$0xff]
      %v318 = vrot.slane %v286, 7
      %v319 = vrot.slane %v287, 7
      %v320 = vrot.slane %v288, 7
      %v321 = vrot.slane %v289, 7
      %v322 = vrot.slane %v290, 7
      %v323 = vrot.slane %v291, 7
      %v324 = vrot.slane %v292, 7
      %v325 = vrot.slane %v293, 7
      %v326 = vrot.slane %v294, 7
      %v327 = vrot.slane %v295, 7
      %v328 = vrot.slane %v296, 7
      %v329 = vrot.slane %v297, 7
      %v330 = vrot.slane %v298, 7
      %v331 = vrot.slane %v299, 7
      %v332 = vrot.slane %v300, 7
      %v333 = vrot.slane %v301, 7
      %v334 = vrot.slane %v302, 7
      %v335 = vrot.slane %v303, 7
      %v336 = vrot.slane %v304, 7
      %v337 = vrot.slane %v305, 7
      %v338 = vrot.slane %v306, 7
      %v339 = vrot.slane %v307, 7
      %v340 = vrot.slane %v308, 7
      %v341 = vrot.slane %v309, 7
      %v342 = vrot.slane %v310, 7
      %v343 = vrot.slane %v311, 7
      %v344 = vrot.slane %v312, 7
      %v345 = vrot.slane %v313, 7
      %v346 = vrot.slane %v314, 7
      %v347 = vrot.slane %v315, 7
      %vm348 = vcmp.lt.s32.totalorder %v280, 1
      %v349 = vsel %vm348, %v346, %v347
      %v350 = vsel %vm348, %v345, %v346
      %v351 = vsel %vm348, %v344, %v345
      %v352 = vsel %vm348, %v343, %v344
      %v353 = vsel %vm348, %v342, %v343
      %v354 = vsel %vm348, %v341, %v342
      %v355 = vsel %vm348, %v340, %v341
      %v356 = vsel %vm348, %v339, %v340
      %v357 = vsel %vm348, %v338, %v339
      %v358 = vsel %vm348, %v337, %v338
      %v359 = vsel %vm348, %v336, %v337
      %v360 = vsel %vm348, %v335, %v336
      %v361 = vsel %vm348, %v334, %v335
      %v362 = vsel %vm348, %v333, %v334
      %v363 = vsel %vm348, %v332, %v333
      %v364 = vsel %vm348, %v331, %v332
      %v365 = vsel %vm348, %v330, %v331
      %v366 = vsel %vm348, %v329, %v330
      %v367 = vsel %vm348, %v328, %v329
      %v368 = vsel %vm348, %v327, %v328
      %v369 = vsel %vm348, %v326, %v327
      %v370 = vsel %vm348, %v325, %v326
      %v371 = vsel %vm348, %v324, %v325
      %v372 = vsel %vm348, %v323, %v324
      %v373 = vsel %vm348, %v322, %v323
      %v374 = vsel %vm348, %v321, %v322
      %v375 = vsel %vm348, %v320, %v321
      %v376 = vsel %vm348, %v319, %v320
      %v377 = vsel %vm348, %v318, %v319
      %v378 = vsel %vm348, 0.0, %v318
      %v379 = vsel %vm348, %v347, 0.0
      %v380 = vsel %vm282, %v379, 0.0
      %v381 = vsel %vm283, 0.0, 0.0
      %v382 = vsel %vm282, %v378, 0.0
      %v383 = vsel %vm283, %v377, 0.0
      %v384 = vsel %vm282, %v376, 0.0
      %v385 = vsel %vm283, %v375, 0.0
      %v386 = vsel %vm282, %v374, 0.0
      %v387 = vsel %vm283, %v373, 0.0
      %v388 = vsel %vm282, %v372, 0.0
      %v389 = vsel %vm283, %v371, 0.0
      %v390 = vsel %vm282, %v370, 0.0
      %v391 = vsel %vm283, %v369, 0.0
      %v392 = vsel %vm282, %v368, 0.0
      %v393 = vsel %vm283, %v367, 0.0
      %v394 = vsel %vm282, %v366, 0.0
      %v395 = vsel %vm283, %v365, 0.0
      %v396 = vsel %vm282, %v364, 0.0
      %v397 = vsel %vm283, %v363, 0.0
      %v398 = vsel %vm282, %v362, 0.0
      %v399 = vsel %vm283, %v361, 0.0
      %v400 = vsel %vm282, %v360, 0.0
      %v401 = vsel %vm283, %v359, 0.0
      %v402 = vsel %vm282, %v358, 0.0
      %v403 = vsel %vm283, %v357, 0.0
      %v404 = vsel %vm282, %v356, 0.0
      %v405 = vsel %vm283, %v355, 0.0
      %v406 = vsel %vm282, %v354, 0.0
      %v407 = vsel %vm283, %v353, 0.0
      %v408 = vsel %vm282, %v352, 0.0
      %v409 = vsel %vm283, %v351, 0.0
      %v410 = vsel %vm282, %v350, 0.0
      %v411 = vsel %vm283, %v349, 0.0
      %v412 = vld [vmem:[%s1] sm:$0xf]
      %s413 = scalar_lea.vmem %s1, 4
      %v414 = vld [vmem:[%s413] sm:$0xf]
      %vm415 = vcmask 31744
      %v417 = vsel %vm415, 0.0, 0
      %v420 = vsel %vm415, %v286, 0
      %v423 = vsel %vm415, %v287, 0
      %v426 = vsel %vm415, %v288, 0
      %v429 = vsel %vm415, %v289, 0
      %v432 = vsel %vm415, %v290, 0
      %v435 = vsel %vm415, %v291, 0
      %v438 = vsel %vm415, %v292, 0
      %v441 = vsel %vm415, %v293, 0
      %v444 = vsel %vm415, %v294, 0
      %v447 = vsel %vm415, %v295, 0
      %v450 = vsel %vm415, %v296, 0
      %v453 = vsel %vm415, %v297, 0
      %v456 = vsel %vm415, %v298, 0
      %v459 = vsel %vm415, %v299, 0
      %v462 = vsel %vm415, %v300, 0
      %v465 = vsel %vm415, %v301, 0
      %v468 = vsel %vm415, %v302, 0
      %v471 = vsel %vm415, %v303, 0
      %v474 = vsel %vm415, %v304, 0
      %v477 = vsel %vm415, %v305, 0
      %v480 = vsel %vm415, %v306, 0
      %v483 = vsel %vm415, %v307, 0
      %v486 = vsel %vm415, %v308, 0
      %v489 = vsel %vm415, %v309, 0
      %v492 = vsel %vm415, %v310, 0
      %v495 = vsel %vm415, %v311, 0
      %v498 = vsel %vm415, %v312, 0
      %v501 = vsel %vm415, %v313, 0
      %v504 = vsel %vm415, %v314, 0
      %v507 = vsel %vm415, %v315, 0
      %vm509 = vcmask 1043456
      %v511 = vsel %vm509, %v414, 0
      %513 = vmatprep.subr.mxu0 0.0
      %514 = vmatpush1.msra.mxu0 0.0
      %515 = vmatprep.subr.mxu0 0.0
      %516 = vmatpush1.msra.mxu0 0.0
      %517 = vmatprep.subr.mxu0 0.0
      %518 = vmatpush1.msra.mxu0 0.0
      %519 = vmatprep.subr.mxu0 0.0
      %520 = vmatpush1.msra.mxu0 0.0
      %521 = vmatprep.subr.mxu0 0.0
      %522 = vmatpush1.msra.mxu0 0.0
      %523 = vmatprep.subr.mxu0 0.0
      %524 = vmatpush1.msra.mxu0 0.0
      %525 = vmatprep.subr.mxu0 0.0
      %526 = vmatpush1.msra.mxu0 0.0
      %527 = vmatprep.subr.mxu0 0.0
      %528 = vmatpush1.msra.mxu0 0.0
      %529 = vmatprep.subr.mxu0 0.0
      %530 = vmatpush1.msra.mxu0 0.0
      %531 = vmatprep.subr.mxu0 0.0
      %532 = vmatpush1.msra.mxu0 0.0
      %533 = vmatprep.subr.mxu0 0.0
      %534 = vmatpush1.msra.mxu0 0.0
      %535 = vmatprep.subr.mxu0 0.0
      %536 = vmatpush1.msra.mxu0 0.0
      %537 = vmatprep.subr.mxu0 0.0
      %538 = vmatpush1.msra.mxu0 0.0
      %539 = vmatprep.subr.mxu0 0.0
      %540 = vmatpush1.msra.mxu0 0.0
      %541 = vmatprep.subr.mxu0 0.0
      %542 = vmatpush1.msra.mxu0 0.0
      %543 = vmatprep.subr.mxu0 0.0
      %544 = vmatpush1.msra.mxu0 %v511
      %545 = vmatprep.subr.mxu0 0.0
      %546 = vmatpush2.msra.mxu0 0.0
      %547 = vmatprep.subr.mxu0 0.0
      %548 = vmatpush2.msra.mxu0 0.0
      %549 = vmatprep.subr.mxu0 0.0
      %550 = vmatpush2.msra.mxu0 0.0
      %551 = vmatprep.subr.mxu0 0.0
      %552 = vmatpush2.msra.mxu0 0.0
      %553 = vmatprep.subr.mxu0 0.0
      %554 = vmatpush2.msra.mxu0 0.0
      %555 = vmatprep.subr.mxu0 0.0
      %556 = vmatpush2.msra.mxu0 0.0
      %557 = vmatprep.subr.mxu0 0.0
      %558 = vmatpush2.msra.mxu0 0.0
      %559 = vmatprep.subr.mxu0 0.0
      %560 = vmatpush2.msra.mxu0 0.0
      %561 = vmatprep.subr.mxu0 0.0
      %562 = vmatpush2.msra.mxu0 0.0
      %563 = vmatprep.subr.mxu0 0.0
      %564 = vmatpush2.msra.mxu0 0.0
      %565 = vmatprep.subr.mxu0 0.0
      %566 = vmatpush2.msra.mxu0 0.0
      %567 = vmatprep.subr.mxu0 0.0
      %568 = vmatpush2.msra.mxu0 0.0
      %569 = vmatprep.subr.mxu0 0.0
      %570 = vmatpush2.msra.mxu0 0.0
      %571 = vmatprep.subr.mxu0 0.0
      %572 = vmatpush2.msra.mxu0 0.0
      %573 = vmatprep.subr.mxu0 0.0
      %574 = vmatpush2.msra.mxu0 0.0
      %575 = vmatprep.subr.mxu0 0.0
      %576 = vmatpush2.msra.mxu0 0.0
      %577 = vmatprep.mubr.f32.mxu0 0.0
      %578 = vmatmul.mubr.f32.gmra.mxu0 %v417
      %v579 = vpop.f32.mrf.mxu0
      %v580 = vadd.f32 0.0, %v579
      %v581 = vpop.f32.mrf.mxu0
      %582 = vmatprep.mubr.f32.mxu0 0.0
      %583 = vmatmul.mubr.f32.gmra.mxu0 %v417
      %v584 = vpop.f32.mrf.mxu0
      %v585 = vadd.f32 0.0, %v584
      %v586 = vpop.f32.mrf.mxu0
      %587 = vmatprep.mubr.f32.mxu0 0.0
      %588 = vmatmul.mubr.f32.gmra.mxu0 %v420
      %v589 = vpop.f32.mrf.mxu0
      %v590 = vadd.f32 0.0, %v589
      %v591 = vpop.f32.mrf.mxu0
      %592 = vmatprep.mubr.f32.mxu0 0.0
      %593 = vmatmul.mubr.f32.gmra.mxu0 %v423
      %v594 = vpop.f32.mrf.mxu0
      %v595 = vadd.f32 0.0, %v594
      %v596 = vpop.f32.mrf.mxu0
      %597 = vmatprep.mubr.f32.mxu0 0.0
      %598 = vmatmul.mubr.f32.gmra.mxu0 %v426
      %v599 = vpop.f32.mrf.mxu0
      %v600 = vadd.f32 0.0, %v599
      %v601 = vpop.f32.mrf.mxu0
      %602 = vmatprep.mubr.f32.mxu0 0.0
      %603 = vmatmul.mubr.f32.gmra.mxu0 %v429
      %v604 = vpop.f32.mrf.mxu0
      %v605 = vadd.f32 0.0, %v604
      %v606 = vpop.f32.mrf.mxu0
      %607 = vmatprep.mubr.f32.mxu0 0.0
      %608 = vmatmul.mubr.f32.gmra.mxu0 %v432
      %v609 = vpop.f32.mrf.mxu0
      %v610 = vadd.f32 0.0, %v609
      %v611 = vpop.f32.mrf.mxu0
      %612 = vmatprep.mubr.f32.mxu0 0.0
      %613 = vmatmul.mubr.f32.gmra.mxu0 %v435
      %v614 = vpop.f32.mrf.mxu0
      %v615 = vadd.f32 0.0, %v614
      %v616 = vpop.f32.mrf.mxu0
      %617 = vmatprep.mubr.f32.mxu0 0.0
      %618 = vmatmul.mubr.f32.gmra.mxu0 %v438
      %v619 = vpop.f32.mrf.mxu0
      %v620 = vadd.f32 0.0, %v619
      %v621 = vpop.f32.mrf.mxu0
      %622 = vmatprep.mubr.f32.mxu0 0.0
      %623 = vmatmul.mubr.f32.gmra.mxu0 %v441
      %v624 = vpop.f32.mrf.mxu0
      %v625 = vadd.f32 0.0, %v624
      %v626 = vpop.f32.mrf.mxu0
      %627 = vmatprep.mubr.f32.mxu0 0.0
      %628 = vmatmul.mubr.f32.gmra.mxu0 %v444
      %v629 = vpop.f32.mrf.mxu0
      %v630 = vadd.f32 0.0, %v629
      %v631 = vpop.f32.mrf.mxu0
      %632 = vmatprep.mubr.f32.mxu0 0.0
      %633 = vmatmul.mubr.f32.gmra.mxu0 %v447
      %v634 = vpop.f32.mrf.mxu0
      %v635 = vadd.f32 0.0, %v634
      %v636 = vpop.f32.mrf.mxu0
      %637 = vmatprep.mubr.f32.mxu0 0.0
      %638 = vmatmul.mubr.f32.gmra.mxu0 %v450
      %v639 = vpop.f32.mrf.mxu0
      %v640 = vadd.f32 0.0, %v639
      %v641 = vpop.f32.mrf.mxu0
      %642 = vmatprep.mubr.f32.mxu0 0.0
      %643 = vmatmul.mubr.f32.gmra.mxu0 %v453
      %v644 = vpop.f32.mrf.mxu0
      %v645 = vadd.f32 0.0, %v644
      %v646 = vpop.f32.mrf.mxu0
      %647 = vmatprep.mubr.f32.mxu0 0.0
      %648 = vmatmul.mubr.f32.gmra.mxu0 %v456
      %v649 = vpop.f32.mrf.mxu0
      %v650 = vadd.f32 0.0, %v649
      %v651 = vpop.f32.mrf.mxu0
      %652 = vmatprep.mubr.f32.mxu0 0.0
      %653 = vmatmul.mubr.f32.gmra.mxu0 %v459
      %v654 = vpop.f32.mrf.mxu0
      %v655 = vadd.f32 0.0, %v654
      %v656 = vpop.f32.mrf.mxu0
      %657 = vmatprep.mubr.f32.mxu0 0.0
      %658 = vmatmul.mubr.f32.gmra.mxu0 %v462
      %v659 = vpop.f32.mrf.mxu0
      %v660 = vadd.f32 0.0, %v659
      %v661 = vpop.f32.mrf.mxu0
      %662 = vmatprep.mubr.f32.mxu0 0.0
      %663 = vmatmul.mubr.f32.gmra.mxu0 %v465
      %v664 = vpop.f32.mrf.mxu0
      %v665 = vadd.f32 0.0, %v664
      %v666 = vpop.f32.mrf.mxu0
      %667 = vmatprep.mubr.f32.mxu0 0.0
      %668 = vmatmul.mubr.f32.gmra.mxu0 %v468
      %v669 = vpop.f32.mrf.mxu0
      %v670 = vadd.f32 0.0, %v669
      %v671 = vpop.f32.mrf.mxu0
      %672 = vmatprep.mubr.f32.mxu0 0.0
      %673 = vmatmul.mubr.f32.gmra.mxu0 %v471
      %v674 = vpop.f32.mrf.mxu0
      %v675 = vadd.f32 0.0, %v674
      %v676 = vpop.f32.mrf.mxu0
      %677 = vmatprep.mubr.f32.mxu0 0.0
      %678 = vmatmul.mubr.f32.gmra.mxu0 %v474
      %v679 = vpop.f32.mrf.mxu0
      %v680 = vadd.f32 0.0, %v679
      %v681 = vpop.f32.mrf.mxu0
      %682 = vmatprep.mubr.f32.mxu0 0.0
      %683 = vmatmul.mubr.f32.gmra.mxu0 %v477
      %v684 = vpop.f32.mrf.mxu0
      %v685 = vadd.f32 0.0, %v684
      %v686 = vpop.f32.mrf.mxu0
      %687 = vmatprep.mubr.f32.mxu0 0.0
      %688 = vmatmul.mubr.f32.gmra.mxu0 %v480
      %v689 = vpop.f32.mrf.mxu0
      %v690 = vadd.f32 0.0, %v689
      %v691 = vpop.f32.mrf.mxu0
      %692 = vmatprep.mubr.f32.mxu0 0.0
      %693 = vmatmul.mubr.f32.gmra.mxu0 %v483
      %v694 = vpop.f32.mrf.mxu0
      %v695 = vadd.f32 0.0, %v694
      %v696 = vpop.f32.mrf.mxu0
      %697 = vmatprep.mubr.f32.mxu0 0.0
      %698 = vmatmul.mubr.f32.gmra.mxu0 %v486
      %v699 = vpop.f32.mrf.mxu0
      %v700 = vadd.f32 0.0, %v699
      %v701 = vpop.f32.mrf.mxu0
      %702 = vmatprep.mubr.f32.mxu0 0.0
      %703 = vmatmul.mubr.f32.gmra.mxu0 %v489
      %v704 = vpop.f32.mrf.mxu0
      %v705 = vadd.f32 0.0, %v704
      %v706 = vpop.f32.mrf.mxu0
      %707 = vmatprep.mubr.f32.mxu0 0.0
      %708 = vmatmul.mubr.f32.gmra.mxu0 %v492
      %v709 = vpop.f32.mrf.mxu0
      %v710 = vadd.f32 0.0, %v709
      %v711 = vpop.f32.mrf.mxu0
      %712 = vmatprep.mubr.f32.mxu0 0.0
      %713 = vmatmul.mubr.f32.gmra.mxu0 %v495
      %v714 = vpop.f32.mrf.mxu0
      %v715 = vadd.f32 0.0, %v714
      %v716 = vpop.f32.mrf.mxu0
      %717 = vmatprep.mubr.f32.mxu0 0.0
      %718 = vmatmul.mubr.f32.gmra.mxu0 %v498
      %v719 = vpop.f32.mrf.mxu0
      %v720 = vadd.f32 0.0, %v719
      %v721 = vpop.f32.mrf.mxu0
      %722 = vmatprep.mubr.f32.mxu0 0.0
      %723 = vmatmul.mubr.f32.gmra.mxu0 %v501
      %v724 = vpop.f32.mrf.mxu0
      %v725 = vadd.f32 0.0, %v724
      %v726 = vpop.f32.mrf.mxu0
      %727 = vmatprep.mubr.f32.mxu0 0.0
      %728 = vmatmul.mubr.f32.gmra.mxu0 %v504
      %v729 = vpop.f32.mrf.mxu0
      %v730 = vadd.f32 0.0, %v729
      %v731 = vpop.f32.mrf.mxu0
      %732 = vmatprep.mubr.f32.mxu0 0.0
      %733 = vmatmul.mubr.f32.gmra.mxu0 %v507
      %v734 = vpop.f32.mrf.mxu0
      %v735 = vadd.f32 0.0, %v734
      %v736 = vpop.f32.mrf.mxu0
      %737 = vdwg.mxu0
      %v739 = vsel %vm415, %v380, 0
      %v742 = vsel %vm415, %v381, 0
      %v745 = vsel %vm415, %v382, 0
      %v748 = vsel %vm415, %v383, 0
      %v751 = vsel %vm415, %v384, 0
      %v754 = vsel %vm415, %v385, 0
      %v757 = vsel %vm415, %v386, 0
      %v760 = vsel %vm415, %v387, 0
      %v763 = vsel %vm415, %v388, 0
      %v766 = vsel %vm415, %v389, 0
      %v769 = vsel %vm415, %v390, 0
      %v772 = vsel %vm415, %v391, 0
      %v775 = vsel %vm415, %v392, 0
      %v778 = vsel %vm415, %v393, 0
      %v781 = vsel %vm415, %v394, 0
      %v784 = vsel %vm415, %v395, 0
      %v787 = vsel %vm415, %v396, 0
      %v790 = vsel %vm415, %v397, 0
      %v793 = vsel %vm415, %v398, 0
      %v796 = vsel %vm415, %v399, 0
      %v799 = vsel %vm415, %v400, 0
      %v802 = vsel %vm415, %v401, 0
      %v805 = vsel %vm415, %v402, 0
      %v808 = vsel %vm415, %v403, 0
      %v811 = vsel %vm415, %v404, 0
      %v814 = vsel %vm415, %v405, 0
      %v817 = vsel %vm415, %v406, 0
      %v820 = vsel %vm415, %v407, 0
      %v823 = vsel %vm415, %v408, 0
      %v826 = vsel %vm415, %v409, 0
      %v829 = vsel %vm415, %v410, 0
      %v832 = vsel %vm415, %v411, 0
      %v835 = vsel %vm509, %v412, 0
      %837 = vmatprep.subr.mxu0 0.0
      %838 = vmatpush1.msra.mxu0 0.0
      %839 = vmatprep.subr.mxu0 0.0
      %840 = vmatpush1.msra.mxu0 0.0
      %841 = vmatprep.subr.mxu0 0.0
      %842 = vmatpush1.msra.mxu0 0.0
      %843 = vmatprep.subr.mxu0 0.0
      %844 = vmatpush1.msra.mxu0 0.0
      %845 = vmatprep.subr.mxu0 0.0
      %846 = vmatpush1.msra.mxu0 0.0
      %847 = vmatprep.subr.mxu0 0.0
      %848 = vmatpush1.msra.mxu0 0.0
      %849 = vmatprep.subr.mxu0 0.0
      %850 = vmatpush1.msra.mxu0 0.0
      %851 = vmatprep.subr.mxu0 0.0
      %852 = vmatpush1.msra.mxu0 0.0
      %853 = vmatprep.subr.mxu0 0.0
      %854 = vmatpush1.msra.mxu0 0.0
      %855 = vmatprep.subr.mxu0 0.0
      %856 = vmatpush1.msra.mxu0 0.0
      %857 = vmatprep.subr.mxu0 0.0
      %858 = vmatpush1.msra.mxu0 0.0
      %859 = vmatprep.subr.mxu0 0.0
      %860 = vmatpush1.msra.mxu0 0.0
      %861 = vmatprep.subr.mxu0 0.0
      %862 = vmatpush1.msra.mxu0 0.0
      %863 = vmatprep.subr.mxu0 0.0
      %864 = vmatpush1.msra.mxu0 0.0
      %865 = vmatprep.subr.mxu0 0.0
      %866 = vmatpush1.msra.mxu0 0.0
      %867 = vmatprep.subr.mxu0 0.0
      %868 = vmatpush1.msra.mxu0 %v835
      %869 = vmatprep.subr.mxu0 0.0
      %870 = vmatpush2.msra.mxu0 0.0
      %871 = vmatprep.subr.mxu0 0.0
      %872 = vmatpush2.msra.mxu0 0.0
      %873 = vmatprep.subr.mxu0 0.0
      %874 = vmatpush2.msra.mxu0 0.0
      %875 = vmatprep.subr.mxu0 0.0
      %876 = vmatpush2.msra.mxu0 0.0
      %877 = vmatprep.subr.mxu0 0.0
      %878 = vmatpush2.msra.mxu0 0.0
      %879 = vmatprep.subr.mxu0 0.0
      %880 = vmatpush2.msra.mxu0 0.0
      %881 = vmatprep.subr.mxu0 0.0
      %882 = vmatpush2.msra.mxu0 0.0
      %883 = vmatprep.subr.mxu0 0.0
      %884 = vmatpush2.msra.mxu0 0.0
      %885 = vmatprep.subr.mxu0 0.0
      %886 = vmatpush2.msra.mxu0 0.0
      %887 = vmatprep.subr.mxu0 0.0
      %888 = vmatpush2.msra.mxu0 0.0
      %889 = vmatprep.subr.mxu0 0.0
      %890 = vmatpush2.msra.mxu0 0.0
      %891 = vmatprep.subr.mxu0 0.0
      %892 = vmatpush2.msra.mxu0 0.0
      %893 = vmatprep.subr.mxu0 0.0
      %894 = vmatpush2.msra.mxu0 0.0
      %895 = vmatprep.subr.mxu0 0.0
      %896 = vmatpush2.msra.mxu0 0.0
      %897 = vmatprep.subr.mxu0 0.0
      %898 = vmatpush2.msra.mxu0 0.0
      %899 = vmatprep.subr.mxu0 0.0
      %900 = vmatpush2.msra.mxu0 0.0
      %901 = vmatprep.mubr.f32.mxu0 0.0
      %902 = vmatmul.mubr.f32.gmra.mxu0 %v739
      %v903 = vpop.f32.mrf.mxu0
      %v904 = vadd.f32 %v580, %v903
      %v905 = vpop.f32.mrf.mxu0
      %906 = vmatprep.mubr.f32.mxu0 0.0
      %907 = vmatmul.mubr.f32.gmra.mxu0 %v742
      %v908 = vpop.f32.mrf.mxu0
      %v909 = vadd.f32 %v585, %v908
      %v910 = vpop.f32.mrf.mxu0
      %911 = vmatprep.mubr.f32.mxu0 0.0
      %912 = vmatmul.mubr.f32.gmra.mxu0 %v745
      %v913 = vpop.f32.mrf.mxu0
      %v914 = vadd.f32 %v590, %v913
      %v915 = vpop.f32.mrf.mxu0
      %916 = vmatprep.mubr.f32.mxu0 0.0
      %917 = vmatmul.mubr.f32.gmra.mxu0 %v748
      %v918 = vpop.f32.mrf.mxu0
      %v919 = vadd.f32 %v595, %v918
      %v920 = vpop.f32.mrf.mxu0
      %921 = vmatprep.mubr.f32.mxu0 0.0
      %922 = vmatmul.mubr.f32.gmra.mxu0 %v751
      %v923 = vpop.f32.mrf.mxu0
      %v924 = vadd.f32 %v600, %v923
      %v925 = vpop.f32.mrf.mxu0
      %926 = vmatprep.mubr.f32.mxu0 0.0
      %927 = vmatmul.mubr.f32.gmra.mxu0 %v754
      %v928 = vpop.f32.mrf.mxu0
      %v929 = vadd.f32 %v605, %v928
      %v930 = vpop.f32.mrf.mxu0
      %931 = vmatprep.mubr.f32.mxu0 0.0
      %932 = vmatmul.mubr.f32.gmra.mxu0 %v757
      %v933 = vpop.f32.mrf.mxu0
      %v934 = vadd.f32 %v610, %v933
      %v935 = vpop.f32.mrf.mxu0
      %936 = vmatprep.mubr.f32.mxu0 0.0
      %937 = vmatmul.mubr.f32.gmra.mxu0 %v760
      %v938 = vpop.f32.mrf.mxu0
      %v939 = vadd.f32 %v615, %v938
      %v940 = vpop.f32.mrf.mxu0
      %941 = vmatprep.mubr.f32.mxu0 0.0
      %942 = vmatmul.mubr.f32.gmra.mxu0 %v763
      %v943 = vpop.f32.mrf.mxu0
      %v944 = vadd.f32 %v620, %v943
      %v945 = vpop.f32.mrf.mxu0
      %946 = vmatprep.mubr.f32.mxu0 0.0
      %947 = vmatmul.mubr.f32.gmra.mxu0 %v766
      %v948 = vpop.f32.mrf.mxu0
      %v949 = vadd.f32 %v625, %v948
      %v950 = vpop.f32.mrf.mxu0
      %951 = vmatprep.mubr.f32.mxu0 0.0
      %952 = vmatmul.mubr.f32.gmra.mxu0 %v769
      %v953 = vpop.f32.mrf.mxu0
      %v954 = vadd.f32 %v630, %v953
      %v955 = vpop.f32.mrf.mxu0
      %956 = vmatprep.mubr.f32.mxu0 0.0
      %957 = vmatmul.mubr.f32.gmra.mxu0 %v772
      %v958 = vpop.f32.mrf.mxu0
      %v959 = vadd.f32 %v635, %v958
      %v960 = vpop.f32.mrf.mxu0
      %961 = vmatprep.mubr.f32.mxu0 0.0
      %962 = vmatmul.mubr.f32.gmra.mxu0 %v775
      %v963 = vpop.f32.mrf.mxu0
      %v964 = vadd.f32 %v640, %v963
      %v965 = vpop.f32.mrf.mxu0
      %966 = vmatprep.mubr.f32.mxu0 0.0
      %967 = vmatmul.mubr.f32.gmra.mxu0 %v778
      %v968 = vpop.f32.mrf.mxu0
      %v969 = vadd.f32 %v645, %v968
      %v970 = vpop.f32.mrf.mxu0
      %971 = vmatprep.mubr.f32.mxu0 0.0
      %972 = vmatmul.mubr.f32.gmra.mxu0 %v781
      %v973 = vpop.f32.mrf.mxu0
      %v974 = vadd.f32 %v650, %v973
      %v975 = vpop.f32.mrf.mxu0
      %976 = vmatprep.mubr.f32.mxu0 0.0
      %977 = vmatmul.mubr.f32.gmra.mxu0 %v784
      %v978 = vpop.f32.mrf.mxu0
      %v979 = vadd.f32 %v655, %v978
      %v980 = vpop.f32.mrf.mxu0
      %981 = vmatprep.mubr.f32.mxu0 0.0
      %982 = vmatmul.mubr.f32.gmra.mxu0 %v787
      %v983 = vpop.f32.mrf.mxu0
      %v984 = vadd.f32 %v660, %v983
      %v985 = vpop.f32.mrf.mxu0
      %986 = vmatprep.mubr.f32.mxu0 0.0
      %987 = vmatmul.mubr.f32.gmra.mxu0 %v790
      %v988 = vpop.f32.mrf.mxu0
      %v989 = vadd.f32 %v665, %v988
      %v990 = vpop.f32.mrf.mxu0
      %991 = vmatprep.mubr.f32.mxu0 0.0
      %992 = vmatmul.mubr.f32.gmra.mxu0 %v793
      %v993 = vpop.f32.mrf.mxu0
      %v994 = vadd.f32 %v670, %v993
      %v995 = vpop.f32.mrf.mxu0
      %996 = vmatprep.mubr.f32.mxu0 0.0
      %997 = vmatmul.mubr.f32.gmra.mxu0 %v796
      %v998 = vpop.f32.mrf.mxu0
      %v999 = vadd.f32 %v675, %v998
      %v1000 = vpop.f32.mrf.mxu0
      %1001 = vmatprep.mubr.f32.mxu0 0.0
      %1002 = vmatmul.mubr.f32.gmra.mxu0 %v799
      %v1003 = vpop.f32.mrf.mxu0
      %v1004 = vadd.f32 %v680, %v1003
      %v1005 = vpop.f32.mrf.mxu0
      %1006 = vmatprep.mubr.f32.mxu0 0.0
      %1007 = vmatmul.mubr.f32.gmra.mxu0 %v802
      %v1008 = vpop.f32.mrf.mxu0
      %v1009 = vadd.f32 %v685, %v1008
      %v1010 = vpop.f32.mrf.mxu0
      %1011 = vmatprep.mubr.f32.mxu0 0.0
      %1012 = vmatmul.mubr.f32.gmra.mxu0 %v805
      %v1013 = vpop.f32.mrf.mxu0
      %v1014 = vadd.f32 %v690, %v1013
      %v1015 = vpop.f32.mrf.mxu0
      %1016 = vmatprep.mubr.f32.mxu0 0.0
      %1017 = vmatmul.mubr.f32.gmra.mxu0 %v808
      %v1018 = vpop.f32.mrf.mxu0
      %v1019 = vadd.f32 %v695, %v1018
      %v1020 = vpop.f32.mrf.mxu0
      %1021 = vmatprep.mubr.f32.mxu0 0.0
      %1022 = vmatmul.mubr.f32.gmra.mxu0 %v811
      %v1023 = vpop.f32.mrf.mxu0
      %v1024 = vadd.f32 %v700, %v1023
      %v1025 = vpop.f32.mrf.mxu0
      %1026 = vmatprep.mubr.f32.mxu0 0.0
      %1027 = vmatmul.mubr.f32.gmra.mxu0 %v814
      %v1028 = vpop.f32.mrf.mxu0
      %v1029 = vadd.f32 %v705, %v1028
      %v1030 = vpop.f32.mrf.mxu0
      %1031 = vmatprep.mubr.f32.mxu0 0.0
      %1032 = vmatmul.mubr.f32.gmra.mxu0 %v817
      %v1033 = vpop.f32.mrf.mxu0
      %v1034 = vadd.f32 %v710, %v1033
      %v1035 = vpop.f32.mrf.mxu0
      %1036 = vmatprep.mubr.f32.mxu0 0.0
      %1037 = vmatmul.mubr.f32.gmra.mxu0 %v820
      %v1038 = vpop.f32.mrf.mxu0
      %v1039 = vadd.f32 %v715, %v1038
      %v1040 = vpop.f32.mrf.mxu0
      %1041 = vmatprep.mubr.f32.mxu0 0.0
      %1042 = vmatmul.mubr.f32.gmra.mxu0 %v823
      %v1043 = vpop.f32.mrf.mxu0
      %v1044 = vadd.f32 %v720, %v1043
      %v1045 = vpop.f32.mrf.mxu0
      %1046 = vmatprep.mubr.f32.mxu0 0.0
      %1047 = vmatmul.mubr.f32.gmra.mxu0 %v826
      %v1048 = vpop.f32.mrf.mxu0
      %v1049 = vadd.f32 %v725, %v1048
      %v1050 = vpop.f32.mrf.mxu0
      %1051 = vmatprep.mubr.f32.mxu0 0.0
      %1052 = vmatmul.mubr.f32.gmra.mxu0 %v829
      %v1053 = vpop.f32.mrf.mxu0
      %v1054 = vadd.f32 %v730, %v1053
      %v1055 = vpop.f32.mrf.mxu0
      %1056 = vmatprep.mubr.f32.mxu0 0.0
      %1057 = vmatmul.mubr.f32.gmra.mxu0 %v832
      %v1058 = vpop.f32.mrf.mxu0
      %v1059 = vadd.f32 %v735, %v1058
      %v1060 = vpop.f32.mrf.mxu0
      %1061 = vdwg.mxu0
      %v1062 = vrot.slane %v286, 1
      %v1063 = vrot.slane %v287, 1
      %v1064 = vrot.slane %v288, 1
      %v1065 = vrot.slane %v289, 1
      %v1066 = vrot.slane %v290, 1
      %v1067 = vrot.slane %v291, 1
      %v1068 = vrot.slane %v292, 1
      %v1069 = vrot.slane %v293, 1
      %v1070 = vrot.slane %v294, 1
      %v1071 = vrot.slane %v295, 1
      %v1072 = vrot.slane %v296, 1
      %v1073 = vrot.slane %v297, 1
      %v1074 = vrot.slane %v298, 1
      %v1075 = vrot.slane %v299, 1
      %v1076 = vrot.slane %v300, 1
      %v1077 = vrot.slane %v301, 1
      %v1078 = vrot.slane %v302, 1
      %v1079 = vrot.slane %v303, 1
      %v1080 = vrot.slane %v304, 1
      %v1081 = vrot.slane %v305, 1
      %v1082 = vrot.slane %v306, 1
      %v1083 = vrot.slane %v307, 1
      %v1084 = vrot.slane %v308, 1
      %v1085 = vrot.slane %v309, 1
      %v1086 = vrot.slane %v310, 1
      %v1087 = vrot.slane %v311, 1
      %v1088 = vrot.slane %v312, 1
      %v1089 = vrot.slane %v313, 1
      %v1090 = vrot.slane %v314, 1
      %v1091 = vrot.slane %v315, 1
      %vm1092 = vcmp.lt.s32.totalorder %v280, 7
      %v1093 = vsel %vm1092, %v1090, %v1091
      %v1094 = vsel %vm1092, %v1089, %v1090
      %v1095 = vsel %vm1092, %v1088, %v1089
      %v1096 = vsel %vm1092, %v1087, %v1088
      %v1097 = vsel %vm1092, %v1086, %v1087
      %v1098 = vsel %vm1092, %v1085, %v1086
      %v1099 = vsel %vm1092, %v1084, %v1085
      %v1100 = vsel %vm1092, %v1083, %v1084
      %v1101 = vsel %vm1092, %v1082, %v1083
      %v1102 = vsel %vm1092, %v1081, %v1082
      %v1103 = vsel %vm1092, %v1080, %v1081
      %v1104 = vsel %vm1092, %v1079, %v1080
      %v1105 = vsel %vm1092, %v1078, %v1079
      %v1106 = vsel %vm1092, %v1077, %v1078
      %v1107 = vsel %vm1092, %v1076, %v1077
      %v1108 = vsel %vm1092, %v1075, %v1076
      %v1109 = vsel %vm1092, %v1074, %v1075
      %v1110 = vsel %vm1092, %v1073, %v1074
      %v1111 = vsel %vm1092, %v1072, %v1073
      %v1112 = vsel %vm1092, %v1071, %v1072
      %v1113 = vsel %vm1092, %v1070, %v1071
      %v1114 = vsel %vm1092, %v1069, %v1070
      %v1115 = vsel %vm1092, %v1068, %v1069
      %v1116 = vsel %vm1092, %v1067, %v1068
      %v1117 = vsel %vm1092, %v1066, %v1067
      %v1118 = vsel %vm1092, %v1065, %v1066
      %v1119 = vsel %vm1092, %v1064, %v1065
      %v1120 = vsel %vm1092, %v1063, %v1064
      %v1121 = vsel %vm1092, %v1062, %v1063
      %v1122 = vsel %vm1092, 0.0, %v1062
      %v1123 = vsel %vm1092, %v1091, 0.0
      %v1124 = vsel %vm284, 0.0, 0.0
      %v1125 = vsel %vm285, %v1122, 0.0
      %v1126 = vsel %vm284, %v1121, 0.0
      %v1127 = vsel %vm285, %v1120, 0.0
      %v1128 = vsel %vm284, %v1119, 0.0
      %v1129 = vsel %vm285, %v1118, 0.0
      %v1130 = vsel %vm284, %v1117, 0.0
      %v1131 = vsel %vm285, %v1116, 0.0
      %v1132 = vsel %vm284, %v1115, 0.0
      %v1133 = vsel %vm285, %v1114, 0.0
      %v1134 = vsel %vm284, %v1113, 0.0
      %v1135 = vsel %vm285, %v1112, 0.0
      %v1136 = vsel %vm284, %v1111, 0.0
      %v1137 = vsel %vm285, %v1110, 0.0
      %v1138 = vsel %vm284, %v1109, 0.0
      %v1139 = vsel %vm285, %v1108, 0.0
      %v1140 = vsel %vm284, %v1107, 0.0
      %v1141 = vsel %vm285, %v1106, 0.0
      %v1142 = vsel %vm284, %v1105, 0.0
      %v1143 = vsel %vm285, %v1104, 0.0
      %v1144 = vsel %vm284, %v1103, 0.0
      %v1145 = vsel %vm285, %v1102, 0.0
      %v1146 = vsel %vm284, %v1101, 0.0
      %v1147 = vsel %vm285, %v1100, 0.0
      %v1148 = vsel %vm284, %v1099, 0.0
      %v1149 = vsel %vm285, %v1098, 0.0
      %v1150 = vsel %vm284, %v1097, 0.0
      %v1151 = vsel %vm285, %v1096, 0.0
      %v1152 = vsel %vm284, %v1095, 0.0
      %v1153 = vsel %vm285, %v1094, 0.0
      %v1154 = vsel %vm284, %v1093, 0.0
      %v1155 = vsel %vm285, %v1123, 0.0
      %s1156 = scalar_lea.vmem %s1, 8
      %v1157 = vld [vmem:[%s1156] sm:$0xf]
      %v1159 = vsel %vm415, %v1124, 0
      %v1162 = vsel %vm415, %v1125, 0
      %v1165 = vsel %vm415, %v1126, 0
      %v1168 = vsel %vm415, %v1127, 0
      %v1171 = vsel %vm415, %v1128, 0
      %v1174 = vsel %vm415, %v1129, 0
      %v1177 = vsel %vm415, %v1130, 0
      %v1180 = vsel %vm415, %v1131, 0
      %v1183 = vsel %vm415, %v1132, 0
      %v1186 = vsel %vm415, %v1133, 0
      %v1189 = vsel %vm415, %v1134, 0
      %v1192 = vsel %vm415, %v1135, 0
      %v1195 = vsel %vm415, %v1136, 0
      %v1198 = vsel %vm415, %v1137, 0
      %v1201 = vsel %vm415, %v1138, 0
      %v1204 = vsel %vm415, %v1139, 0
      %v1207 = vsel %vm415, %v1140, 0
      %v1210 = vsel %vm415, %v1141, 0
      %v1213 = vsel %vm415, %v1142, 0
      %v1216 = vsel %vm415, %v1143, 0
      %v1219 = vsel %vm415, %v1144, 0
      %v1222 = vsel %vm415, %v1145, 0
      %v1225 = vsel %vm415, %v1146, 0
      %v1228 = vsel %vm415, %v1147, 0
      %v1231 = vsel %vm415, %v1148, 0
      %v1234 = vsel %vm415, %v1149, 0
      %v1237 = vsel %vm415, %v1150, 0
      %v1240 = vsel %vm415, %v1151, 0
      %v1243 = vsel %vm415, %v1152, 0
      %v1246 = vsel %vm415, %v1153, 0
      %v1249 = vsel %vm415, %v1154, 0
      %v1252 = vsel %vm415, %v1155, 0
      %v1255 = vsel %vm509, %v1157, 0
      %1257 = vmatprep.subr.mxu0 0.0
      %1258 = vmatpush1.msra.mxu0 0.0
      %1259 = vmatprep.subr.mxu0 0.0
      %1260 = vmatpush1.msra.mxu0 0.0
      %1261 = vmatprep.subr.mxu0 0.0
      %1262 = vmatpush1.msra.mxu0 0.0
      %1263 = vmatprep.subr.mxu0 0.0
      %1264 = vmatpush1.msra.mxu0 0.0
      %1265 = vmatprep.subr.mxu0 0.0
      %1266 = vmatpush1.msra.mxu0 0.0
      %1267 = vmatprep.subr.mxu0 0.0
      %1268 = vmatpush1.msra.mxu0 0.0
      %1269 = vmatprep.subr.mxu0 0.0
      %1270 = vmatpush1.msra.mxu0 0.0
      %1271 = vmatprep.subr.mxu0 0.0
      %1272 = vmatpush1.msra.mxu0 0.0
      %1273 = vmatprep.subr.mxu0 0.0
      %1274 = vmatpush1.msra.mxu0 0.0
      %1275 = vmatprep.subr.mxu0 0.0
      %1276 = vmatpush1.msra.mxu0 0.0
      %1277 = vmatprep.subr.mxu0 0.0
      %1278 = vmatpush1.msra.mxu0 0.0
      %1279 = vmatprep.subr.mxu0 0.0
      %1280 = vmatpush1.msra.mxu0 0.0
      %1281 = vmatprep.subr.mxu0 0.0
      %1282 = vmatpush1.msra.mxu0 0.0
      %1283 = vmatprep.subr.mxu0 0.0
      %1284 = vmatpush1.msra.mxu0 0.0
      %1285 = vmatprep.subr.mxu0 0.0
      %1286 = vmatpush1.msra.mxu0 0.0
      %1287 = vmatprep.subr.mxu0 0.0
      %1288 = vmatpush1.msra.mxu0 %v1255
      %1289 = vmatprep.subr.mxu0 0.0
      %1290 = vmatpush2.msra.mxu0 0.0
      %1291 = vmatprep.subr.mxu0 0.0
      %1292 = vmatpush2.msra.mxu0 0.0
      %1293 = vmatprep.subr.mxu0 0.0
      %1294 = vmatpush2.msra.mxu0 0.0
      %1295 = vmatprep.subr.mxu0 0.0
      %1296 = vmatpush2.msra.mxu0 0.0
      %1297 = vmatprep.subr.mxu0 0.0
      %1298 = vmatpush2.msra.mxu0 0.0
      %1299 = vmatprep.subr.mxu0 0.0
      %1300 = vmatpush2.msra.mxu0 0.0
      %1301 = vmatprep.subr.mxu0 0.0
      %1302 = vmatpush2.msra.mxu0 0.0
      %1303 = vmatprep.subr.mxu0 0.0
      %1304 = vmatpush2.msra.mxu0 0.0
      %1305 = vmatprep.subr.mxu0 0.0
      %1306 = vmatpush2.msra.mxu0 0.0
      %1307 = vmatprep.subr.mxu0 0.0
      %1308 = vmatpush2.msra.mxu0 0.0
      %1309 = vmatprep.subr.mxu0 0.0
      %1310 = vmatpush2.msra.mxu0 0.0
      %1311 = vmatprep.subr.mxu0 0.0
      %1312 = vmatpush2.msra.mxu0 0.0
      %1313 = vmatprep.subr.mxu0 0.0
      %1314 = vmatpush2.msra.mxu0 0.0
      %1315 = vmatprep.subr.mxu0 0.0
      %1316 = vmatpush2.msra.mxu0 0.0
      %1317 = vmatprep.subr.mxu0 0.0
      %1318 = vmatpush2.msra.mxu0 0.0
      %1319 = vmatprep.subr.mxu0 0.0
      %1320 = vmatpush2.msra.mxu0 0.0
      %1321 = vmatprep.mubr.f32.mxu0 0.0
      %1322 = vmatmul.mubr.f32.gmra.mxu0 %v1159
      %v1323 = vpop.f32.mrf.mxu0
      %v1324 = vadd.f32 0.0, %v1323
      %v1325 = vpop.f32.mrf.mxu0
      %1326 = vmatprep.mubr.f32.mxu0 0.0
      %1327 = vmatmul.mubr.f32.gmra.mxu0 %v1162
      %v1328 = vpop.f32.mrf.mxu0
      %v1329 = vadd.f32 0.0, %v1328
      %v1330 = vpop.f32.mrf.mxu0
      %1331 = vmatprep.mubr.f32.mxu0 0.0
      %1332 = vmatmul.mubr.f32.gmra.mxu0 %v1165
      %v1333 = vpop.f32.mrf.mxu0
      %v1334 = vadd.f32 0.0, %v1333
      %v1335 = vpop.f32.mrf.mxu0
      %1336 = vmatprep.mubr.f32.mxu0 0.0
      %1337 = vmatmul.mubr.f32.gmra.mxu0 %v1168
      %v1338 = vpop.f32.mrf.mxu0
      %v1339 = vadd.f32 0.0, %v1338
      %v1340 = vpop.f32.mrf.mxu0
      %1341 = vmatprep.mubr.f32.mxu0 0.0
      %1342 = vmatmul.mubr.f32.gmra.mxu0 %v1171
      %v1343 = vpop.f32.mrf.mxu0
      %v1344 = vadd.f32 0.0, %v1343
      %v1345 = vpop.f32.mrf.mxu0
      %1346 = vmatprep.mubr.f32.mxu0 0.0
      %1347 = vmatmul.mubr.f32.gmra.mxu0 %v1174
      %v1348 = vpop.f32.mrf.mxu0
      %v1349 = vadd.f32 0.0, %v1348
      %v1350 = vpop.f32.mrf.mxu0
      %1351 = vmatprep.mubr.f32.mxu0 0.0
      %1352 = vmatmul.mubr.f32.gmra.mxu0 %v1177
      %v1353 = vpop.f32.mrf.mxu0
      %v1354 = vadd.f32 0.0, %v1353
      %v1355 = vpop.f32.mrf.mxu0
      %1356 = vmatprep.mubr.f32.mxu0 0.0
      %1357 = vmatmul.mubr.f32.gmra.mxu0 %v1180
      %v1358 = vpop.f32.mrf.mxu0
      %v1359 = vadd.f32 0.0, %v1358
      %v1360 = vpop.f32.mrf.mxu0
      %1361 = vmatprep.mubr.f32.mxu0 0.0
      %1362 = vmatmul.mubr.f32.gmra.mxu0 %v1183
      %v1363 = vpop.f32.mrf.mxu0
      %v1364 = vadd.f32 0.0, %v1363
      %v1365 = vpop.f32.mrf.mxu0
      %1366 = vmatprep.mubr.f32.mxu0 0.0
      %1367 = vmatmul.mubr.f32.gmra.mxu0 %v1186
      %v1368 = vpop.f32.mrf.mxu0
      %v1369 = vadd.f32 0.0, %v1368
      %v1370 = vpop.f32.mrf.mxu0
      %1371 = vmatprep.mubr.f32.mxu0 0.0
      %1372 = vmatmul.mubr.f32.gmra.mxu0 %v1189
      %v1373 = vpop.f32.mrf.mxu0
      %v1374 = vadd.f32 0.0, %v1373
      %v1375 = vpop.f32.mrf.mxu0
      %1376 = vmatprep.mubr.f32.mxu0 0.0
      %1377 = vmatmul.mubr.f32.gmra.mxu0 %v1192
      %v1378 = vpop.f32.mrf.mxu0
      %v1379 = vadd.f32 0.0, %v1378
      %v1380 = vpop.f32.mrf.mxu0
      %1381 = vmatprep.mubr.f32.mxu0 0.0
      %1382 = vmatmul.mubr.f32.gmra.mxu0 %v1195
      %v1383 = vpop.f32.mrf.mxu0
      %v1384 = vadd.f32 0.0, %v1383
      %v1385 = vpop.f32.mrf.mxu0
      %1386 = vmatprep.mubr.f32.mxu0 0.0
      %1387 = vmatmul.mubr.f32.gmra.mxu0 %v1198
      %v1388 = vpop.f32.mrf.mxu0
      %v1389 = vadd.f32 0.0, %v1388
      %v1390 = vpop.f32.mrf.mxu0
      %1391 = vmatprep.mubr.f32.mxu0 0.0
      %1392 = vmatmul.mubr.f32.gmra.mxu0 %v1201
      %v1393 = vpop.f32.mrf.mxu0
      %v1394 = vadd.f32 0.0, %v1393
      %v1395 = vpop.f32.mrf.mxu0
      %1396 = vmatprep.mubr.f32.mxu0 0.0
      %1397 = vmatmul.mubr.f32.gmra.mxu0 %v1204
      %v1398 = vpop.f32.mrf.mxu0
      %v1399 = vadd.f32 0.0, %v1398
      %v1400 = vpop.f32.mrf.mxu0
      %1401 = vmatprep.mubr.f32.mxu0 0.0
      %1402 = vmatmul.mubr.f32.gmra.mxu0 %v1207
      %v1403 = vpop.f32.mrf.mxu0
      %v1404 = vadd.f32 0.0, %v1403
      %v1405 = vpop.f32.mrf.mxu0
      %1406 = vmatprep.mubr.f32.mxu0 0.0
      %1407 = vmatmul.mubr.f32.gmra.mxu0 %v1210
      %v1408 = vpop.f32.mrf.mxu0
      %v1409 = vadd.f32 0.0, %v1408
      %v1410 = vpop.f32.mrf.mxu0
      %1411 = vmatprep.mubr.f32.mxu0 0.0
      %1412 = vmatmul.mubr.f32.gmra.mxu0 %v1213
      %v1413 = vpop.f32.mrf.mxu0
      %v1414 = vadd.f32 0.0, %v1413
      %v1415 = vpop.f32.mrf.mxu0
      %1416 = vmatprep.mubr.f32.mxu0 0.0
      %1417 = vmatmul.mubr.f32.gmra.mxu0 %v1216
      %v1418 = vpop.f32.mrf.mxu0
      %v1419 = vadd.f32 0.0, %v1418
      %v1420 = vpop.f32.mrf.mxu0
      %1421 = vmatprep.mubr.f32.mxu0 0.0
      %1422 = vmatmul.mubr.f32.gmra.mxu0 %v1219
      %v1423 = vpop.f32.mrf.mxu0
      %v1424 = vadd.f32 0.0, %v1423
      %v1425 = vpop.f32.mrf.mxu0
      %1426 = vmatprep.mubr.f32.mxu0 0.0
      %1427 = vmatmul.mubr.f32.gmra.mxu0 %v1222
      %v1428 = vpop.f32.mrf.mxu0
      %v1429 = vadd.f32 0.0, %v1428
      %v1430 = vpop.f32.mrf.mxu0
      %1431 = vmatprep.mubr.f32.mxu0 0.0
      %1432 = vmatmul.mubr.f32.gmra.mxu0 %v1225
      %v1433 = vpop.f32.mrf.mxu0
      %v1434 = vadd.f32 0.0, %v1433
      %v1435 = vpop.f32.mrf.mxu0
      %1436 = vmatprep.mubr.f32.mxu0 0.0
      %1437 = vmatmul.mubr.f32.gmra.mxu0 %v1228
      %v1438 = vpop.f32.mrf.mxu0
      %v1439 = vadd.f32 0.0, %v1438
      %v1440 = vpop.f32.mrf.mxu0
      %1441 = vmatprep.mubr.f32.mxu0 0.0
      %1442 = vmatmul.mubr.f32.gmra.mxu0 %v1231
      %v1443 = vpop.f32.mrf.mxu0
      %v1444 = vadd.f32 0.0, %v1443
      %v1445 = vpop.f32.mrf.mxu0
      %1446 = vmatprep.mubr.f32.mxu0 0.0
      %1447 = vmatmul.mubr.f32.gmra.mxu0 %v1234
      %v1448 = vpop.f32.mrf.mxu0
      %v1449 = vadd.f32 0.0, %v1448
      %v1450 = vpop.f32.mrf.mxu0
      %1451 = vmatprep.mubr.f32.mxu0 0.0
      %1452 = vmatmul.mubr.f32.gmra.mxu0 %v1237
      %v1453 = vpop.f32.mrf.mxu0
      %v1454 = vadd.f32 0.0, %v1453
      %v1455 = vpop.f32.mrf.mxu0
      %1456 = vmatprep.mubr.f32.mxu0 0.0
      %1457 = vmatmul.mubr.f32.gmra.mxu0 %v1240
      %v1458 = vpop.f32.mrf.mxu0
      %v1459 = vadd.f32 0.0, %v1458
      %v1460 = vpop.f32.mrf.mxu0
      %1461 = vmatprep.mubr.f32.mxu0 0.0
      %1462 = vmatmul.mubr.f32.gmra.mxu0 %v1243
      %v1463 = vpop.f32.mrf.mxu0
      %v1464 = vadd.f32 0.0, %v1463
      %v1465 = vpop.f32.mrf.mxu0
      %1466 = vmatprep.mubr.f32.mxu0 0.0
      %1467 = vmatmul.mubr.f32.gmra.mxu0 %v1246
      %v1468 = vpop.f32.mrf.mxu0
      %v1469 = vadd.f32 0.0, %v1468
      %v1470 = vpop.f32.mrf.mxu0
      %1471 = vmatprep.mubr.f32.mxu0 0.0
      %1472 = vmatmul.mubr.f32.gmra.mxu0 %v1249
      %v1473 = vpop.f32.mrf.mxu0
      %v1474 = vadd.f32 0.0, %v1473
      %v1475 = vpop.f32.mrf.mxu0
      %1476 = vmatprep.mubr.f32.mxu0 0.0
      %1477 = vmatmul.mubr.f32.gmra.mxu0 %v1252
      %v1478 = vpop.f32.mrf.mxu0
      %v1479 = vadd.f32 0.0, %v1478
      %v1480 = vpop.f32.mrf.mxu0
      %1481 = vdwg.mxu0
      %v1482 = vadd.f32 %v904, %v1324
      %v1483 = vadd.f32 %v909, %v1329
      %v1484 = vadd.f32 %v914, %v1334
      %v1485 = vadd.f32 %v919, %v1339
      %v1486 = vadd.f32 %v924, %v1344
      %v1487 = vadd.f32 %v929, %v1349
      %v1488 = vadd.f32 %v934, %v1354
      %v1489 = vadd.f32 %v939, %v1359
      %v1490 = vadd.f32 %v944, %v1364
      %v1491 = vadd.f32 %v949, %v1369
      %v1492 = vadd.f32 %v954, %v1374
      %v1493 = vadd.f32 %v959, %v1379
      %v1494 = vadd.f32 %v964, %v1384
      %v1495 = vadd.f32 %v969, %v1389
      %v1496 = vadd.f32 %v974, %v1394
      %v1497 = vadd.f32 %v979, %v1399
      %v1498 = vadd.f32 %v984, %v1404
      %v1499 = vadd.f32 %v989, %v1409
      %v1500 = vadd.f32 %v994, %v1414
      %v1501 = vadd.f32 %v999, %v1419
      %v1502 = vadd.f32 %v1004, %v1424
      %v1503 = vadd.f32 %v1009, %v1429
      %v1504 = vadd.f32 %v1014, %v1434
      %v1505 = vadd.f32 %v1019, %v1439
      %v1506 = vadd.f32 %v1024, %v1444
      %v1507 = vadd.f32 %v1029, %v1449
      %v1508 = vadd.f32 %v1034, %v1454
      %v1509 = vadd.f32 %v1039, %v1459
      %v1510 = vadd.f32 %v1044, %v1464
      %v1511 = vadd.f32 %v1049, %v1469
      %v1512 = vadd.f32 %v1054, %v1474
      %v1513 = vadd.f32 %v1059, %v1479
      %v1514 = vrot.slane %v316, 7
      %v1515 = vrot.slane %v317, 7
      %v1516 = vsel %vm348, %v1514, %v1515
      %v1517 = vsel %vm348, %v347, %v1514
      %v1518 = vsel %vm348, %v1515, %v318
      %v1519 = vsel %vm282, %v1518, 0.0
      %v1520 = vsel %vm282, %v1517, 0.0
      %v1521 = vsel %vm283, %v1516, 0.0
      %s1522 = scalar_lea.vmem %s1, 12
      %v1523 = vld [vmem:[%s1522] sm:$0xf]
      %v1525 = vsel %vm415, %v1519, 0
      %v1528 = vsel %vm415, %v1520, 0
      %v1531 = vsel %vm415, %v1521, 0
      %v1534 = vsel %vm509, %v1523, 0
      %1536 = vmatprep.subr.mxu0 0.0
      %1537 = vmatpush1.msra.mxu0 0.0
      %1538 = vmatprep.subr.mxu0 0.0
      %1539 = vmatpush1.msra.mxu0 0.0
      %1540 = vmatprep.subr.mxu0 0.0
      %1541 = vmatpush1.msra.mxu0 0.0
      %1542 = vmatprep.subr.mxu0 0.0
      %1543 = vmatpush1.msra.mxu0 0.0
      %1544 = vmatprep.subr.mxu0 0.0
      %1545 = vmatpush1.msra.mxu0 0.0
      %1546 = vmatprep.subr.mxu0 0.0
      %1547 = vmatpush1.msra.mxu0 0.0
      %1548 = vmatprep.subr.mxu0 0.0
      %1549 = vmatpush1.msra.mxu0 0.0
      %1550 = vmatprep.subr.mxu0 0.0
      %1551 = vmatpush1.msra.mxu0 0.0
      %1552 = vmatprep.subr.mxu0 0.0
      %1553 = vmatpush1.msra.mxu0 0.0
      %1554 = vmatprep.subr.mxu0 0.0
      %1555 = vmatpush1.msra.mxu0 0.0
      %1556 = vmatprep.subr.mxu0 0.0
      %1557 = vmatpush1.msra.mxu0 0.0
      %1558 = vmatprep.subr.mxu0 0.0
      %1559 = vmatpush1.msra.mxu0 0.0
      %1560 = vmatprep.subr.mxu0 0.0
      %1561 = vmatpush1.msra.mxu0 0.0
      %1562 = vmatprep.subr.mxu0 0.0
      %1563 = vmatpush1.msra.mxu0 0.0
      %1564 = vmatprep.subr.mxu0 0.0
      %1565 = vmatpush1.msra.mxu0 0.0
      %1566 = vmatprep.subr.mxu0 0.0
      %1567 = vmatpush1.msra.mxu0 %v1534
      %1568 = vmatprep.subr.mxu0 0.0
      %1569 = vmatpush2.msra.mxu0 0.0
      %1570 = vmatprep.subr.mxu0 0.0
      %1571 = vmatpush2.msra.mxu0 0.0
      %1572 = vmatprep.subr.mxu0 0.0
      %1573 = vmatpush2.msra.mxu0 0.0
      %1574 = vmatprep.subr.mxu0 0.0
      %1575 = vmatpush2.msra.mxu0 0.0
      %1576 = vmatprep.subr.mxu0 0.0
      %1577 = vmatpush2.msra.mxu0 0.0
      %1578 = vmatprep.subr.mxu0 0.0
      %1579 = vmatpush2.msra.mxu0 0.0
      %1580 = vmatprep.subr.mxu0 0.0
      %1581 = vmatpush2.msra.mxu0 0.0
      %1582 = vmatprep.subr.mxu0 0.0
      %1583 = vmatpush2.msra.mxu0 0.0
      %1584 = vmatprep.subr.mxu0 0.0
      %1585 = vmatpush2.msra.mxu0 0.0
      %1586 = vmatprep.subr.mxu0 0.0
      %1587 = vmatpush2.msra.mxu0 0.0
      %1588 = vmatprep.subr.mxu0 0.0
      %1589 = vmatpush2.msra.mxu0 0.0
      %1590 = vmatprep.subr.mxu0 0.0
      %1591 = vmatpush2.msra.mxu0 0.0
      %1592 = vmatprep.subr.mxu0 0.0
      %1593 = vmatpush2.msra.mxu0 0.0
      %1594 = vmatprep.subr.mxu0 0.0
      %1595 = vmatpush2.msra.mxu0 0.0
      %1596 = vmatprep.subr.mxu0 0.0
      %1597 = vmatpush2.msra.mxu0 0.0
      %1598 = vmatprep.subr.mxu0 0.0
      %1599 = vmatpush2.msra.mxu0 0.0
      %1600 = vmatprep.mubr.f32.mxu0 0.0
      %1601 = vmatmul.mubr.f32.gmra.mxu0 %v1525
      %v1602 = vpop.f32.mrf.mxu0
      %v1603 = vadd.f32 0.0, %v1602
      %v1604 = vpop.f32.mrf.mxu0
      %1605 = vmatprep.mubr.f32.mxu0 0.0
      %1606 = vmatmul.mubr.f32.gmra.mxu0 %v748
      %v1607 = vpop.f32.mrf.mxu0
      %v1608 = vadd.f32 0.0, %v1607
      %v1609 = vpop.f32.mrf.mxu0
      %1610 = vmatprep.mubr.f32.mxu0 0.0
      %1611 = vmatmul.mubr.f32.gmra.mxu0 %v751
      %v1612 = vpop.f32.mrf.mxu0
      %v1613 = vadd.f32 0.0, %v1612
      %v1614 = vpop.f32.mrf.mxu0
      %1615 = vmatprep.mubr.f32.mxu0 0.0
      %1616 = vmatmul.mubr.f32.gmra.mxu0 %v754
      %v1617 = vpop.f32.mrf.mxu0
      %v1618 = vadd.f32 0.0, %v1617
      %v1619 = vpop.f32.mrf.mxu0
      %1620 = vmatprep.mubr.f32.mxu0 0.0
      %1621 = vmatmul.mubr.f32.gmra.mxu0 %v757
      %v1622 = vpop.f32.mrf.mxu0
      %v1623 = vadd.f32 0.0, %v1622
      %v1624 = vpop.f32.mrf.mxu0
      %1625 = vmatprep.mubr.f32.mxu0 0.0
      %1626 = vmatmul.mubr.f32.gmra.mxu0 %v760
      %v1627 = vpop.f32.mrf.mxu0
      %v1628 = vadd.f32 0.0, %v1627
      %v1629 = vpop.f32.mrf.mxu0
      %1630 = vmatprep.mubr.f32.mxu0 0.0
      %1631 = vmatmul.mubr.f32.gmra.mxu0 %v763
      %v1632 = vpop.f32.mrf.mxu0
      %v1633 = vadd.f32 0.0, %v1632
      %v1634 = vpop.f32.mrf.mxu0
      %1635 = vmatprep.mubr.f32.mxu0 0.0
      %1636 = vmatmul.mubr.f32.gmra.mxu0 %v766
      %v1637 = vpop.f32.mrf.mxu0
      %v1638 = vadd.f32 0.0, %v1637
      %v1639 = vpop.f32.mrf.mxu0
      %1640 = vmatprep.mubr.f32.mxu0 0.0
      %1641 = vmatmul.mubr.f32.gmra.mxu0 %v769
      %v1642 = vpop.f32.mrf.mxu0
      %v1643 = vadd.f32 0.0, %v1642
      %v1644 = vpop.f32.mrf.mxu0
      %1645 = vmatprep.mubr.f32.mxu0 0.0
      %1646 = vmatmul.mubr.f32.gmra.mxu0 %v772
      %v1647 = vpop.f32.mrf.mxu0
      %v1648 = vadd.f32 0.0, %v1647
      %v1649 = vpop.f32.mrf.mxu0
      %1650 = vmatprep.mubr.f32.mxu0 0.0
      %1651 = vmatmul.mubr.f32.gmra.mxu0 %v775
      %v1652 = vpop.f32.mrf.mxu0
      %v1653 = vadd.f32 0.0, %v1652
      %v1654 = vpop.f32.mrf.mxu0
      %1655 = vmatprep.mubr.f32.mxu0 0.0
      %1656 = vmatmul.mubr.f32.gmra.mxu0 %v778
      %v1657 = vpop.f32.mrf.mxu0
      %v1658 = vadd.f32 0.0, %v1657
      %v1659 = vpop.f32.mrf.mxu0
      %1660 = vmatprep.mubr.f32.mxu0 0.0
      %1661 = vmatmul.mubr.f32.gmra.mxu0 %v781
      %v1662 = vpop.f32.mrf.mxu0
      %v1663 = vadd.f32 0.0, %v1662
      %v1664 = vpop.f32.mrf.mxu0
      %1665 = vmatprep.mubr.f32.mxu0 0.0
      %1666 = vmatmul.mubr.f32.gmra.mxu0 %v784
      %v1667 = vpop.f32.mrf.mxu0
      %v1668 = vadd.f32 0.0, %v1667
      %v1669 = vpop.f32.mrf.mxu0
      %1670 = vmatprep.mubr.f32.mxu0 0.0
      %1671 = vmatmul.mubr.f32.gmra.mxu0 %v787
      %v1672 = vpop.f32.mrf.mxu0
      %v1673 = vadd.f32 0.0, %v1672
      %v1674 = vpop.f32.mrf.mxu0
      %1675 = vmatprep.mubr.f32.mxu0 0.0
      %1676 = vmatmul.mubr.f32.gmra.mxu0 %v790
      %v1677 = vpop.f32.mrf.mxu0
      %v1678 = vadd.f32 0.0, %v1677
      %v1679 = vpop.f32.mrf.mxu0
      %1680 = vmatprep.mubr.f32.mxu0 0.0
      %1681 = vmatmul.mubr.f32.gmra.mxu0 %v793
      %v1682 = vpop.f32.mrf.mxu0
      %v1683 = vadd.f32 0.0, %v1682
      %v1684 = vpop.f32.mrf.mxu0
      %1685 = vmatprep.mubr.f32.mxu0 0.0
      %1686 = vmatmul.mubr.f32.gmra.mxu0 %v796
      %v1687 = vpop.f32.mrf.mxu0
      %v1688 = vadd.f32 0.0, %v1687
      %v1689 = vpop.f32.mrf.mxu0
      %1690 = vmatprep.mubr.f32.mxu0 0.0
      %1691 = vmatmul.mubr.f32.gmra.mxu0 %v799
      %v1692 = vpop.f32.mrf.mxu0
      %v1693 = vadd.f32 0.0, %v1692
      %v1694 = vpop.f32.mrf.mxu0
      %1695 = vmatprep.mubr.f32.mxu0 0.0
      %1696 = vmatmul.mubr.f32.gmra.mxu0 %v802
      %v1697 = vpop.f32.mrf.mxu0
      %v1698 = vadd.f32 0.0, %v1697
      %v1699 = vpop.f32.mrf.mxu0
      %1700 = vmatprep.mubr.f32.mxu0 0.0
      %1701 = vmatmul.mubr.f32.gmra.mxu0 %v805
      %v1702 = vpop.f32.mrf.mxu0
      %v1703 = vadd.f32 0.0, %v1702
      %v1704 = vpop.f32.mrf.mxu0
      %1705 = vmatprep.mubr.f32.mxu0 0.0
      %1706 = vmatmul.mubr.f32.gmra.mxu0 %v808
      %v1707 = vpop.f32.mrf.mxu0
      %v1708 = vadd.f32 0.0, %v1707
      %v1709 = vpop.f32.mrf.mxu0
      %1710 = vmatprep.mubr.f32.mxu0 0.0
      %1711 = vmatmul.mubr.f32.gmra.mxu0 %v811
      %v1712 = vpop.f32.mrf.mxu0
      %v1713 = vadd.f32 0.0, %v1712
      %v1714 = vpop.f32.mrf.mxu0
      %1715 = vmatprep.mubr.f32.mxu0 0.0
      %1716 = vmatmul.mubr.f32.gmra.mxu0 %v814
      %v1717 = vpop.f32.mrf.mxu0
      %v1718 = vadd.f32 0.0, %v1717
      %v1719 = vpop.f32.mrf.mxu0
      %1720 = vmatprep.mubr.f32.mxu0 0.0
      %1721 = vmatmul.mubr.f32.gmra.mxu0 %v817
      %v1722 = vpop.f32.mrf.mxu0
      %v1723 = vadd.f32 0.0, %v1722
      %v1724 = vpop.f32.mrf.mxu0
      %1725 = vmatprep.mubr.f32.mxu0 0.0
      %1726 = vmatmul.mubr.f32.gmra.mxu0 %v820
      %v1727 = vpop.f32.mrf.mxu0
      %v1728 = vadd.f32 0.0, %v1727
      %v1729 = vpop.f32.mrf.mxu0
      %1730 = vmatprep.mubr.f32.mxu0 0.0
      %1731 = vmatmul.mubr.f32.gmra.mxu0 %v823
      %v1732 = vpop.f32.mrf.mxu0
      %v1733 = vadd.f32 0.0, %v1732
      %v1734 = vpop.f32.mrf.mxu0
      %1735 = vmatprep.mubr.f32.mxu0 0.0
      %1736 = vmatmul.mubr.f32.gmra.mxu0 %v826
      %v1737 = vpop.f32.mrf.mxu0
      %v1738 = vadd.f32 0.0, %v1737
      %v1739 = vpop.f32.mrf.mxu0
      %1740 = vmatprep.mubr.f32.mxu0 0.0
      %1741 = vmatmul.mubr.f32.gmra.mxu0 %v829
      %v1742 = vpop.f32.mrf.mxu0
      %v1743 = vadd.f32 0.0, %v1742
      %v1744 = vpop.f32.mrf.mxu0
      %1745 = vmatprep.mubr.f32.mxu0 0.0
      %1746 = vmatmul.mubr.f32.gmra.mxu0 %v832
      %v1747 = vpop.f32.mrf.mxu0
      %v1748 = vadd.f32 0.0, %v1747
      %v1749 = vpop.f32.mrf.mxu0
      %1750 = vmatprep.mubr.f32.mxu0 0.0
      %1751 = vmatmul.mubr.f32.gmra.mxu0 %v1528
      %v1752 = vpop.f32.mrf.mxu0
      %v1753 = vadd.f32 0.0, %v1752
      %v1754 = vpop.f32.mrf.mxu0
      %1755 = vmatprep.mubr.f32.mxu0 0.0
      %1756 = vmatmul.mubr.f32.gmra.mxu0 %v1531
      %v1757 = vpop.f32.mrf.mxu0
      %v1758 = vadd.f32 0.0, %v1757
      %v1759 = vpop.f32.mrf.mxu0
      %1760 = vdwg.mxu0
      %v1761 = vadd.f32 %v1482, %v1603
      %v1762 = vadd.f32 %v1483, %v1608
      %v1763 = vadd.f32 %v1484, %v1613
      %v1764 = vadd.f32 %v1485, %v1618
      %v1765 = vadd.f32 %v1486, %v1623
      %v1766 = vadd.f32 %v1487, %v1628
      %v1767 = vadd.f32 %v1488, %v1633
      %v1768 = vadd.f32 %v1489, %v1638
      %v1769 = vadd.f32 %v1490, %v1643
      %v1770 = vadd.f32 %v1491, %v1648
      %v1771 = vadd.f32 %v1492, %v1653
      %v1772 = vadd.f32 %v1493, %v1658
      %v1773 = vadd.f32 %v1494, %v1663
      %v1774 = vadd.f32 %v1495, %v1668
      %v1775 = vadd.f32 %v1496, %v1673
      %v1776 = vadd.f32 %v1497, %v1678
      %v1777 = vadd.f32 %v1498, %v1683
      %v1778 = vadd.f32 %v1499, %v1688
      %v1779 = vadd.f32 %v1500, %v1693
      %v1780 = vadd.f32 %v1501, %v1698
      %v1781 = vadd.f32 %v1502, %v1703
      %v1782 = vadd.f32 %v1503, %v1708
      %v1783 = vadd.f32 %v1504, %v1713
      %v1784 = vadd.f32 %v1505, %v1718
      %v1785 = vadd.f32 %v1506, %v1723
      %v1786 = vadd.f32 %v1507, %v1728
      %v1787 = vadd.f32 %v1508, %v1733
      %v1788 = vadd.f32 %v1509, %v1738
      %v1789 = vadd.f32 %v1510, %v1743
      %v1790 = vadd.f32 %v1511, %v1748
      %v1791 = vadd.f32 %v1512, %v1753
      %v1792 = vadd.f32 %v1513, %v1758
      %s1793 = scalar_lea.vmem %s1, 16
      %v1794 = vld [vmem:[%s1793] sm:$0xf]
      %v1796 = vsel %vm415, %v316, 0
      %v1799 = vsel %vm415, %v317, 0
      %v1802 = vsel %vm509, %v1794, 0
      %1804 = vmatprep.subr.mxu0 0.0
      %1805 = vmatpush1.msra.mxu0 0.0
      %1806 = vmatprep.subr.mxu0 0.0
      %1807 = vmatpush1.msra.mxu0 0.0
      %1808 = vmatprep.subr.mxu0 0.0
      %1809 = vmatpush1.msra.mxu0 0.0
      %1810 = vmatprep.subr.mxu0 0.0
      %1811 = vmatpush1.msra.mxu0 0.0
      %1812 = vmatprep.subr.mxu0 0.0
      %1813 = vmatpush1.msra.mxu0 0.0
      %1814 = vmatprep.subr.mxu0 0.0
      %1815 = vmatpush1.msra.mxu0 0.0
      %1816 = vmatprep.subr.mxu0 0.0
      %1817 = vmatpush1.msra.mxu0 0.0
      %1818 = vmatprep.subr.mxu0 0.0
      %1819 = vmatpush1.msra.mxu0 0.0
      %1820 = vmatprep.subr.mxu0 0.0
      %1821 = vmatpush1.msra.mxu0 0.0
      %1822 = vmatprep.subr.mxu0 0.0
      %1823 = vmatpush1.msra.mxu0 0.0
      %1824 = vmatprep.subr.mxu0 0.0
      %1825 = vmatpush1.msra.mxu0 0.0
      %1826 = vmatprep.subr.mxu0 0.0
      %1827 = vmatpush1.msra.mxu0 0.0
      %1828 = vmatprep.subr.mxu0 0.0
      %1829 = vmatpush1.msra.mxu0 0.0
      %1830 = vmatprep.subr.mxu0 0.0
      %1831 = vmatpush1.msra.mxu0 0.0
      %1832 = vmatprep.subr.mxu0 0.0
      %1833 = vmatpush1.msra.mxu0 0.0
      %1834 = vmatprep.subr.mxu0 0.0
      %1835 = vmatpush1.msra.mxu0 %v1802
      %1836 = vmatprep.subr.mxu0 0.0
      %1837 = vmatpush2.msra.mxu0 0.0
      %1838 = vmatprep.subr.mxu0 0.0
      %1839 = vmatpush2.msra.mxu0 0.0
      %1840 = vmatprep.subr.mxu0 0.0
      %1841 = vmatpush2.msra.mxu0 0.0
      %1842 = vmatprep.subr.mxu0 0.0
      %1843 = vmatpush2.msra.mxu0 0.0
      %1844 = vmatprep.subr.mxu0 0.0
      %1845 = vmatpush2.msra.mxu0 0.0
      %1846 = vmatprep.subr.mxu0 0.0
      %1847 = vmatpush2.msra.mxu0 0.0
      %1848 = vmatprep.subr.mxu0 0.0
      %1849 = vmatpush2.msra.mxu0 0.0
      %1850 = vmatprep.subr.mxu0 0.0
      %1851 = vmatpush2.msra.mxu0 0.0
      %1852 = vmatprep.subr.mxu0 0.0
      %1853 = vmatpush2.msra.mxu0 0.0
      %1854 = vmatprep.subr.mxu0 0.0
      %1855 = vmatpush2.msra.mxu0 0.0
      %1856 = vmatprep.subr.mxu0 0.0
      %1857 = vmatpush2.msra.mxu0 0.0
      %1858 = vmatprep.subr.mxu0 0.0
      %1859 = vmatpush2.msra.mxu0 0.0
      %1860 = vmatprep.subr.mxu0 0.0
      %1861 = vmatpush2.msra.mxu0 0.0
      %1862 = vmatprep.subr.mxu0 0.0
      %1863 = vmatpush2.msra.mxu0 0.0
      %1864 = vmatprep.subr.mxu0 0.0
      %1865 = vmatpush2.msra.mxu0 0.0
      %1866 = vmatprep.subr.mxu0 0.0
      %1867 = vmatpush2.msra.mxu0 0.0
      %1868 = vmatprep.mubr.f32.mxu0 0.0
      %1869 = vmatmul.mubr.f32.gmra.mxu0 %v420
      %v1870 = vpop.f32.mrf.mxu0
      %v1871 = vadd.f32 0.0, %v1870
      %v1872 = vpop.f32.mrf.mxu0
      %1873 = vmatprep.mubr.f32.mxu0 0.0
      %1874 = vmatmul.mubr.f32.gmra.mxu0 %v423
      %v1875 = vpop.f32.mrf.mxu0
      %v1876 = vadd.f32 0.0, %v1875
      %v1877 = vpop.f32.mrf.mxu0
      %1878 = vmatprep.mubr.f32.mxu0 0.0
      %1879 = vmatmul.mubr.f32.gmra.mxu0 %v426
      %v1880 = vpop.f32.mrf.mxu0
      %v1881 = vadd.f32 0.0, %v1880
      %v1882 = vpop.f32.mrf.mxu0
      %1883 = vmatprep.mubr.f32.mxu0 0.0
      %1884 = vmatmul.mubr.f32.gmra.mxu0 %v429
      %v1885 = vpop.f32.mrf.mxu0
      %v1886 = vadd.f32 0.0, %v1885
      %v1887 = vpop.f32.mrf.mxu0
      %1888 = vmatprep.mubr.f32.mxu0 0.0
      %1889 = vmatmul.mubr.f32.gmra.mxu0 %v432
      %v1890 = vpop.f32.mrf.mxu0
      %v1891 = vadd.f32 0.0, %v1890
      %v1892 = vpop.f32.mrf.mxu0
      %1893 = vmatprep.mubr.f32.mxu0 0.0
      %1894 = vmatmul.mubr.f32.gmra.mxu0 %v435
      %v1895 = vpop.f32.mrf.mxu0
      %v1896 = vadd.f32 0.0, %v1895
      %v1897 = vpop.f32.mrf.mxu0
      %1898 = vmatprep.mubr.f32.mxu0 0.0
      %1899 = vmatmul.mubr.f32.gmra.mxu0 %v438
      %v1900 = vpop.f32.mrf.mxu0
      %v1901 = vadd.f32 0.0, %v1900
      %v1902 = vpop.f32.mrf.mxu0
      %1903 = vmatprep.mubr.f32.mxu0 0.0
      %1904 = vmatmul.mubr.f32.gmra.mxu0 %v441
      %v1905 = vpop.f32.mrf.mxu0
      %v1906 = vadd.f32 0.0, %v1905
      %v1907 = vpop.f32.mrf.mxu0
      %1908 = vmatprep.mubr.f32.mxu0 0.0
      %1909 = vmatmul.mubr.f32.gmra.mxu0 %v444
      %v1910 = vpop.f32.mrf.mxu0
      %v1911 = vadd.f32 0.0, %v1910
      %v1912 = vpop.f32.mrf.mxu0
      %1913 = vmatprep.mubr.f32.mxu0 0.0
      %1914 = vmatmul.mubr.f32.gmra.mxu0 %v447
      %v1915 = vpop.f32.mrf.mxu0
      %v1916 = vadd.f32 0.0, %v1915
      %v1917 = vpop.f32.mrf.mxu0
      %1918 = vmatprep.mubr.f32.mxu0 0.0
      %1919 = vmatmul.mubr.f32.gmra.mxu0 %v450
      %v1920 = vpop.f32.mrf.mxu0
      %v1921 = vadd.f32 0.0, %v1920
      %v1922 = vpop.f32.mrf.mxu0
      %1923 = vmatprep.mubr.f32.mxu0 0.0
      %1924 = vmatmul.mubr.f32.gmra.mxu0 %v453
      %v1925 = vpop.f32.mrf.mxu0
      %v1926 = vadd.f32 0.0, %v1925
      %v1927 = vpop.f32.mrf.mxu0
      %1928 = vmatprep.mubr.f32.mxu0 0.0
      %1929 = vmatmul.mubr.f32.gmra.mxu0 %v456
      %v1930 = vpop.f32.mrf.mxu0
      %v1931 = vadd.f32 0.0, %v1930
      %v1932 = vpop.f32.mrf.mxu0
      %1933 = vmatprep.mubr.f32.mxu0 0.0
      %1934 = vmatmul.mubr.f32.gmra.mxu0 %v459
      %v1935 = vpop.f32.mrf.mxu0
      %v1936 = vadd.f32 0.0, %v1935
      %v1937 = vpop.f32.mrf.mxu0
      %1938 = vmatprep.mubr.f32.mxu0 0.0
      %1939 = vmatmul.mubr.f32.gmra.mxu0 %v462
      %v1940 = vpop.f32.mrf.mxu0
      %v1941 = vadd.f32 0.0, %v1940
      %v1942 = vpop.f32.mrf.mxu0
      %1943 = vmatprep.mubr.f32.mxu0 0.0
      %1944 = vmatmul.mubr.f32.gmra.mxu0 %v465
      %v1945 = vpop.f32.mrf.mxu0
      %v1946 = vadd.f32 0.0, %v1945
      %v1947 = vpop.f32.mrf.mxu0
      %1948 = vmatprep.mubr.f32.mxu0 0.0
      %1949 = vmatmul.mubr.f32.gmra.mxu0 %v468
      %v1950 = vpop.f32.mrf.mxu0
      %v1951 = vadd.f32 0.0, %v1950
      %v1952 = vpop.f32.mrf.mxu0
      %1953 = vmatprep.mubr.f32.mxu0 0.0
      %1954 = vmatmul.mubr.f32.gmra.mxu0 %v471
      %v1955 = vpop.f32.mrf.mxu0
      %v1956 = vadd.f32 0.0, %v1955
      %v1957 = vpop.f32.mrf.mxu0
      %1958 = vmatprep.mubr.f32.mxu0 0.0
      %1959 = vmatmul.mubr.f32.gmra.mxu0 %v474
      %v1960 = vpop.f32.mrf.mxu0
      %v1961 = vadd.f32 0.0, %v1960
      %v1962 = vpop.f32.mrf.mxu0
      %1963 = vmatprep.mubr.f32.mxu0 0.0
      %1964 = vmatmul.mubr.f32.gmra.mxu0 %v477
      %v1965 = vpop.f32.mrf.mxu0
      %v1966 = vadd.f32 0.0, %v1965
      %v1967 = vpop.f32.mrf.mxu0
      %1968 = vmatprep.mubr.f32.mxu0 0.0
      %1969 = vmatmul.mubr.f32.gmra.mxu0 %v480
      %v1970 = vpop.f32.mrf.mxu0
      %v1971 = vadd.f32 0.0, %v1970
      %v1972 = vpop.f32.mrf.mxu0
      %1973 = vmatprep.mubr.f32.mxu0 0.0
      %1974 = vmatmul.mubr.f32.gmra.mxu0 %v483
      %v1975 = vpop.f32.mrf.mxu0
      %v1976 = vadd.f32 0.0, %v1975
      %v1977 = vpop.f32.mrf.mxu0
      %1978 = vmatprep.mubr.f32.mxu0 0.0
      %1979 = vmatmul.mubr.f32.gmra.mxu0 %v486
      %v1980 = vpop.f32.mrf.mxu0
      %v1981 = vadd.f32 0.0, %v1980
      %v1982 = vpop.f32.mrf.mxu0
      %1983 = vmatprep.mubr.f32.mxu0 0.0
      %1984 = vmatmul.mubr.f32.gmra.mxu0 %v489
      %v1985 = vpop.f32.mrf.mxu0
      %v1986 = vadd.f32 0.0, %v1985
      %v1987 = vpop.f32.mrf.mxu0
      %1988 = vmatprep.mubr.f32.mxu0 0.0
      %1989 = vmatmul.mubr.f32.gmra.mxu0 %v492
      %v1990 = vpop.f32.mrf.mxu0
      %v1991 = vadd.f32 0.0, %v1990
      %v1992 = vpop.f32.mrf.mxu0
      %1993 = vmatprep.mubr.f32.mxu0 0.0
      %1994 = vmatmul.mubr.f32.gmra.mxu0 %v495
      %v1995 = vpop.f32.mrf.mxu0
      %v1996 = vadd.f32 0.0, %v1995
      %v1997 = vpop.f32.mrf.mxu0
      %1998 = vmatprep.mubr.f32.mxu0 0.0
      %1999 = vmatmul.mubr.f32.gmra.mxu0 %v498
      %v2000 = vpop.f32.mrf.mxu0
      %v2001 = vadd.f32 0.0, %v2000
      %v2002 = vpop.f32.mrf.mxu0
      %2003 = vmatprep.mubr.f32.mxu0 0.0
      %2004 = vmatmul.mubr.f32.gmra.mxu0 %v501
      %v2005 = vpop.f32.mrf.mxu0
      %v2006 = vadd.f32 0.0, %v2005
      %v2007 = vpop.f32.mrf.mxu0
      %2008 = vmatprep.mubr.f32.mxu0 0.0
      %2009 = vmatmul.mubr.f32.gmra.mxu0 %v504
      %v2010 = vpop.f32.mrf.mxu0
      %v2011 = vadd.f32 0.0, %v2010
      %v2012 = vpop.f32.mrf.mxu0
      %2013 = vmatprep.mubr.f32.mxu0 0.0
      %2014 = vmatmul.mubr.f32.gmra.mxu0 %v507
      %v2015 = vpop.f32.mrf.mxu0
      %v2016 = vadd.f32 0.0, %v2015
      %v2017 = vpop.f32.mrf.mxu0
      %2018 = vmatprep.mubr.f32.mxu0 0.0
      %2019 = vmatmul.mubr.f32.gmra.mxu0 %v1796
      %v2020 = vpop.f32.mrf.mxu0
      %v2021 = vadd.f32 0.0, %v2020
      %v2022 = vpop.f32.mrf.mxu0
      %2023 = vmatprep.mubr.f32.mxu0 0.0
      %2024 = vmatmul.mubr.f32.gmra.mxu0 %v1799
      %v2025 = vpop.f32.mrf.mxu0
      %v2026 = vadd.f32 0.0, %v2025
      %v2027 = vpop.f32.mrf.mxu0
      %2028 = vdwg.mxu0
      %v2029 = vadd.f32 %v1761, %v1871
      %v2030 = vadd.f32 %v1762, %v1876
      %v2031 = vadd.f32 %v1763, %v1881
      %v2032 = vadd.f32 %v1764, %v1886
      %v2033 = vadd.f32 %v1765, %v1891
      %v2034 = vadd.f32 %v1766, %v1896
      %v2035 = vadd.f32 %v1767, %v1901
      %v2036 = vadd.f32 %v1768, %v1906
      %v2037 = vadd.f32 %v1769, %v1911
      %v2038 = vadd.f32 %v1770, %v1916
      %v2039 = vadd.f32 %v1771, %v1921
      %v2040 = vadd.f32 %v1772, %v1926
      %v2041 = vadd.f32 %v1773, %v1931
      %v2042 = vadd.f32 %v1774, %v1936
      %v2043 = vadd.f32 %v1775, %v1941
      %v2044 = vadd.f32 %v1776, %v1946
      %v2045 = vadd.f32 %v1777, %v1951
      %v2046 = vadd.f32 %v1778, %v1956
      %v2047 = vadd.f32 %v1779, %v1961
      %v2048 = vadd.f32 %v1780, %v1966
      %v2049 = vadd.f32 %v1781, %v1971
      %v2050 = vadd.f32 %v1782, %v1976
      %v2051 = vadd.f32 %v1783, %v1981
      %v2052 = vadd.f32 %v1784, %v1986
      %v2053 = vadd.f32 %v1785, %v1991
      %v2054 = vadd.f32 %v1786, %v1996
      %v2055 = vadd.f32 %v1787, %v2001
      %v2056 = vadd.f32 %v1788, %v2006
      %v2057 = vadd.f32 %v1789, %v2011
      %v2058 = vadd.f32 %v1790, %v2016
      %v2059 = vadd.f32 %v1791, %v2021
      %v2060 = vadd.f32 %v1792, %v2026
      %v2061 = vrot.slane %v316, 1
      %v2062 = vrot.slane %v317, 1
      %v2063 = vsel %vm1092, %v2061, %v2062
      %v2064 = vsel %vm1092, %v1091, %v2061
      %v2065 = vsel %vm1092, %v2062, %v1062
      %v2066 = vsel %vm285, %v2064, 0.0
      %v2067 = vsel %vm284, %v2063, 0.0
      %v2068 = vsel %vm285, %v2065, 0.0
      %s2069 = scalar_lea.vmem %s1, 20
      %v2070 = vld [vmem:[%s2069] sm:$0xf]
      %v2072 = vsel %vm415, %v2066, 0
      %v2075 = vsel %vm415, %v2067, 0
      %v2078 = vsel %vm415, %v2068, 0
      %v2081 = vsel %vm509, %v2070, 0
      %2083 = vmatprep.subr.mxu0 0.0
      %2084 = vmatpush1.msra.mxu0 0.0
      %2085 = vmatprep.subr.mxu0 0.0
      %2086 = vmatpush1.msra.mxu0 0.0
      %2087 = vmatprep.subr.mxu0 0.0
      %2088 = vmatpush1.msra.mxu0 0.0
      %2089 = vmatprep.subr.mxu0 0.0
      %2090 = vmatpush1.msra.mxu0 0.0
      %2091 = vmatprep.subr.mxu0 0.0
      %2092 = vmatpush1.msra.mxu0 0.0
      %2093 = vmatprep.subr.mxu0 0.0
      %2094 = vmatpush1.msra.mxu0 0.0
      %2095 = vmatprep.subr.mxu0 0.0
      %2096 = vmatpush1.msra.mxu0 0.0
      %2097 = vmatprep.subr.mxu0 0.0
      %2098 = vmatpush1.msra.mxu0 0.0
      %2099 = vmatprep.subr.mxu0 0.0
      %2100 = vmatpush1.msra.mxu0 0.0
      %2101 = vmatprep.subr.mxu0 0.0
      %2102 = vmatpush1.msra.mxu0 0.0
      %2103 = vmatprep.subr.mxu0 0.0
      %2104 = vmatpush1.msra.mxu0 0.0
      %2105 = vmatprep.subr.mxu0 0.0
      %2106 = vmatpush1.msra.mxu0 0.0
      %2107 = vmatprep.subr.mxu0 0.0
      %2108 = vmatpush1.msra.mxu0 0.0
      %2109 = vmatprep.subr.mxu0 0.0
      %2110 = vmatpush1.msra.mxu0 0.0
      %2111 = vmatprep.subr.mxu0 0.0
      %2112 = vmatpush1.msra.mxu0 0.0
      %2113 = vmatprep.subr.mxu0 0.0
      %2114 = vmatpush1.msra.mxu0 %v2081
      %2115 = vmatprep.subr.mxu0 0.0
      %2116 = vmatpush2.msra.mxu0 0.0
      %2117 = vmatprep.subr.mxu0 0.0
      %2118 = vmatpush2.msra.mxu0 0.0
      %2119 = vmatprep.subr.mxu0 0.0
      %2120 = vmatpush2.msra.mxu0 0.0
      %2121 = vmatprep.subr.mxu0 0.0
      %2122 = vmatpush2.msra.mxu0 0.0
      %2123 = vmatprep.subr.mxu0 0.0
      %2124 = vmatpush2.msra.mxu0 0.0
      %2125 = vmatprep.subr.mxu0 0.0
      %2126 = vmatpush2.msra.mxu0 0.0
      %2127 = vmatprep.subr.mxu0 0.0
      %2128 = vmatpush2.msra.mxu0 0.0
      %2129 = vmatprep.subr.mxu0 0.0
      %2130 = vmatpush2.msra.mxu0 0.0
      %2131 = vmatprep.subr.mxu0 0.0
      %2132 = vmatpush2.msra.mxu0 0.0
      %2133 = vmatprep.subr.mxu0 0.0
      %2134 = vmatpush2.msra.mxu0 0.0
      %2135 = vmatprep.subr.mxu0 0.0
      %2136 = vmatpush2.msra.mxu0 0.0
      %2137 = vmatprep.subr.mxu0 0.0
      %2138 = vmatpush2.msra.mxu0 0.0
      %2139 = vmatprep.subr.mxu0 0.0
      %2140 = vmatpush2.msra.mxu0 0.0
      %2141 = vmatprep.subr.mxu0 0.0
      %2142 = vmatpush2.msra.mxu0 0.0
      %2143 = vmatprep.subr.mxu0 0.0
      %2144 = vmatpush2.msra.mxu0 0.0
      %2145 = vmatprep.subr.mxu0 0.0
      %2146 = vmatpush2.msra.mxu0 0.0
      %2147 = vmatprep.mubr.f32.mxu0 0.0
      %2148 = vmatmul.mubr.f32.gmra.mxu0 %v1165
      %v2149 = vpop.f32.mrf.mxu0
      %v2150 = vadd.f32 0.0, %v2149
      %v2151 = vpop.f32.mrf.mxu0
      %2152 = vmatprep.mubr.f32.mxu0 0.0
      %2153 = vmatmul.mubr.f32.gmra.mxu0 %v1168
      %v2154 = vpop.f32.mrf.mxu0
      %v2155 = vadd.f32 0.0, %v2154
      %v2156 = vpop.f32.mrf.mxu0
      %2157 = vmatprep.mubr.f32.mxu0 0.0
      %2158 = vmatmul.mubr.f32.gmra.mxu0 %v1171
      %v2159 = vpop.f32.mrf.mxu0
      %v2160 = vadd.f32 0.0, %v2159
      %v2161 = vpop.f32.mrf.mxu0
      %2162 = vmatprep.mubr.f32.mxu0 0.0
      %2163 = vmatmul.mubr.f32.gmra.mxu0 %v1174
      %v2164 = vpop.f32.mrf.mxu0
      %v2165 = vadd.f32 0.0, %v2164
      %v2166 = vpop.f32.mrf.mxu0
      %2167 = vmatprep.mubr.f32.mxu0 0.0
      %2168 = vmatmul.mubr.f32.gmra.mxu0 %v1177
      %v2169 = vpop.f32.mrf.mxu0
      %v2170 = vadd.f32 0.0, %v2169
      %v2171 = vpop.f32.mrf.mxu0
      %2172 = vmatprep.mubr.f32.mxu0 0.0
      %2173 = vmatmul.mubr.f32.gmra.mxu0 %v1180
      %v2174 = vpop.f32.mrf.mxu0
      %v2175 = vadd.f32 0.0, %v2174
      %v2176 = vpop.f32.mrf.mxu0
      %2177 = vmatprep.mubr.f32.mxu0 0.0
      %2178 = vmatmul.mubr.f32.gmra.mxu0 %v1183
      %v2179 = vpop.f32.mrf.mxu0
      %v2180 = vadd.f32 0.0, %v2179
      %v2181 = vpop.f32.mrf.mxu0
      %2182 = vmatprep.mubr.f32.mxu0 0.0
      %2183 = vmatmul.mubr.f32.gmra.mxu0 %v1186
      %v2184 = vpop.f32.mrf.mxu0
      %v2185 = vadd.f32 0.0, %v2184
      %v2186 = vpop.f32.mrf.mxu0
      %2187 = vmatprep.mubr.f32.mxu0 0.0
      %2188 = vmatmul.mubr.f32.gmra.mxu0 %v1189
      %v2189 = vpop.f32.mrf.mxu0
      %v2190 = vadd.f32 0.0, %v2189
      %v2191 = vpop.f32.mrf.mxu0
      %2192 = vmatprep.mubr.f32.mxu0 0.0
      %2193 = vmatmul.mubr.f32.gmra.mxu0 %v1192
      %v2194 = vpop.f32.mrf.mxu0
      %v2195 = vadd.f32 0.0, %v2194
      %v2196 = vpop.f32.mrf.mxu0
      %2197 = vmatprep.mubr.f32.mxu0 0.0
      %2198 = vmatmul.mubr.f32.gmra.mxu0 %v1195
      %v2199 = vpop.f32.mrf.mxu0
      %v2200 = vadd.f32 0.0, %v2199
      %v2201 = vpop.f32.mrf.mxu0
      %2202 = vmatprep.mubr.f32.mxu0 0.0
      %2203 = vmatmul.mubr.f32.gmra.mxu0 %v1198
      %v2204 = vpop.f32.mrf.mxu0
      %v2205 = vadd.f32 0.0, %v2204
      %v2206 = vpop.f32.mrf.mxu0
      %2207 = vmatprep.mubr.f32.mxu0 0.0
      %2208 = vmatmul.mubr.f32.gmra.mxu0 %v1201
      %v2209 = vpop.f32.mrf.mxu0
      %v2210 = vadd.f32 0.0, %v2209
      %v2211 = vpop.f32.mrf.mxu0
      %2212 = vmatprep.mubr.f32.mxu0 0.0
      %2213 = vmatmul.mubr.f32.gmra.mxu0 %v1204
      %v2214 = vpop.f32.mrf.mxu0
      %v2215 = vadd.f32 0.0, %v2214
      %v2216 = vpop.f32.mrf.mxu0
      %2217 = vmatprep.mubr.f32.mxu0 0.0
      %2218 = vmatmul.mubr.f32.gmra.mxu0 %v1207
      %v2219 = vpop.f32.mrf.mxu0
      %v2220 = vadd.f32 0.0, %v2219
      %v2221 = vpop.f32.mrf.mxu0
      %2222 = vmatprep.mubr.f32.mxu0 0.0
      %2223 = vmatmul.mubr.f32.gmra.mxu0 %v1210
      %v2224 = vpop.f32.mrf.mxu0
      %v2225 = vadd.f32 0.0, %v2224
      %v2226 = vpop.f32.mrf.mxu0
      %2227 = vmatprep.mubr.f32.mxu0 0.0
      %2228 = vmatmul.mubr.f32.gmra.mxu0 %v1213
      %v2229 = vpop.f32.mrf.mxu0
      %v2230 = vadd.f32 0.0, %v2229
      %v2231 = vpop.f32.mrf.mxu0
      %2232 = vmatprep.mubr.f32.mxu0 0.0
      %2233 = vmatmul.mubr.f32.gmra.mxu0 %v1216
      %v2234 = vpop.f32.mrf.mxu0
      %v2235 = vadd.f32 0.0, %v2234
      %v2236 = vpop.f32.mrf.mxu0
      %2237 = vmatprep.mubr.f32.mxu0 0.0
      %2238 = vmatmul.mubr.f32.gmra.mxu0 %v1219
      %v2239 = vpop.f32.mrf.mxu0
      %v2240 = vadd.f32 0.0, %v2239
      %v2241 = vpop.f32.mrf.mxu0
      %2242 = vmatprep.mubr.f32.mxu0 0.0
      %2243 = vmatmul.mubr.f32.gmra.mxu0 %v1222
      %v2244 = vpop.f32.mrf.mxu0
      %v2245 = vadd.f32 0.0, %v2244
      %v2246 = vpop.f32.mrf.mxu0
      %2247 = vmatprep.mubr.f32.mxu0 0.0
      %2248 = vmatmul.mubr.f32.gmra.mxu0 %v1225
      %v2249 = vpop.f32.mrf.mxu0
      %v2250 = vadd.f32 0.0, %v2249
      %v2251 = vpop.f32.mrf.mxu0
      %2252 = vmatprep.mubr.f32.mxu0 0.0
      %2253 = vmatmul.mubr.f32.gmra.mxu0 %v1228
      %v2254 = vpop.f32.mrf.mxu0
      %v2255 = vadd.f32 0.0, %v2254
      %v2256 = vpop.f32.mrf.mxu0
      %2257 = vmatprep.mubr.f32.mxu0 0.0
      %2258 = vmatmul.mubr.f32.gmra.mxu0 %v1231
      %v2259 = vpop.f32.mrf.mxu0
      %v2260 = vadd.f32 0.0, %v2259
      %v2261 = vpop.f32.mrf.mxu0
      %2262 = vmatprep.mubr.f32.mxu0 0.0
      %2263 = vmatmul.mubr.f32.gmra.mxu0 %v1234
      %v2264 = vpop.f32.mrf.mxu0
      %v2265 = vadd.f32 0.0, %v2264
      %v2266 = vpop.f32.mrf.mxu0
      %2267 = vmatprep.mubr.f32.mxu0 0.0
      %2268 = vmatmul.mubr.f32.gmra.mxu0 %v1237
      %v2269 = vpop.f32.mrf.mxu0
      %v2270 = vadd.f32 0.0, %v2269
      %v2271 = vpop.f32.mrf.mxu0
      %2272 = vmatprep.mubr.f32.mxu0 0.0
      %2273 = vmatmul.mubr.f32.gmra.mxu0 %v1240
      %v2274 = vpop.f32.mrf.mxu0
      %v2275 = vadd.f32 0.0, %v2274
      %v2276 = vpop.f32.mrf.mxu0
      %2277 = vmatprep.mubr.f32.mxu0 0.0
      %2278 = vmatmul.mubr.f32.gmra.mxu0 %v1243
      %v2279 = vpop.f32.mrf.mxu0
      %v2280 = vadd.f32 0.0, %v2279
      %v2281 = vpop.f32.mrf.mxu0
      %2282 = vmatprep.mubr.f32.mxu0 0.0
      %2283 = vmatmul.mubr.f32.gmra.mxu0 %v1246
      %v2284 = vpop.f32.mrf.mxu0
      %v2285 = vadd.f32 0.0, %v2284
      %v2286 = vpop.f32.mrf.mxu0
      %2287 = vmatprep.mubr.f32.mxu0 0.0
      %2288 = vmatmul.mubr.f32.gmra.mxu0 %v1249
      %v2289 = vpop.f32.mrf.mxu0
      %v2290 = vadd.f32 0.0, %v2289
      %v2291 = vpop.f32.mrf.mxu0
      %2292 = vmatprep.mubr.f32.mxu0 0.0
      %2293 = vmatmul.mubr.f32.gmra.mxu0 %v2072
      %v2294 = vpop.f32.mrf.mxu0
      %v2295 = vadd.f32 0.0, %v2294
      %v2296 = vpop.f32.mrf.mxu0
      %2297 = vmatprep.mubr.f32.mxu0 0.0
      %2298 = vmatmul.mubr.f32.gmra.mxu0 %v2075
      %v2299 = vpop.f32.mrf.mxu0
      %v2300 = vadd.f32 0.0, %v2299
      %v2301 = vpop.f32.mrf.mxu0
      %2302 = vmatprep.mubr.f32.mxu0 0.0
      %2303 = vmatmul.mubr.f32.gmra.mxu0 %v2078
      %v2304 = vpop.f32.mrf.mxu0
      %v2305 = vadd.f32 0.0, %v2304
      %v2306 = vpop.f32.mrf.mxu0
      %2307 = vdwg.mxu0
      %v2308 = vadd.f32 %v2029, %v2150
      %v2309 = vadd.f32 %v2030, %v2155
      %v2310 = vadd.f32 %v2031, %v2160
      %v2311 = vadd.f32 %v2032, %v2165
      %v2312 = vadd.f32 %v2033, %v2170
      %v2313 = vadd.f32 %v2034, %v2175
      %v2314 = vadd.f32 %v2035, %v2180
      %v2315 = vadd.f32 %v2036, %v2185
      %v2316 = vadd.f32 %v2037, %v2190
      %v2317 = vadd.f32 %v2038, %v2195
      %v2318 = vadd.f32 %v2039, %v2200
      %v2319 = vadd.f32 %v2040, %v2205
      %v2320 = vadd.f32 %v2041, %v2210
      %v2321 = vadd.f32 %v2042, %v2215
      %v2322 = vadd.f32 %v2043, %v2220
      %v2323 = vadd.f32 %v2044, %v2225
      %v2324 = vadd.f32 %v2045, %v2230
      %v2325 = vadd.f32 %v2046, %v2235
      %v2326 = vadd.f32 %v2047, %v2240
      %v2327 = vadd.f32 %v2048, %v2245
      %v2328 = vadd.f32 %v2049, %v2250
      %v2329 = vadd.f32 %v2050, %v2255
      %v2330 = vadd.f32 %v2051, %v2260
      %v2331 = vadd.f32 %v2052, %v2265
      %v2332 = vadd.f32 %v2053, %v2270
      %v2333 = vadd.f32 %v2054, %v2275
      %v2334 = vadd.f32 %v2055, %v2280
      %v2335 = vadd.f32 %v2056, %v2285
      %v2336 = vadd.f32 %v2057, %v2290
      %v2337 = vadd.f32 %v2058, %v2295
      %v2338 = vadd.f32 %v2059, %v2300
      %v2339 = vadd.f32 %v2060, %v2305
      %v2340 = vsel %vm348, %v1515, 0.0
      %v2341 = vsel %vm348, 0.0, %v320
      %v2342 = vsel %vm282, %v2341, 0.0
      %v2343 = vsel %vm282, %v2340, 0.0
      %s2344 = scalar_lea.vmem %s1, 24
      %v2345 = vld [vmem:[%s2344] sm:$0xf]
      %v2347 = vsel %vm415, %v2342, 0
      %v2350 = vsel %vm415, %v2343, 0
      %v2353 = vsel %vm509, %v2345, 0
      %2355 = vmatprep.subr.mxu0 0.0
      %2356 = vmatpush1.msra.mxu0 0.0
      %2357 = vmatprep.subr.mxu0 0.0
      %2358 = vmatpush1.msra.mxu0 0.0
      %2359 = vmatprep.subr.mxu0 0.0
      %2360 = vmatpush1.msra.mxu0 0.0
      %2361 = vmatprep.subr.mxu0 0.0
      %2362 = vmatpush1.msra.mxu0 0.0
      %2363 = vmatprep.subr.mxu0 0.0
      %2364 = vmatpush1.msra.mxu0 0.0
      %2365 = vmatprep.subr.mxu0 0.0
      %2366 = vmatpush1.msra.mxu0 0.0
      %2367 = vmatprep.subr.mxu0 0.0
      %2368 = vmatpush1.msra.mxu0 0.0
      %2369 = vmatprep.subr.mxu0 0.0
      %2370 = vmatpush1.msra.mxu0 0.0
      %2371 = vmatprep.subr.mxu0 0.0
      %2372 = vmatpush1.msra.mxu0 0.0
      %2373 = vmatprep.subr.mxu0 0.0
      %2374 = vmatpush1.msra.mxu0 0.0
      %2375 = vmatprep.subr.mxu0 0.0
      %2376 = vmatpush1.msra.mxu0 0.0
      %2377 = vmatprep.subr.mxu0 0.0
      %2378 = vmatpush1.msra.mxu0 0.0
      %2379 = vmatprep.subr.mxu0 0.0
      %2380 = vmatpush1.msra.mxu0 0.0
      %2381 = vmatprep.subr.mxu0 0.0
      %2382 = vmatpush1.msra.mxu0 0.0
      %2383 = vmatprep.subr.mxu0 0.0
      %2384 = vmatpush1.msra.mxu0 0.0
      %2385 = vmatprep.subr.mxu0 0.0
      %2386 = vmatpush1.msra.mxu0 %v2353
      %2387 = vmatprep.subr.mxu0 0.0
      %2388 = vmatpush2.msra.mxu0 0.0
      %2389 = vmatprep.subr.mxu0 0.0
      %2390 = vmatpush2.msra.mxu0 0.0
      %2391 = vmatprep.subr.mxu0 0.0
      %2392 = vmatpush2.msra.mxu0 0.0
      %2393 = vmatprep.subr.mxu0 0.0
      %2394 = vmatpush2.msra.mxu0 0.0
      %2395 = vmatprep.subr.mxu0 0.0
      %2396 = vmatpush2.msra.mxu0 0.0
      %2397 = vmatprep.subr.mxu0 0.0
      %2398 = vmatpush2.msra.mxu0 0.0
      %2399 = vmatprep.subr.mxu0 0.0
      %2400 = vmatpush2.msra.mxu0 0.0
      %2401 = vmatprep.subr.mxu0 0.0
      %2402 = vmatpush2.msra.mxu0 0.0
      %2403 = vmatprep.subr.mxu0 0.0
      %2404 = vmatpush2.msra.mxu0 0.0
      %2405 = vmatprep.subr.mxu0 0.0
      %2406 = vmatpush2.msra.mxu0 0.0
      %2407 = vmatprep.subr.mxu0 0.0
      %2408 = vmatpush2.msra.mxu0 0.0
      %2409 = vmatprep.subr.mxu0 0.0
      %2410 = vmatpush2.msra.mxu0 0.0
      %2411 = vmatprep.subr.mxu0 0.0
      %2412 = vmatpush2.msra.mxu0 0.0
      %2413 = vmatprep.subr.mxu0 0.0
      %2414 = vmatpush2.msra.mxu0 0.0
      %2415 = vmatprep.subr.mxu0 0.0
      %2416 = vmatpush2.msra.mxu0 0.0
      %2417 = vmatprep.subr.mxu0 0.0
      %2418 = vmatpush2.msra.mxu0 0.0
      %2419 = vmatprep.mubr.f32.mxu0 0.0
      %2420 = vmatmul.mubr.f32.gmra.mxu0 %v2347
      %v2421 = vpop.f32.mrf.mxu0
      %v2422 = vadd.f32 0.0, %v2421
      %v2423 = vpop.f32.mrf.mxu0
      %2424 = vmatprep.mubr.f32.mxu0 0.0
      %2425 = vmatmul.mubr.f32.gmra.mxu0 %v754
      %v2426 = vpop.f32.mrf.mxu0
      %v2427 = vadd.f32 0.0, %v2426
      %v2428 = vpop.f32.mrf.mxu0
      %2429 = vmatprep.mubr.f32.mxu0 0.0
      %2430 = vmatmul.mubr.f32.gmra.mxu0 %v757
      %v2431 = vpop.f32.mrf.mxu0
      %v2432 = vadd.f32 0.0, %v2431
      %v2433 = vpop.f32.mrf.mxu0
      %2434 = vmatprep.mubr.f32.mxu0 0.0
      %2435 = vmatmul.mubr.f32.gmra.mxu0 %v760
      %v2436 = vpop.f32.mrf.mxu0
      %v2437 = vadd.f32 0.0, %v2436
      %v2438 = vpop.f32.mrf.mxu0
      %2439 = vmatprep.mubr.f32.mxu0 0.0
      %2440 = vmatmul.mubr.f32.gmra.mxu0 %v763
      %v2441 = vpop.f32.mrf.mxu0
      %v2442 = vadd.f32 0.0, %v2441
      %v2443 = vpop.f32.mrf.mxu0
      %2444 = vmatprep.mubr.f32.mxu0 0.0
      %2445 = vmatmul.mubr.f32.gmra.mxu0 %v766
      %v2446 = vpop.f32.mrf.mxu0
      %v2447 = vadd.f32 0.0, %v2446
      %v2448 = vpop.f32.mrf.mxu0
      %2449 = vmatprep.mubr.f32.mxu0 0.0
      %2450 = vmatmul.mubr.f32.gmra.mxu0 %v769
      %v2451 = vpop.f32.mrf.mxu0
      %v2452 = vadd.f32 0.0, %v2451
      %v2453 = vpop.f32.mrf.mxu0
      %2454 = vmatprep.mubr.f32.mxu0 0.0
      %2455 = vmatmul.mubr.f32.gmra.mxu0 %v772
      %v2456 = vpop.f32.mrf.mxu0
      %v2457 = vadd.f32 0.0, %v2456
      %v2458 = vpop.f32.mrf.mxu0
      %2459 = vmatprep.mubr.f32.mxu0 0.0
      %2460 = vmatmul.mubr.f32.gmra.mxu0 %v775
      %v2461 = vpop.f32.mrf.mxu0
      %v2462 = vadd.f32 0.0, %v2461
      %v2463 = vpop.f32.mrf.mxu0
      %2464 = vmatprep.mubr.f32.mxu0 0.0
      %2465 = vmatmul.mubr.f32.gmra.mxu0 %v778
      %v2466 = vpop.f32.mrf.mxu0
      %v2467 = vadd.f32 0.0, %v2466
      %v2468 = vpop.f32.mrf.mxu0
      %2469 = vmatprep.mubr.f32.mxu0 0.0
      %2470 = vmatmul.mubr.f32.gmra.mxu0 %v781
      %v2471 = vpop.f32.mrf.mxu0
      %v2472 = vadd.f32 0.0, %v2471
      %v2473 = vpop.f32.mrf.mxu0
      %2474 = vmatprep.mubr.f32.mxu0 0.0
      %2475 = vmatmul.mubr.f32.gmra.mxu0 %v784
      %v2476 = vpop.f32.mrf.mxu0
      %v2477 = vadd.f32 0.0, %v2476
      %v2478 = vpop.f32.mrf.mxu0
      %2479 = vmatprep.mubr.f32.mxu0 0.0
      %2480 = vmatmul.mubr.f32.gmra.mxu0 %v787
      %v2481 = vpop.f32.mrf.mxu0
      %v2482 = vadd.f32 0.0, %v2481
      %v2483 = vpop.f32.mrf.mxu0
      %2484 = vmatprep.mubr.f32.mxu0 0.0
      %2485 = vmatmul.mubr.f32.gmra.mxu0 %v790
      %v2486 = vpop.f32.mrf.mxu0
      %v2487 = vadd.f32 0.0, %v2486
      %v2488 = vpop.f32.mrf.mxu0
      %2489 = vmatprep.mubr.f32.mxu0 0.0
      %2490 = vmatmul.mubr.f32.gmra.mxu0 %v793
      %v2491 = vpop.f32.mrf.mxu0
      %v2492 = vadd.f32 0.0, %v2491
      %v2493 = vpop.f32.mrf.mxu0
      %2494 = vmatprep.mubr.f32.mxu0 0.0
      %2495 = vmatmul.mubr.f32.gmra.mxu0 %v796
      %v2496 = vpop.f32.mrf.mxu0
      %v2497 = vadd.f32 0.0, %v2496
      %v2498 = vpop.f32.mrf.mxu0
      %2499 = vmatprep.mubr.f32.mxu0 0.0
      %2500 = vmatmul.mubr.f32.gmra.mxu0 %v799
      %v2501 = vpop.f32.mrf.mxu0
      %v2502 = vadd.f32 0.0, %v2501
      %v2503 = vpop.f32.mrf.mxu0
      %2504 = vmatprep.mubr.f32.mxu0 0.0
      %2505 = vmatmul.mubr.f32.gmra.mxu0 %v802
      %v2506 = vpop.f32.mrf.mxu0
      %v2507 = vadd.f32 0.0, %v2506
      %v2508 = vpop.f32.mrf.mxu0
      %2509 = vmatprep.mubr.f32.mxu0 0.0
      %2510 = vmatmul.mubr.f32.gmra.mxu0 %v805
      %v2511 = vpop.f32.mrf.mxu0
      %v2512 = vadd.f32 0.0, %v2511
      %v2513 = vpop.f32.mrf.mxu0
      %2514 = vmatprep.mubr.f32.mxu0 0.0
      %2515 = vmatmul.mubr.f32.gmra.mxu0 %v808
      %v2516 = vpop.f32.mrf.mxu0
      %v2517 = vadd.f32 0.0, %v2516
      %v2518 = vpop.f32.mrf.mxu0
      %2519 = vmatprep.mubr.f32.mxu0 0.0
      %2520 = vmatmul.mubr.f32.gmra.mxu0 %v811
      %v2521 = vpop.f32.mrf.mxu0
      %v2522 = vadd.f32 0.0, %v2521
      %v2523 = vpop.f32.mrf.mxu0
      %2524 = vmatprep.mubr.f32.mxu0 0.0
      %2525 = vmatmul.mubr.f32.gmra.mxu0 %v814
      %v2526 = vpop.f32.mrf.mxu0
      %v2527 = vadd.f32 0.0, %v2526
      %v2528 = vpop.f32.mrf.mxu0
      %2529 = vmatprep.mubr.f32.mxu0 0.0
      %2530 = vmatmul.mubr.f32.gmra.mxu0 %v817
      %v2531 = vpop.f32.mrf.mxu0
      %v2532 = vadd.f32 0.0, %v2531
      %v2533 = vpop.f32.mrf.mxu0
      %2534 = vmatprep.mubr.f32.mxu0 0.0
      %2535 = vmatmul.mubr.f32.gmra.mxu0 %v820
      %v2536 = vpop.f32.mrf.mxu0
      %v2537 = vadd.f32 0.0, %v2536
      %v2538 = vpop.f32.mrf.mxu0
      %2539 = vmatprep.mubr.f32.mxu0 0.0
      %2540 = vmatmul.mubr.f32.gmra.mxu0 %v823
      %v2541 = vpop.f32.mrf.mxu0
      %v2542 = vadd.f32 0.0, %v2541
      %v2543 = vpop.f32.mrf.mxu0
      %2544 = vmatprep.mubr.f32.mxu0 0.0
      %2545 = vmatmul.mubr.f32.gmra.mxu0 %v826
      %v2546 = vpop.f32.mrf.mxu0
      %v2547 = vadd.f32 0.0, %v2546
      %v2548 = vpop.f32.mrf.mxu0
      %2549 = vmatprep.mubr.f32.mxu0 0.0
      %2550 = vmatmul.mubr.f32.gmra.mxu0 %v829
      %v2551 = vpop.f32.mrf.mxu0
      %v2552 = vadd.f32 0.0, %v2551
      %v2553 = vpop.f32.mrf.mxu0
      %2554 = vmatprep.mubr.f32.mxu0 0.0
      %2555 = vmatmul.mubr.f32.gmra.mxu0 %v832
      %v2556 = vpop.f32.mrf.mxu0
      %v2557 = vadd.f32 0.0, %v2556
      %v2558 = vpop.f32.mrf.mxu0
      %2559 = vmatprep.mubr.f32.mxu0 0.0
      %2560 = vmatmul.mubr.f32.gmra.mxu0 %v1528
      %v2561 = vpop.f32.mrf.mxu0
      %v2562 = vadd.f32 0.0, %v2561
      %v2563 = vpop.f32.mrf.mxu0
      %2564 = vmatprep.mubr.f32.mxu0 0.0
      %2565 = vmatmul.mubr.f32.gmra.mxu0 %v1531
      %v2566 = vpop.f32.mrf.mxu0
      %v2567 = vadd.f32 0.0, %v2566
      %v2568 = vpop.f32.mrf.mxu0
      %2569 = vmatprep.mubr.f32.mxu0 0.0
      %2570 = vmatmul.mubr.f32.gmra.mxu0 %v2350
      %v2571 = vpop.f32.mrf.mxu0
      %v2572 = vadd.f32 0.0, %v2571
      %v2573 = vpop.f32.mrf.mxu0
      %2574 = vmatprep.mubr.f32.mxu0 0.0
      %2575 = vmatmul.mubr.f32.gmra.mxu0 %v742
      %v2576 = vpop.f32.mrf.mxu0
      %v2577 = vadd.f32 0.0, %v2576
      %v2578 = vpop.f32.mrf.mxu0
      %2579 = vdwg.mxu0
      %v2580 = vadd.f32 %v2308, %v2422
      %v2581 = vadd.f32 %v2309, %v2427
      %v2582 = vadd.f32 %v2310, %v2432
      %v2583 = vadd.f32 %v2311, %v2437
      %v2584 = vadd.f32 %v2312, %v2442
      %v2585 = vadd.f32 %v2313, %v2447
      %v2586 = vadd.f32 %v2314, %v2452
      %v2587 = vadd.f32 %v2315, %v2457
      %v2588 = vadd.f32 %v2316, %v2462
      %v2589 = vadd.f32 %v2317, %v2467
      %v2590 = vadd.f32 %v2318, %v2472
      %v2591 = vadd.f32 %v2319, %v2477
      %v2592 = vadd.f32 %v2320, %v2482
      %v2593 = vadd.f32 %v2321, %v2487
      %v2594 = vadd.f32 %v2322, %v2492
      %v2595 = vadd.f32 %v2323, %v2497
      %v2596 = vadd.f32 %v2324, %v2502
      %v2597 = vadd.f32 %v2325, %v2507
      %v2598 = vadd.f32 %v2326, %v2512
      %v2599 = vadd.f32 %v2327, %v2517
      %v2600 = vadd.f32 %v2328, %v2522
      %v2601 = vadd.f32 %v2329, %v2527
      %v2602 = vadd.f32 %v2330, %v2532
      %v2603 = vadd.f32 %v2331, %v2537
      %v2604 = vadd.f32 %v2332, %v2542
      %v2605 = vadd.f32 %v2333, %v2547
      %v2606 = vadd.f32 %v2334, %v2552
      %v2607 = vadd.f32 %v2335, %v2557
      %v2608 = vadd.f32 %v2336, %v2562
      %v2609 = vadd.f32 %v2337, %v2567
      %v2610 = vadd.f32 %v2338, %v2572
      %v2611 = vadd.f32 %v2339, %v2577
      %s2612 = scalar_lea.vmem %s1, 28
      %v2613 = vld [vmem:[%s2612] sm:$0xf]
      %v2615 = vsel %vm509, %v2613, 0
      %2617 = vmatprep.subr.mxu0 0.0
      %2618 = vmatpush1.msra.mxu0 0.0
      %2619 = vmatprep.subr.mxu0 0.0
      %2620 = vmatpush1.msra.mxu0 0.0
      %2621 = vmatprep.subr.mxu0 0.0
      %2622 = vmatpush1.msra.mxu0 0.0
      %2623 = vmatprep.subr.mxu0 0.0
      %2624 = vmatpush1.msra.mxu0 0.0
      %2625 = vmatprep.subr.mxu0 0.0
      %2626 = vmatpush1.msra.mxu0 0.0
      %2627 = vmatprep.subr.mxu0 0.0
      %2628 = vmatpush1.msra.mxu0 0.0
      %2629 = vmatprep.subr.mxu0 0.0
      %2630 = vmatpush1.msra.mxu0 0.0
      %2631 = vmatprep.subr.mxu0 0.0
      %2632 = vmatpush1.msra.mxu0 0.0
      %2633 = vmatprep.subr.mxu0 0.0
      %2634 = vmatpush1.msra.mxu0 0.0
      %2635 = vmatprep.subr.mxu0 0.0
      %2636 = vmatpush1.msra.mxu0 0.0
      %2637 = vmatprep.subr.mxu0 0.0
      %2638 = vmatpush1.msra.mxu0 0.0
      %2639 = vmatprep.subr.mxu0 0.0
      %2640 = vmatpush1.msra.mxu0 0.0
      %2641 = vmatprep.subr.mxu0 0.0
      %2642 = vmatpush1.msra.mxu0 0.0
      %2643 = vmatprep.subr.mxu0 0.0
      %2644 = vmatpush1.msra.mxu0 0.0
      %2645 = vmatprep.subr.mxu0 0.0
      %2646 = vmatpush1.msra.mxu0 0.0
      %2647 = vmatprep.subr.mxu0 0.0
      %2648 = vmatpush1.msra.mxu0 %v2615
      %2649 = vmatprep.subr.mxu0 0.0
      %2650 = vmatpush2.msra.mxu0 0.0
      %2651 = vmatprep.subr.mxu0 0.0
      %2652 = vmatpush2.msra.mxu0 0.0
      %2653 = vmatprep.subr.mxu0 0.0
      %2654 = vmatpush2.msra.mxu0 0.0
      %2655 = vmatprep.subr.mxu0 0.0
      %2656 = vmatpush2.msra.mxu0 0.0
      %2657 = vmatprep.subr.mxu0 0.0
      %2658 = vmatpush2.msra.mxu0 0.0
      %2659 = vmatprep.subr.mxu0 0.0
      %2660 = vmatpush2.msra.mxu0 0.0
      %2661 = vmatprep.subr.mxu0 0.0
      %2662 = vmatpush2.msra.mxu0 0.0
      %2663 = vmatprep.subr.mxu0 0.0
      %2664 = vmatpush2.msra.mxu0 0.0
      %2665 = vmatprep.subr.mxu0 0.0
      %2666 = vmatpush2.msra.mxu0 0.0
      %2667 = vmatprep.subr.mxu0 0.0
      %2668 = vmatpush2.msra.mxu0 0.0
      %2669 = vmatprep.subr.mxu0 0.0
      %2670 = vmatpush2.msra.mxu0 0.0
      %2671 = vmatprep.subr.mxu0 0.0
      %2672 = vmatpush2.msra.mxu0 0.0
      %2673 = vmatprep.subr.mxu0 0.0
      %2674 = vmatpush2.msra.mxu0 0.0
      %2675 = vmatprep.subr.mxu0 0.0
      %2676 = vmatpush2.msra.mxu0 0.0
      %2677 = vmatprep.subr.mxu0 0.0
      %2678 = vmatpush2.msra.mxu0 0.0
      %2679 = vmatprep.subr.mxu0 0.0
      %2680 = vmatpush2.msra.mxu0 0.0
      %2681 = vmatprep.mubr.f32.mxu0 0.0
      %2682 = vmatmul.mubr.f32.gmra.mxu0 %v426
      %v2683 = vpop.f32.mrf.mxu0
      %v2684 = vadd.f32 0.0, %v2683
      %v2685 = vpop.f32.mrf.mxu0
      %2686 = vmatprep.mubr.f32.mxu0 0.0
      %2687 = vmatmul.mubr.f32.gmra.mxu0 %v429
      %v2688 = vpop.f32.mrf.mxu0
      %v2689 = vadd.f32 0.0, %v2688
      %v2690 = vpop.f32.mrf.mxu0
      %2691 = vmatprep.mubr.f32.mxu0 0.0
      %2692 = vmatmul.mubr.f32.gmra.mxu0 %v432
      %v2693 = vpop.f32.mrf.mxu0
      %v2694 = vadd.f32 0.0, %v2693
      %v2695 = vpop.f32.mrf.mxu0
      %2696 = vmatprep.mubr.f32.mxu0 0.0
      %2697 = vmatmul.mubr.f32.gmra.mxu0 %v435
      %v2698 = vpop.f32.mrf.mxu0
      %v2699 = vadd.f32 0.0, %v2698
      %v2700 = vpop.f32.mrf.mxu0
      %2701 = vmatprep.mubr.f32.mxu0 0.0
      %2702 = vmatmul.mubr.f32.gmra.mxu0 %v438
      %v2703 = vpop.f32.mrf.mxu0
      %v2704 = vadd.f32 0.0, %v2703
      %v2705 = vpop.f32.mrf.mxu0
      %2706 = vmatprep.mubr.f32.mxu0 0.0
      %2707 = vmatmul.mubr.f32.gmra.mxu0 %v441
      %v2708 = vpop.f32.mrf.mxu0
      %v2709 = vadd.f32 0.0, %v2708
      %v2710 = vpop.f32.mrf.mxu0
      %2711 = vmatprep.mubr.f32.mxu0 0.0
      %2712 = vmatmul.mubr.f32.gmra.mxu0 %v444
      %v2713 = vpop.f32.mrf.mxu0
      %v2714 = vadd.f32 0.0, %v2713
      %v2715 = vpop.f32.mrf.mxu0
      %2716 = vmatprep.mubr.f32.mxu0 0.0
      %2717 = vmatmul.mubr.f32.gmra.mxu0 %v447
      %v2718 = vpop.f32.mrf.mxu0
      %v2719 = vadd.f32 0.0, %v2718
      %v2720 = vpop.f32.mrf.mxu0
      %2721 = vmatprep.mubr.f32.mxu0 0.0
      %2722 = vmatmul.mubr.f32.gmra.mxu0 %v450
      %v2723 = vpop.f32.mrf.mxu0
      %v2724 = vadd.f32 0.0, %v2723
      %v2725 = vpop.f32.mrf.mxu0
      %2726 = vmatprep.mubr.f32.mxu0 0.0
      %2727 = vmatmul.mubr.f32.gmra.mxu0 %v453
      %v2728 = vpop.f32.mrf.mxu0
      %v2729 = vadd.f32 0.0, %v2728
      %v2730 = vpop.f32.mrf.mxu0
      %2731 = vmatprep.mubr.f32.mxu0 0.0
      %2732 = vmatmul.mubr.f32.gmra.mxu0 %v456
      %v2733 = vpop.f32.mrf.mxu0
      %v2734 = vadd.f32 0.0, %v2733
      %v2735 = vpop.f32.mrf.mxu0
      %2736 = vmatprep.mubr.f32.mxu0 0.0
      %2737 = vmatmul.mubr.f32.gmra.mxu0 %v459
      %v2738 = vpop.f32.mrf.mxu0
      %v2739 = vadd.f32 0.0, %v2738
      %v2740 = vpop.f32.mrf.mxu0
      %2741 = vmatprep.mubr.f32.mxu0 0.0
      %2742 = vmatmul.mubr.f32.gmra.mxu0 %v462
      %v2743 = vpop.f32.mrf.mxu0
      %v2744 = vadd.f32 0.0, %v2743
      %v2745 = vpop.f32.mrf.mxu0
      %2746 = vmatprep.mubr.f32.mxu0 0.0
      %2747 = vmatmul.mubr.f32.gmra.mxu0 %v465
      %v2748 = vpop.f32.mrf.mxu0
      %v2749 = vadd.f32 0.0, %v2748
      %v2750 = vpop.f32.mrf.mxu0
      %2751 = vmatprep.mubr.f32.mxu0 0.0
      %2752 = vmatmul.mubr.f32.gmra.mxu0 %v468
      %v2753 = vpop.f32.mrf.mxu0
      %v2754 = vadd.f32 0.0, %v2753
      %v2755 = vpop.f32.mrf.mxu0
      %2756 = vmatprep.mubr.f32.mxu0 0.0
      %2757 = vmatmul.mubr.f32.gmra.mxu0 %v471
      %v2758 = vpop.f32.mrf.mxu0
      %v2759 = vadd.f32 0.0, %v2758
      %v2760 = vpop.f32.mrf.mxu0
      %2761 = vmatprep.mubr.f32.mxu0 0.0
      %2762 = vmatmul.mubr.f32.gmra.mxu0 %v474
      %v2763 = vpop.f32.mrf.mxu0
      %v2764 = vadd.f32 0.0, %v2763
      %v2765 = vpop.f32.mrf.mxu0
      %2766 = vmatprep.mubr.f32.mxu0 0.0
      %2767 = vmatmul.mubr.f32.gmra.mxu0 %v477
      %v2768 = vpop.f32.mrf.mxu0
      %v2769 = vadd.f32 0.0, %v2768
      %v2770 = vpop.f32.mrf.mxu0
      %2771 = vmatprep.mubr.f32.mxu0 0.0
      %2772 = vmatmul.mubr.f32.gmra.mxu0 %v480
      %v2773 = vpop.f32.mrf.mxu0
      %v2774 = vadd.f32 0.0, %v2773
      %v2775 = vpop.f32.mrf.mxu0
      %2776 = vmatprep.mubr.f32.mxu0 0.0
      %2777 = vmatmul.mubr.f32.gmra.mxu0 %v483
      %v2778 = vpop.f32.mrf.mxu0
      %v2779 = vadd.f32 0.0, %v2778
      %v2780 = vpop.f32.mrf.mxu0
      %2781 = vmatprep.mubr.f32.mxu0 0.0
      %2782 = vmatmul.mubr.f32.gmra.mxu0 %v486
      %v2783 = vpop.f32.mrf.mxu0
      %v2784 = vadd.f32 0.0, %v2783
      %v2785 = vpop.f32.mrf.mxu0
      %2786 = vmatprep.mubr.f32.mxu0 0.0
      %2787 = vmatmul.mubr.f32.gmra.mxu0 %v489
      %v2788 = vpop.f32.mrf.mxu0
      %v2789 = vadd.f32 0.0, %v2788
      %v2790 = vpop.f32.mrf.mxu0
      %2791 = vmatprep.mubr.f32.mxu0 0.0
      %2792 = vmatmul.mubr.f32.gmra.mxu0 %v492
      %v2793 = vpop.f32.mrf.mxu0
      %v2794 = vadd.f32 0.0, %v2793
      %v2795 = vpop.f32.mrf.mxu0
      %2796 = vmatprep.mubr.f32.mxu0 0.0
      %2797 = vmatmul.mubr.f32.gmra.mxu0 %v495
      %v2798 = vpop.f32.mrf.mxu0
      %v2799 = vadd.f32 0.0, %v2798
      %v2800 = vpop.f32.mrf.mxu0
      %2801 = vmatprep.mubr.f32.mxu0 0.0
      %2802 = vmatmul.mubr.f32.gmra.mxu0 %v498
      %v2803 = vpop.f32.mrf.mxu0
      %v2804 = vadd.f32 0.0, %v2803
      %v2805 = vpop.f32.mrf.mxu0
      %2806 = vmatprep.mubr.f32.mxu0 0.0
      %2807 = vmatmul.mubr.f32.gmra.mxu0 %v501
      %v2808 = vpop.f32.mrf.mxu0
      %v2809 = vadd.f32 0.0, %v2808
      %v2810 = vpop.f32.mrf.mxu0
      %2811 = vmatprep.mubr.f32.mxu0 0.0
      %2812 = vmatmul.mubr.f32.gmra.mxu0 %v504
      %v2813 = vpop.f32.mrf.mxu0
      %v2814 = vadd.f32 0.0, %v2813
      %v2815 = vpop.f32.mrf.mxu0
      %2816 = vmatprep.mubr.f32.mxu0 0.0
      %2817 = vmatmul.mubr.f32.gmra.mxu0 %v507
      %v2818 = vpop.f32.mrf.mxu0
      %v2819 = vadd.f32 0.0, %v2818
      %v2820 = vpop.f32.mrf.mxu0
      %2821 = vmatprep.mubr.f32.mxu0 0.0
      %2822 = vmatmul.mubr.f32.gmra.mxu0 %v1796
      %v2823 = vpop.f32.mrf.mxu0
      %v2824 = vadd.f32 0.0, %v2823
      %v2825 = vpop.f32.mrf.mxu0
      %2826 = vmatprep.mubr.f32.mxu0 0.0
      %2827 = vmatmul.mubr.f32.gmra.mxu0 %v1799
      %v2828 = vpop.f32.mrf.mxu0
      %v2829 = vadd.f32 0.0, %v2828
      %v2830 = vpop.f32.mrf.mxu0
      %2831 = vmatprep.mubr.f32.mxu0 0.0
      %2832 = vmatmul.mubr.f32.gmra.mxu0 %v417
      %v2833 = vpop.f32.mrf.mxu0
      %v2834 = vadd.f32 0.0, %v2833
      %v2835 = vpop.f32.mrf.mxu0
      %2836 = vmatprep.mubr.f32.mxu0 0.0
      %2837 = vmatmul.mubr.f32.gmra.mxu0 %v417
      %v2838 = vpop.f32.mrf.mxu0
      %v2839 = vadd.f32 0.0, %v2838
      %v2840 = vpop.f32.mrf.mxu0
      %2841 = vdwg.mxu0
      %v2842 = vadd.f32 %v2580, %v2684
      %v2843 = vadd.f32 %v2581, %v2689
      %v2844 = vadd.f32 %v2582, %v2694
      %v2845 = vadd.f32 %v2583, %v2699
      %v2846 = vadd.f32 %v2584, %v2704
      %v2847 = vadd.f32 %v2585, %v2709
      %v2848 = vadd.f32 %v2586, %v2714
      %v2849 = vadd.f32 %v2587, %v2719
      %v2850 = vadd.f32 %v2588, %v2724
      %v2851 = vadd.f32 %v2589, %v2729
      %v2852 = vadd.f32 %v2590, %v2734
      %v2853 = vadd.f32 %v2591, %v2739
      %v2854 = vadd.f32 %v2592, %v2744
      %v2855 = vadd.f32 %v2593, %v2749
      %v2856 = vadd.f32 %v2594, %v2754
      %v2857 = vadd.f32 %v2595, %v2759
      %v2858 = vadd.f32 %v2596, %v2764
      %v2859 = vadd.f32 %v2597, %v2769
      %v2860 = vadd.f32 %v2598, %v2774
      %v2861 = vadd.f32 %v2599, %v2779
      %v2862 = vadd.f32 %v2600, %v2784
      %v2863 = vadd.f32 %v2601, %v2789
      %v2864 = vadd.f32 %v2602, %v2794
      %v2865 = vadd.f32 %v2603, %v2799
      %v2866 = vadd.f32 %v2604, %v2804
      %v2867 = vadd.f32 %v2605, %v2809
      %v2868 = vadd.f32 %v2606, %v2814
      %v2869 = vadd.f32 %v2607, %v2819
      %v2870 = vadd.f32 %v2608, %v2824
      %v2871 = vadd.f32 %v2609, %v2829
      %v2872 = vadd.f32 %v2610, %v2834
      %v2873 = vadd.f32 %v2611, %v2839
      %v2874 = vsel %vm1092, %v2062, 0.0
      %v2875 = vsel %vm1092, 0.0, %v1064
      %v2876 = vsel %vm285, %v2874, 0.0
      %v2877 = vsel %vm285, %v2875, 0.0
      %s2878 = scalar_lea.vmem %s1, 32
      %v2879 = vld [vmem:[%s2878] sm:$0xf]
      %v2881 = vsel %vm415, %v2876, 0
      %v2884 = vsel %vm415, %v2877, 0
      %v2887 = vsel %vm509, %v2879, 0
      %2889 = vmatprep.subr.mxu0 0.0
      %2890 = vmatpush1.msra.mxu0 0.0
      %2891 = vmatprep.subr.mxu0 0.0
      %2892 = vmatpush1.msra.mxu0 0.0
      %2893 = vmatprep.subr.mxu0 0.0
      %2894 = vmatpush1.msra.mxu0 0.0
      %2895 = vmatprep.subr.mxu0 0.0
      %2896 = vmatpush1.msra.mxu0 0.0
      %2897 = vmatprep.subr.mxu0 0.0
      %2898 = vmatpush1.msra.mxu0 0.0
      %2899 = vmatprep.subr.mxu0 0.0
      %2900 = vmatpush1.msra.mxu0 0.0
      %2901 = vmatprep.subr.mxu0 0.0
      %2902 = vmatpush1.msra.mxu0 0.0
      %2903 = vmatprep.subr.mxu0 0.0
      %2904 = vmatpush1.msra.mxu0 0.0
      %2905 = vmatprep.subr.mxu0 0.0
      %2906 = vmatpush1.msra.mxu0 0.0
      %2907 = vmatprep.subr.mxu0 0.0
      %2908 = vmatpush1.msra.mxu0 0.0
      %2909 = vmatprep.subr.mxu0 0.0
      %2910 = vmatpush1.msra.mxu0 0.0
      %2911 = vmatprep.subr.mxu0 0.0
      %2912 = vmatpush1.msra.mxu0 0.0
      %2913 = vmatprep.subr.mxu0 0.0
      %2914 = vmatpush1.msra.mxu0 0.0
      %2915 = vmatprep.subr.mxu0 0.0
      %2916 = vmatpush1.msra.mxu0 0.0
      %2917 = vmatprep.subr.mxu0 0.0
      %2918 = vmatpush1.msra.mxu0 0.0
      %2919 = vmatprep.subr.mxu0 0.0
      %2920 = vmatpush1.msra.mxu0 %v2887
      %2921 = vmatprep.subr.mxu0 0.0
      %2922 = vmatpush2.msra.mxu0 0.0
      %2923 = vmatprep.subr.mxu0 0.0
      %2924 = vmatpush2.msra.mxu0 0.0
      %2925 = vmatprep.subr.mxu0 0.0
      %2926 = vmatpush2.msra.mxu0 0.0
      %2927 = vmatprep.subr.mxu0 0.0
      %2928 = vmatpush2.msra.mxu0 0.0
      %2929 = vmatprep.subr.mxu0 0.0
      %2930 = vmatpush2.msra.mxu0 0.0
      %2931 = vmatprep.subr.mxu0 0.0
      %2932 = vmatpush2.msra.mxu0 0.0
      %2933 = vmatprep.subr.mxu0 0.0
      %2934 = vmatpush2.msra.mxu0 0.0
      %2935 = vmatprep.subr.mxu0 0.0
      %2936 = vmatpush2.msra.mxu0 0.0
      %2937 = vmatprep.subr.mxu0 0.0
      %2938 = vmatpush2.msra.mxu0 0.0
      %2939 = vmatprep.subr.mxu0 0.0
      %2940 = vmatpush2.msra.mxu0 0.0
      %2941 = vmatprep.subr.mxu0 0.0
      %2942 = vmatpush2.msra.mxu0 0.0
      %2943 = vmatprep.subr.mxu0 0.0
      %2944 = vmatpush2.msra.mxu0 0.0
      %2945 = vmatprep.subr.mxu0 0.0
      %2946 = vmatpush2.msra.mxu0 0.0
      %2947 = vmatprep.subr.mxu0 0.0
      %2948 = vmatpush2.msra.mxu0 0.0
      %2949 = vmatprep.subr.mxu0 0.0
      %2950 = vmatpush2.msra.mxu0 0.0
      %2951 = vmatprep.subr.mxu0 0.0
      %2952 = vmatpush2.msra.mxu0 0.0
      %2953 = vmatprep.mubr.f32.mxu0 0.0
      %2954 = vmatmul.mubr.f32.gmra.mxu0 %v1171
      %v2955 = vpop.f32.mrf.mxu0
      %v2956 = vadd.f32 0.0, %v2955
      %v2957 = vpop.f32.mrf.mxu0
      %2958 = vmatprep.mubr.f32.mxu0 0.0
      %2959 = vmatmul.mubr.f32.gmra.mxu0 %v1174
      %v2960 = vpop.f32.mrf.mxu0
      %v2961 = vadd.f32 0.0, %v2960
      %v2962 = vpop.f32.mrf.mxu0
      %2963 = vmatprep.mubr.f32.mxu0 0.0
      %2964 = vmatmul.mubr.f32.gmra.mxu0 %v1177
      %v2965 = vpop.f32.mrf.mxu0
      %v2966 = vadd.f32 0.0, %v2965
      %v2967 = vpop.f32.mrf.mxu0
      %2968 = vmatprep.mubr.f32.mxu0 0.0
      %2969 = vmatmul.mubr.f32.gmra.mxu0 %v1180
      %v2970 = vpop.f32.mrf.mxu0
      %v2971 = vadd.f32 0.0, %v2970
      %v2972 = vpop.f32.mrf.mxu0
      %2973 = vmatprep.mubr.f32.mxu0 0.0
      %2974 = vmatmul.mubr.f32.gmra.mxu0 %v1183
      %v2975 = vpop.f32.mrf.mxu0
      %v2976 = vadd.f32 0.0, %v2975
      %v2977 = vpop.f32.mrf.mxu0
      %2978 = vmatprep.mubr.f32.mxu0 0.0
      %2979 = vmatmul.mubr.f32.gmra.mxu0 %v1186
      %v2980 = vpop.f32.mrf.mxu0
      %v2981 = vadd.f32 0.0, %v2980
      %v2982 = vpop.f32.mrf.mxu0
      %2983 = vmatprep.mubr.f32.mxu0 0.0
      %2984 = vmatmul.mubr.f32.gmra.mxu0 %v1189
      %v2985 = vpop.f32.mrf.mxu0
      %v2986 = vadd.f32 0.0, %v2985
      %v2987 = vpop.f32.mrf.mxu0
      %2988 = vmatprep.mubr.f32.mxu0 0.0
      %2989 = vmatmul.mubr.f32.gmra.mxu0 %v1192
      %v2990 = vpop.f32.mrf.mxu0
      %v2991 = vadd.f32 0.0, %v2990
      %v2992 = vpop.f32.mrf.mxu0
      %2993 = vmatprep.mubr.f32.mxu0 0.0
      %2994 = vmatmul.mubr.f32.gmra.mxu0 %v1195
      %v2995 = vpop.f32.mrf.mxu0
      %v2996 = vadd.f32 0.0, %v2995
      %v2997 = vpop.f32.mrf.mxu0
      %2998 = vmatprep.mubr.f32.mxu0 0.0
      %2999 = vmatmul.mubr.f32.gmra.mxu0 %v1198
      %v3000 = vpop.f32.mrf.mxu0
      %v3001 = vadd.f32 0.0, %v3000
      %v3002 = vpop.f32.mrf.mxu0
      %3003 = vmatprep.mubr.f32.mxu0 0.0
      %3004 = vmatmul.mubr.f32.gmra.mxu0 %v1201
      %v3005 = vpop.f32.mrf.mxu0
      %v3006 = vadd.f32 0.0, %v3005
      %v3007 = vpop.f32.mrf.mxu0
      %3008 = vmatprep.mubr.f32.mxu0 0.0
      %3009 = vmatmul.mubr.f32.gmra.mxu0 %v1204
      %v3010 = vpop.f32.mrf.mxu0
      %v3011 = vadd.f32 0.0, %v3010
      %v3012 = vpop.f32.mrf.mxu0
      %3013 = vmatprep.mubr.f32.mxu0 0.0
      %3014 = vmatmul.mubr.f32.gmra.mxu0 %v1207
      %v3015 = vpop.f32.mrf.mxu0
      %v3016 = vadd.f32 0.0, %v3015
      %v3017 = vpop.f32.mrf.mxu0
      %3018 = vmatprep.mubr.f32.mxu0 0.0
      %3019 = vmatmul.mubr.f32.gmra.mxu0 %v1210
      %v3020 = vpop.f32.mrf.mxu0
      %v3021 = vadd.f32 0.0, %v3020
      %v3022 = vpop.f32.mrf.mxu0
      %3023 = vmatprep.mubr.f32.mxu0 0.0
      %3024 = vmatmul.mubr.f32.gmra.mxu0 %v1213
      %v3025 = vpop.f32.mrf.mxu0
      %v3026 = vadd.f32 0.0, %v3025
      %v3027 = vpop.f32.mrf.mxu0
      %3028 = vmatprep.mubr.f32.mxu0 0.0
      %3029 = vmatmul.mubr.f32.gmra.mxu0 %v1216
      %v3030 = vpop.f32.mrf.mxu0
      %v3031 = vadd.f32 0.0, %v3030
      %v3032 = vpop.f32.mrf.mxu0
      %3033 = vmatprep.mubr.f32.mxu0 0.0
      %3034 = vmatmul.mubr.f32.gmra.mxu0 %v1219
      %v3035 = vpop.f32.mrf.mxu0
      %v3036 = vadd.f32 0.0, %v3035
      %v3037 = vpop.f32.mrf.mxu0
      %3038 = vmatprep.mubr.f32.mxu0 0.0
      %3039 = vmatmul.mubr.f32.gmra.mxu0 %v1222
      %v3040 = vpop.f32.mrf.mxu0
      %v3041 = vadd.f32 0.0, %v3040
      %v3042 = vpop.f32.mrf.mxu0
      %3043 = vmatprep.mubr.f32.mxu0 0.0
      %3044 = vmatmul.mubr.f32.gmra.mxu0 %v1225
      %v3045 = vpop.f32.mrf.mxu0
      %v3046 = vadd.f32 0.0, %v3045
      %v3047 = vpop.f32.mrf.mxu0
      %3048 = vmatprep.mubr.f32.mxu0 0.0
      %3049 = vmatmul.mubr.f32.gmra.mxu0 %v1228
      %v3050 = vpop.f32.mrf.mxu0
      %v3051 = vadd.f32 0.0, %v3050
      %v3052 = vpop.f32.mrf.mxu0
      %3053 = vmatprep.mubr.f32.mxu0 0.0
      %3054 = vmatmul.mubr.f32.gmra.mxu0 %v1231
      %v3055 = vpop.f32.mrf.mxu0
      %v3056 = vadd.f32 0.0, %v3055
      %v3057 = vpop.f32.mrf.mxu0
      %3058 = vmatprep.mubr.f32.mxu0 0.0
      %3059 = vmatmul.mubr.f32.gmra.mxu0 %v1234
      %v3060 = vpop.f32.mrf.mxu0
      %v3061 = vadd.f32 0.0, %v3060
      %v3062 = vpop.f32.mrf.mxu0
      %3063 = vmatprep.mubr.f32.mxu0 0.0
      %3064 = vmatmul.mubr.f32.gmra.mxu0 %v1237
      %v3065 = vpop.f32.mrf.mxu0
      %v3066 = vadd.f32 0.0, %v3065
      %v3067 = vpop.f32.mrf.mxu0
      %3068 = vmatprep.mubr.f32.mxu0 0.0
      %3069 = vmatmul.mubr.f32.gmra.mxu0 %v1240
      %v3070 = vpop.f32.mrf.mxu0
      %v3071 = vadd.f32 0.0, %v3070
      %v3072 = vpop.f32.mrf.mxu0
      %3073 = vmatprep.mubr.f32.mxu0 0.0
      %3074 = vmatmul.mubr.f32.gmra.mxu0 %v1243
      %v3075 = vpop.f32.mrf.mxu0
      %v3076 = vadd.f32 0.0, %v3075
      %v3077 = vpop.f32.mrf.mxu0
      %3078 = vmatprep.mubr.f32.mxu0 0.0
      %3079 = vmatmul.mubr.f32.gmra.mxu0 %v1246
      %v3080 = vpop.f32.mrf.mxu0
      %v3081 = vadd.f32 0.0, %v3080
      %v3082 = vpop.f32.mrf.mxu0
      %3083 = vmatprep.mubr.f32.mxu0 0.0
      %3084 = vmatmul.mubr.f32.gmra.mxu0 %v1249
      %v3085 = vpop.f32.mrf.mxu0
      %v3086 = vadd.f32 0.0, %v3085
      %v3087 = vpop.f32.mrf.mxu0
      %3088 = vmatprep.mubr.f32.mxu0 0.0
      %3089 = vmatmul.mubr.f32.gmra.mxu0 %v2072
      %v3090 = vpop.f32.mrf.mxu0
      %v3091 = vadd.f32 0.0, %v3090
      %v3092 = vpop.f32.mrf.mxu0
      %3093 = vmatprep.mubr.f32.mxu0 0.0
      %3094 = vmatmul.mubr.f32.gmra.mxu0 %v2075
      %v3095 = vpop.f32.mrf.mxu0
      %v3096 = vadd.f32 0.0, %v3095
      %v3097 = vpop.f32.mrf.mxu0
      %3098 = vmatprep.mubr.f32.mxu0 0.0
      %3099 = vmatmul.mubr.f32.gmra.mxu0 %v2881
      %v3100 = vpop.f32.mrf.mxu0
      %v3101 = vadd.f32 0.0, %v3100
      %v3102 = vpop.f32.mrf.mxu0
      %3103 = vmatprep.mubr.f32.mxu0 0.0
      %3104 = vmatmul.mubr.f32.gmra.mxu0 %v1159
      %v3105 = vpop.f32.mrf.mxu0
      %v3106 = vadd.f32 0.0, %v3105
      %v3107 = vpop.f32.mrf.mxu0
      %3108 = vmatprep.mubr.f32.mxu0 0.0
      %3109 = vmatmul.mubr.f32.gmra.mxu0 %v2884
      %v3110 = vpop.f32.mrf.mxu0
      %v3111 = vadd.f32 0.0, %v3110
      %v3112 = vpop.f32.mrf.mxu0
      %3113 = vdwg.mxu0
      %v3114 = vadd.f32 %v2842, %v2956
      %v3115 = vadd.f32 %v2843, %v2961
      %v3116 = vadd.f32 %v2844, %v2966
      %v3117 = vadd.f32 %v2845, %v2971
      %v3118 = vadd.f32 %v2846, %v2976
      %v3119 = vadd.f32 %v2847, %v2981
      %v3120 = vadd.f32 %v2848, %v2986
      %v3121 = vadd.f32 %v2849, %v2991
      %v3122 = vadd.f32 %v2850, %v2996
      %v3123 = vadd.f32 %v2851, %v3001
      %v3124 = vadd.f32 %v2852, %v3006
      %v3125 = vadd.f32 %v2853, %v3011
      %v3126 = vadd.f32 %v2854, %v3016
      %v3127 = vadd.f32 %v2855, %v3021
      %v3128 = vadd.f32 %v2856, %v3026
      %v3129 = vadd.f32 %v2857, %v3031
      %v3130 = vadd.f32 %v2858, %v3036
      %v3131 = vadd.f32 %v2859, %v3041
      %v3132 = vadd.f32 %v2860, %v3046
      %v3133 = vadd.f32 %v2861, %v3051
      %v3134 = vadd.f32 %v2862, %v3056
      %v3135 = vadd.f32 %v2863, %v3061
      %v3136 = vadd.f32 %v2864, %v3066
      %v3137 = vadd.f32 %v2865, %v3071
      %v3138 = vadd.f32 %v2866, %v3076
      %v3139 = vadd.f32 %v2867, %v3081
      %v3140 = vadd.f32 %v2868, %v3086
      %v3141 = vadd.f32 %v2869, %v3091
      %v3142 = vadd.f32 %v2870, %v3096
      %v3143 = vadd.f32 %v2871, %v3101
      %v3144 = vadd.f32 %v2872, %v3106
      %v3145 = vadd.f32 %v2873, %v3111
      %v3146 = vld [vmem:[%s2] sm:$0x1]
      %v3148 = vlaneseq
      %v3149 = vshrl.u32 %v3148, 7
      %v3150 = vsub.s32 0, %v3149
      %v3151 = vrot.slane %v3146, %v3150
      %v3153 = vmul.f32 %v3114, %v3151
      %v3154 = vmul.f32 %v3115, %v3151
      %v3155 = vmul.f32 %v3116, %v3151
      %v3156 = vmul.f32 %v3117, %v3151
      %v3157 = vmul.f32 %v3118, %v3151
      %v3158 = vmul.f32 %v3119, %v3151
      %v3159 = vmul.f32 %v3120, %v3151
      %v3160 = vmul.f32 %v3121, %v3151
      %v3161 = vmul.f32 %v3122, %v3151
      %v3162 = vmul.f32 %v3123, %v3151
      %v3163 = vmul.f32 %v3124, %v3151
      %v3164 = vmul.f32 %v3125, %v3151
      %v3165 = vmul.f32 %v3126, %v3151
      %v3166 = vmul.f32 %v3127, %v3151
      %v3167 = vmul.f32 %v3128, %v3151
      %v3168 = vmul.f32 %v3129, %v3151
      %v3169 = vmul.f32 %v3130, %v3151
      %v3170 = vmul.f32 %v3131, %v3151
      %v3171 = vmul.f32 %v3132, %v3151
      %v3172 = vmul.f32 %v3133, %v3151
      %v3173 = vmul.f32 %v3134, %v3151
      %v3174 = vmul.f32 %v3135, %v3151
      %v3175 = vmul.f32 %v3136, %v3151
      %v3176 = vmul.f32 %v3137, %v3151
      %v3177 = vmul.f32 %v3138, %v3151
      %v3178 = vmul.f32 %v3139, %v3151
      %v3179 = vmul.f32 %v3140, %v3151
      %v3180 = vmul.f32 %v3141, %v3151
      %v3181 = vmul.f32 %v3142, %v3151
      %v3182 = vmul.f32 %v3143, %v3151
      %v3183 = vmul.f32 %v3144, %v3151
      %v3184 = vmul.f32 %v3145, %v3151
      %v3185 = vld [vmem:[%s3] sm:$0x1]
      %v3187 = vlaneseq
      %v3188 = vshrl.u32 %v3187, 7
      %v3189 = vsub.s32 0, %v3188
      %v3190 = vrot.slane %v3185, %v3189
      %v3192 = vadd.f32 %v3153, %v3190
      %v3193 = vadd.f32 %v3154, %v3190
      %v3194 = vadd.f32 %v3155, %v3190
      %v3195 = vadd.f32 %v3156, %v3190
      %v3196 = vadd.f32 %v3157, %v3190
      %v3197 = vadd.f32 %v3158, %v3190
      %v3198 = vadd.f32 %v3159, %v3190
      %v3199 = vadd.f32 %v3160, %v3190
      %v3200 = vadd.f32 %v3161, %v3190
      %v3201 = vadd.f32 %v3162, %v3190
      %v3202 = vadd.f32 %v3163, %v3190
      %v3203 = vadd.f32 %v3164, %v3190
      %v3204 = vadd.f32 %v3165, %v3190
      %v3205 = vadd.f32 %v3166, %v3190
      %v3206 = vadd.f32 %v3167, %v3190
      %v3207 = vadd.f32 %v3168, %v3190
      %v3208 = vadd.f32 %v3169, %v3190
      %v3209 = vadd.f32 %v3170, %v3190
      %v3210 = vadd.f32 %v3171, %v3190
      %v3211 = vadd.f32 %v3172, %v3190
      %v3212 = vadd.f32 %v3173, %v3190
      %v3213 = vadd.f32 %v3174, %v3190
      %v3214 = vadd.f32 %v3175, %v3190
      %v3215 = vadd.f32 %v3176, %v3190
      %v3216 = vadd.f32 %v3177, %v3190
      %v3217 = vadd.f32 %v3178, %v3190
      %v3218 = vadd.f32 %v3179, %v3190
      %v3219 = vadd.f32 %v3180, %v3190
      %v3220 = vadd.f32 %v3181, %v3190
      %v3221 = vadd.f32 %v3182, %v3190
      %v3222 = vadd.f32 %v3183, %v3190
      %v3223 = vadd.f32 %v3184, %v3190
      %v3224 = vmax.f32 %v3192, 0.0
      %v3225 = vmax.f32 %v3193, 0.0
      %v3226 = vmax.f32 %v3194, 0.0
      %v3227 = vmax.f32 %v3195, 0.0
      %v3228 = vmax.f32 %v3196, 0.0
      %v3229 = vmax.f32 %v3197, 0.0
      %v3230 = vmax.f32 %v3198, 0.0
      %v3231 = vmax.f32 %v3199, 0.0
      %v3232 = vmax.f32 %v3200, 0.0
      %v3233 = vmax.f32 %v3201, 0.0
      %v3234 = vmax.f32 %v3202, 0.0
      %v3235 = vmax.f32 %v3203, 0.0
      %v3236 = vmax.f32 %v3204, 0.0
      %v3237 = vmax.f32 %v3205, 0.0
      %v3238 = vmax.f32 %v3206, 0.0
      %v3239 = vmax.f32 %v3207, 0.0
      %v3240 = vmax.f32 %v3208, 0.0
      %v3241 = vmax.f32 %v3209, 0.0
      %v3242 = vmax.f32 %v3210, 0.0
      %v3243 = vmax.f32 %v3211, 0.0
      %v3244 = vmax.f32 %v3212, 0.0
      %v3245 = vmax.f32 %v3213, 0.0
      %v3246 = vmax.f32 %v3214, 0.0
      %v3247 = vmax.f32 %v3215, 0.0
      %v3248 = vmax.f32 %v3216, 0.0
      %v3249 = vmax.f32 %v3217, 0.0
      %v3250 = vmax.f32 %v3218, 0.0
      %v3251 = vmax.f32 %v3219, 0.0
      %v3252 = vmax.f32 %v3220, 0.0
      %v3253 = vmax.f32 %v3221, 0.0
      %v3254 = vmax.f32 %v3222, 0.0
      %v3255 = vmax.f32 %v3223, 0.0
      %v3256 = vrot.slane %v3224, 7
      %v3257 = vrot.slane %v3225, 7
      %v3258 = vrot.slane %v3226, 7
      %v3259 = vrot.slane %v3227, 7
      %v3260 = vrot.slane %v3228, 7
      %v3261 = vrot.slane %v3229, 7
      %v3262 = vrot.slane %v3230, 7
      %v3263 = vrot.slane %v3231, 7
      %v3264 = vrot.slane %v3232, 7
      %v3265 = vrot.slane %v3233, 7
      %v3266 = vrot.slane %v3234, 7
      %v3267 = vrot.slane %v3235, 7
      %v3268 = vrot.slane %v3236, 7
      %v3269 = vrot.slane %v3237, 7
      %v3270 = vrot.slane %v3238, 7
      %v3271 = vrot.slane %v3239, 7
      %v3272 = vrot.slane %v3240, 7
      %v3273 = vrot.slane %v3241, 7
      %v3274 = vrot.slane %v3242, 7
      %v3275 = vrot.slane %v3243, 7
      %v3276 = vrot.slane %v3244, 7
      %v3277 = vrot.slane %v3245, 7
      %v3278 = vrot.slane %v3246, 7
      %v3279 = vrot.slane %v3247, 7
      %v3280 = vrot.slane %v3248, 7
      %v3281 = vrot.slane %v3249, 7
      %v3282 = vrot.slane %v3250, 7
      %v3283 = vrot.slane %v3251, 7
      %v3284 = vrot.slane %v3252, 7
      %v3285 = vrot.slane %v3253, 7
      %v3286 = vsel %vm348, %v3284, %v3285
      %v3287 = vsel %vm348, %v3283, %v3284
      %v3288 = vsel %vm348, %v3282, %v3283
      %v3289 = vsel %vm348, %v3281, %v3282
      %v3290 = vsel %vm348, %v3280, %v3281
      %v3291 = vsel %vm348, %v3279, %v3280
      %v3292 = vsel %vm348, %v3278, %v3279
      %v3293 = vsel %vm348, %v3277, %v3278
      %v3294 = vsel %vm348, %v3276, %v3277
      %v3295 = vsel %vm348, %v3275, %v3276
      %v3296 = vsel %vm348, %v3274, %v3275
      %v3297 = vsel %vm348, %v3273, %v3274
      %v3298 = vsel %vm348, %v3272, %v3273
      %v3299 = vsel %vm348, %v3271, %v3272
      %v3300 = vsel %vm348, %v3270, %v3271
      %v3301 = vsel %vm348, %v3269, %v3270
      %v3302 = vsel %vm348, %v3268, %v3269
      %v3303 = vsel %vm348, %v3267, %v3268
      %v3304 = vsel %vm348, %v3266, %v3267
      %v3305 = vsel %vm348, %v3265, %v3266
      %v3306 = vsel %vm348, %v3264, %v3265
      %v3307 = vsel %vm348, %v3263, %v3264
      %v3308 = vsel %vm348, %v3262, %v3263
      %v3309 = vsel %vm348, %v3261, %v3262
      %v3310 = vsel %vm348, %v3260, %v3261
      %v3311 = vsel %vm348, %v3259, %v3260
      %v3312 = vsel %vm348, %v3258, %v3259
      %v3313 = vsel %vm348, %v3257, %v3258
      %v3314 = vsel %vm348, %v3256, %v3257
      %v3315 = vsel %vm348, 0.0, %v3256
      %v3316 = vsel %vm348, %v3285, 0.0
      %v3317 = vsel %vm282, %v3316, 0.0
      %v3318 = vsel %vm282, %v3315, 0.0
      %v3319 = vsel %vm283, %v3314, 0.0
      %v3320 = vsel %vm282, %v3313, 0.0
      %v3321 = vsel %vm283, %v3312, 0.0
      %v3322 = vsel %vm282, %v3311, 0.0
      %v3323 = vsel %vm283, %v3310, 0.0
      %v3324 = vsel %vm282, %v3309, 0.0
      %v3325 = vsel %vm283, %v3308, 0.0
      %v3326 = vsel %vm282, %v3307, 0.0
      %v3327 = vsel %vm283, %v3306, 0.0
      %v3328 = vsel %vm282, %v3305, 0.0
      %v3329 = vsel %vm283, %v3304, 0.0
      %v3330 = vsel %vm282, %v3303, 0.0
      %v3331 = vsel %vm283, %v3302, 0.0
      %v3332 = vsel %vm282, %v3301, 0.0
      %v3333 = vsel %vm283, %v3300, 0.0
      %v3334 = vsel %vm282, %v3299, 0.0
      %v3335 = vsel %vm283, %v3298, 0.0
      %v3336 = vsel %vm282, %v3297, 0.0
      %v3337 = vsel %vm283, %v3296, 0.0
      %v3338 = vsel %vm282, %v3295, 0.0
      %v3339 = vsel %vm283, %v3294, 0.0
      %v3340 = vsel %vm282, %v3293, 0.0
      %v3341 = vsel %vm283, %v3292, 0.0
      %v3342 = vsel %vm282, %v3291, 0.0
      %v3343 = vsel %vm283, %v3290, 0.0
      %v3344 = vsel %vm282, %v3289, 0.0
      %v3345 = vsel %vm283, %v3288, 0.0
      %v3346 = vsel %vm282, %v3287, 0.0
      %v3347 = vsel %vm283, %v3286, 0.0
      %v3348 = vld [vmem:[%s4] sm:$0xf]
      %s3349 = scalar_lea.vmem %s4, 4
      %v3350 = vld [vmem:[%s3349] sm:$0xf]
      %v3352 = vsel %vm415, %v3224, 0
      %v3355 = vsel %vm415, %v3225, 0
      %v3358 = vsel %vm415, %v3226, 0
      %v3361 = vsel %vm415, %v3227, 0
      %v3364 = vsel %vm415, %v3228, 0
      %v3367 = vsel %vm415, %v3229, 0
      %v3370 = vsel %vm415, %v3230, 0
      %v3373 = vsel %vm415, %v3231, 0
      %v3376 = vsel %vm415, %v3232, 0
      %v3379 = vsel %vm415, %v3233, 0
      %v3382 = vsel %vm415, %v3234, 0
      %v3385 = vsel %vm415, %v3235, 0
      %v3388 = vsel %vm415, %v3236, 0
      %v3391 = vsel %vm415, %v3237, 0
      %v3394 = vsel %vm415, %v3238, 0
      %v3397 = vsel %vm415, %v3239, 0
      %v3400 = vsel %vm415, %v3240, 0
      %v3403 = vsel %vm415, %v3241, 0
      %v3406 = vsel %vm415, %v3242, 0
      %v3409 = vsel %vm415, %v3243, 0
      %v3412 = vsel %vm415, %v3244, 0
      %v3415 = vsel %vm415, %v3245, 0
      %v3418 = vsel %vm415, %v3246, 0
      %v3421 = vsel %vm415, %v3247, 0
      %v3424 = vsel %vm415, %v3248, 0
      %v3427 = vsel %vm415, %v3249, 0
      %v3430 = vsel %vm415, %v3250, 0
      %v3433 = vsel %vm415, %v3251, 0
      %v3436 = vsel %vm415, %v3252, 0
      %v3439 = vsel %vm415, %v3253, 0
      %v3442 = vsel %vm509, %v3350, 0
      %3444 = vmatprep.subr.mxu0 0.0
      %3445 = vmatpush1.msra.mxu0 0.0
      %3446 = vmatprep.subr.mxu0 0.0
      %3447 = vmatpush1.msra.mxu0 0.0
      %3448 = vmatprep.subr.mxu0 0.0
      %3449 = vmatpush1.msra.mxu0 0.0
      %3450 = vmatprep.subr.mxu0 0.0
      %3451 = vmatpush1.msra.mxu0 0.0
      %3452 = vmatprep.subr.mxu0 0.0
      %3453 = vmatpush1.msra.mxu0 0.0
      %3454 = vmatprep.subr.mxu0 0.0
      %3455 = vmatpush1.msra.mxu0 0.0
      %3456 = vmatprep.subr.mxu0 0.0
      %3457 = vmatpush1.msra.mxu0 0.0
      %3458 = vmatprep.subr.mxu0 0.0
      %3459 = vmatpush1.msra.mxu0 0.0
      %3460 = vmatprep.subr.mxu0 0.0
      %3461 = vmatpush1.msra.mxu0 0.0
      %3462 = vmatprep.subr.mxu0 0.0
      %3463 = vmatpush1.msra.mxu0 0.0
      %3464 = vmatprep.subr.mxu0 0.0
      %3465 = vmatpush1.msra.mxu0 0.0
      %3466 = vmatprep.subr.mxu0 0.0
      %3467 = vmatpush1.msra.mxu0 0.0
      %3468 = vmatprep.subr.mxu0 0.0
      %3469 = vmatpush1.msra.mxu0 0.0
      %3470 = vmatprep.subr.mxu0 0.0
      %3471 = vmatpush1.msra.mxu0 0.0
      %3472 = vmatprep.subr.mxu0 0.0
      %3473 = vmatpush1.msra.mxu0 0.0
      %3474 = vmatprep.subr.mxu0 0.0
      %3475 = vmatpush1.msra.mxu0 %v3442
      %3476 = vmatprep.subr.mxu0 0.0
      %3477 = vmatpush2.msra.mxu0 0.0
      %3478 = vmatprep.subr.mxu0 0.0
      %3479 = vmatpush2.msra.mxu0 0.0
      %3480 = vmatprep.subr.mxu0 0.0
      %3481 = vmatpush2.msra.mxu0 0.0
      %3482 = vmatprep.subr.mxu0 0.0
      %3483 = vmatpush2.msra.mxu0 0.0
      %3484 = vmatprep.subr.mxu0 0.0
      %3485 = vmatpush2.msra.mxu0 0.0
      %3486 = vmatprep.subr.mxu0 0.0
      %3487 = vmatpush2.msra.mxu0 0.0
      %3488 = vmatprep.subr.mxu0 0.0
      %3489 = vmatpush2.msra.mxu0 0.0
      %3490 = vmatprep.subr.mxu0 0.0
      %3491 = vmatpush2.msra.mxu0 0.0
      %3492 = vmatprep.subr.mxu0 0.0
      %3493 = vmatpush2.msra.mxu0 0.0
      %3494 = vmatprep.subr.mxu0 0.0
      %3495 = vmatpush2.msra.mxu0 0.0
      %3496 = vmatprep.subr.mxu0 0.0
      %3497 = vmatpush2.msra.mxu0 0.0
      %3498 = vmatprep.subr.mxu0 0.0
      %3499 = vmatpush2.msra.mxu0 0.0
      %3500 = vmatprep.subr.mxu0 0.0
      %3501 = vmatpush2.msra.mxu0 0.0
      %3502 = vmatprep.subr.mxu0 0.0
      %3503 = vmatpush2.msra.mxu0 0.0
      %3504 = vmatprep.subr.mxu0 0.0
      %3505 = vmatpush2.msra.mxu0 0.0
      %3506 = vmatprep.subr.mxu0 0.0
      %3507 = vmatpush2.msra.mxu0 0.0
      %3508 = vmatprep.mubr.f32.mxu0 0.0
      %3509 = vmatmul.mubr.f32.gmra.mxu0 %v417
      %v3510 = vpop.f32.mrf.mxu0
      %v3511 = vadd.f32 0.0, %v3510
      %v3512 = vpop.f32.mrf.mxu0
      %3513 = vmatprep.mubr.f32.mxu0 0.0
      %3514 = vmatmul.mubr.f32.gmra.mxu0 %v417
      %v3515 = vpop.f32.mrf.mxu0
      %v3516 = vadd.f32 0.0, %v3515
      %v3517 = vpop.f32.mrf.mxu0
      %3518 = vmatprep.mubr.f32.mxu0 0.0
      %3519 = vmatmul.mubr.f32.gmra.mxu0 %v3352
      %v3520 = vpop.f32.mrf.mxu0
      %v3521 = vadd.f32 0.0, %v3520
      %v3522 = vpop.f32.mrf.mxu0
      %3523 = vmatprep.mubr.f32.mxu0 0.0
      %3524 = vmatmul.mubr.f32.gmra.mxu0 %v3355
      %v3525 = vpop.f32.mrf.mxu0
      %v3526 = vadd.f32 0.0, %v3525
      %v3527 = vpop.f32.mrf.mxu0
      %3528 = vmatprep.mubr.f32.mxu0 0.0
      %3529 = vmatmul.mubr.f32.gmra.mxu0 %v3358
      %v3530 = vpop.f32.mrf.mxu0
      %v3531 = vadd.f32 0.0, %v3530
      %v3532 = vpop.f32.mrf.mxu0
      %3533 = vmatprep.mubr.f32.mxu0 0.0
      %3534 = vmatmul.mubr.f32.gmra.mxu0 %v3361
      %v3535 = vpop.f32.mrf.mxu0
      %v3536 = vadd.f32 0.0, %v3535
      %v3537 = vpop.f32.mrf.mxu0
      %3538 = vmatprep.mubr.f32.mxu0 0.0
      %3539 = vmatmul.mubr.f32.gmra.mxu0 %v3364
      %v3540 = vpop.f32.mrf.mxu0
      %v3541 = vadd.f32 0.0, %v3540
      %v3542 = vpop.f32.mrf.mxu0
      %3543 = vmatprep.mubr.f32.mxu0 0.0
      %3544 = vmatmul.mubr.f32.gmra.mxu0 %v3367
      %v3545 = vpop.f32.mrf.mxu0
      %v3546 = vadd.f32 0.0, %v3545
      %v3547 = vpop.f32.mrf.mxu0
      %3548 = vmatprep.mubr.f32.mxu0 0.0
      %3549 = vmatmul.mubr.f32.gmra.mxu0 %v3370
      %v3550 = vpop.f32.mrf.mxu0
      %v3551 = vadd.f32 0.0, %v3550
      %v3552 = vpop.f32.mrf.mxu0
      %3553 = vmatprep.mubr.f32.mxu0 0.0
      %3554 = vmatmul.mubr.f32.gmra.mxu0 %v3373
      %v3555 = vpop.f32.mrf.mxu0
      %v3556 = vadd.f32 0.0, %v3555
      %v3557 = vpop.f32.mrf.mxu0
      %3558 = vmatprep.mubr.f32.mxu0 0.0
      %3559 = vmatmul.mubr.f32.gmra.mxu0 %v3376
      %v3560 = vpop.f32.mrf.mxu0
      %v3561 = vadd.f32 0.0, %v3560
      %v3562 = vpop.f32.mrf.mxu0
      %3563 = vmatprep.mubr.f32.mxu0 0.0
      %3564 = vmatmul.mubr.f32.gmra.mxu0 %v3379
      %v3565 = vpop.f32.mrf.mxu0
      %v3566 = vadd.f32 0.0, %v3565
      %v3567 = vpop.f32.mrf.mxu0
      %3568 = vmatprep.mubr.f32.mxu0 0.0
      %3569 = vmatmul.mubr.f32.gmra.mxu0 %v3382
      %v3570 = vpop.f32.mrf.mxu0
      %v3571 = vadd.f32 0.0, %v3570
      %v3572 = vpop.f32.mrf.mxu0
      %3573 = vmatprep.mubr.f32.mxu0 0.0
      %3574 = vmatmul.mubr.f32.gmra.mxu0 %v3385
      %v3575 = vpop.f32.mrf.mxu0
      %v3576 = vadd.f32 0.0, %v3575
      %v3577 = vpop.f32.mrf.mxu0
      %3578 = vmatprep.mubr.f32.mxu0 0.0
      %3579 = vmatmul.mubr.f32.gmra.mxu0 %v3388
      %v3580 = vpop.f32.mrf.mxu0
      %v3581 = vadd.f32 0.0, %v3580
      %v3582 = vpop.f32.mrf.mxu0
      %3583 = vmatprep.mubr.f32.mxu0 0.0
      %3584 = vmatmul.mubr.f32.gmra.mxu0 %v3391
      %v3585 = vpop.f32.mrf.mxu0
      %v3586 = vadd.f32 0.0, %v3585
      %v3587 = vpop.f32.mrf.mxu0
      %3588 = vmatprep.mubr.f32.mxu0 0.0
      %3589 = vmatmul.mubr.f32.gmra.mxu0 %v3394
      %v3590 = vpop.f32.mrf.mxu0
      %v3591 = vadd.f32 0.0, %v3590
      %v3592 = vpop.f32.mrf.mxu0
      %3593 = vmatprep.mubr.f32.mxu0 0.0
      %3594 = vmatmul.mubr.f32.gmra.mxu0 %v3397
      %v3595 = vpop.f32.mrf.mxu0
      %v3596 = vadd.f32 0.0, %v3595
      %v3597 = vpop.f32.mrf.mxu0
      %3598 = vmatprep.mubr.f32.mxu0 0.0
      %3599 = vmatmul.mubr.f32.gmra.mxu0 %v3400
      %v3600 = vpop.f32.mrf.mxu0
      %v3601 = vadd.f32 0.0, %v3600
      %v3602 = vpop.f32.mrf.mxu0
      %3603 = vmatprep.mubr.f32.mxu0 0.0
      %3604 = vmatmul.mubr.f32.gmra.mxu0 %v3403
      %v3605 = vpop.f32.mrf.mxu0
      %v3606 = vadd.f32 0.0, %v3605
      %v3607 = vpop.f32.mrf.mxu0
      %3608 = vmatprep.mubr.f32.mxu0 0.0
      %3609 = vmatmul.mubr.f32.gmra.mxu0 %v3406
      %v3610 = vpop.f32.mrf.mxu0
      %v3611 = vadd.f32 0.0, %v3610
      %v3612 = vpop.f32.mrf.mxu0
      %3613 = vmatprep.mubr.f32.mxu0 0.0
      %3614 = vmatmul.mubr.f32.gmra.mxu0 %v3409
      %v3615 = vpop.f32.mrf.mxu0
      %v3616 = vadd.f32 0.0, %v3615
      %v3617 = vpop.f32.mrf.mxu0
      %3618 = vmatprep.mubr.f32.mxu0 0.0
      %3619 = vmatmul.mubr.f32.gmra.mxu0 %v3412
      %v3620 = vpop.f32.mrf.mxu0
      %v3621 = vadd.f32 0.0, %v3620
      %v3622 = vpop.f32.mrf.mxu0
      %3623 = vmatprep.mubr.f32.mxu0 0.0
      %3624 = vmatmul.mubr.f32.gmra.mxu0 %v3415
      %v3625 = vpop.f32.mrf.mxu0
      %v3626 = vadd.f32 0.0, %v3625
      %v3627 = vpop.f32.mrf.mxu0
      %3628 = vmatprep.mubr.f32.mxu0 0.0
      %3629 = vmatmul.mubr.f32.gmra.mxu0 %v3418
      %v3630 = vpop.f32.mrf.mxu0
      %v3631 = vadd.f32 0.0, %v3630
      %v3632 = vpop.f32.mrf.mxu0
      %3633 = vmatprep.mubr.f32.mxu0 0.0
      %3634 = vmatmul.mubr.f32.gmra.mxu0 %v3421
      %v3635 = vpop.f32.mrf.mxu0
      %v3636 = vadd.f32 0.0, %v3635
      %v3637 = vpop.f32.mrf.mxu0
      %3638 = vmatprep.mubr.f32.mxu0 0.0
      %3639 = vmatmul.mubr.f32.gmra.mxu0 %v3424
      %v3640 = vpop.f32.mrf.mxu0
      %v3641 = vadd.f32 0.0, %v3640
      %v3642 = vpop.f32.mrf.mxu0
      %3643 = vmatprep.mubr.f32.mxu0 0.0
      %3644 = vmatmul.mubr.f32.gmra.mxu0 %v3427
      %v3645 = vpop.f32.mrf.mxu0
      %v3646 = vadd.f32 0.0, %v3645
      %v3647 = vpop.f32.mrf.mxu0
      %3648 = vmatprep.mubr.f32.mxu0 0.0
      %3649 = vmatmul.mubr.f32.gmra.mxu0 %v3430
      %v3650 = vpop.f32.mrf.mxu0
      %v3651 = vadd.f32 0.0, %v3650
      %v3652 = vpop.f32.mrf.mxu0
      %3653 = vmatprep.mubr.f32.mxu0 0.0
      %3654 = vmatmul.mubr.f32.gmra.mxu0 %v3433
      %v3655 = vpop.f32.mrf.mxu0
      %v3656 = vadd.f32 0.0, %v3655
      %v3657 = vpop.f32.mrf.mxu0
      %3658 = vmatprep.mubr.f32.mxu0 0.0
      %3659 = vmatmul.mubr.f32.gmra.mxu0 %v3436
      %v3660 = vpop.f32.mrf.mxu0
      %v3661 = vadd.f32 0.0, %v3660
      %v3662 = vpop.f32.mrf.mxu0
      %3663 = vmatprep.mubr.f32.mxu0 0.0
      %3664 = vmatmul.mubr.f32.gmra.mxu0 %v3439
      %v3665 = vpop.f32.mrf.mxu0
      %v3666 = vadd.f32 0.0, %v3665
      %v3667 = vpop.f32.mrf.mxu0
      %3668 = vdwg.mxu0
      %v3670 = vsel %vm415, %v3317, 0
      %v3673 = vsel %vm415, %v3318, 0
      %v3676 = vsel %vm415, %v3319, 0
      %v3679 = vsel %vm415, %v3320, 0
      %v3682 = vsel %vm415, %v3321, 0
      %v3685 = vsel %vm415, %v3322, 0
      %v3688 = vsel %vm415, %v3323, 0
      %v3691 = vsel %vm415, %v3324, 0
      %v3694 = vsel %vm415, %v3325, 0
      %v3697 = vsel %vm415, %v3326, 0
      %v3700 = vsel %vm415, %v3327, 0
      %v3703 = vsel %vm415, %v3328, 0
      %v3706 = vsel %vm415, %v3329, 0
      %v3709 = vsel %vm415, %v3330, 0
      %v3712 = vsel %vm415, %v3331, 0
      %v3715 = vsel %vm415, %v3332, 0
      %v3718 = vsel %vm415, %v3333, 0
      %v3721 = vsel %vm415, %v3334, 0
      %v3724 = vsel %vm415, %v3335, 0
      %v3727 = vsel %vm415, %v3336, 0
      %v3730 = vsel %vm415, %v3337, 0
      %v3733 = vsel %vm415, %v3338, 0
      %v3736 = vsel %vm415, %v3339, 0
      %v3739 = vsel %vm415, %v3340, 0
      %v3742 = vsel %vm415, %v3341, 0
      %v3745 = vsel %vm415, %v3342, 0
      %v3748 = vsel %vm415, %v3343, 0
      %v3751 = vsel %vm415, %v3344, 0
      %v3754 = vsel %vm415, %v3345, 0
      %v3757 = vsel %vm415, %v3346, 0
      %v3760 = vsel %vm415, %v3347, 0
      %v3763 = vsel %vm509, %v3348, 0
      %3765 = vmatprep.subr.mxu0 0.0
      %3766 = vmatpush1.msra.mxu0 0.0
      %3767 = vmatprep.subr.mxu0 0.0
      %3768 = vmatpush1.msra.mxu0 0.0
      %3769 = vmatprep.subr.mxu0 0.0
      %3770 = vmatpush1.msra.mxu0 0.0
      %3771 = vmatprep.subr.mxu0 0.0
      %3772 = vmatpush1.msra.mxu0 0.0
      %3773 = vmatprep.subr.mxu0 0.0
      %3774 = vmatpush1.msra.mxu0 0.0
      %3775 = vmatprep.subr.mxu0 0.0
      %3776 = vmatpush1.msra.mxu0 0.0
      %3777 = vmatprep.subr.mxu0 0.0
      %3778 = vmatpush1.msra.mxu0 0.0
      %3779 = vmatprep.subr.mxu0 0.0
      %3780 = vmatpush1.msra.mxu0 0.0
      %3781 = vmatprep.subr.mxu0 0.0
      %3782 = vmatpush1.msra.mxu0 0.0
      %3783 = vmatprep.subr.mxu0 0.0
      %3784 = vmatpush1.msra.mxu0 0.0
      %3785 = vmatprep.subr.mxu0 0.0
      %3786 = vmatpush1.msra.mxu0 0.0
      %3787 = vmatprep.subr.mxu0 0.0
      %3788 = vmatpush1.msra.mxu0 0.0
      %3789 = vmatprep.subr.mxu0 0.0
      %3790 = vmatpush1.msra.mxu0 0.0
      %3791 = vmatprep.subr.mxu0 0.0
      %3792 = vmatpush1.msra.mxu0 0.0
      %3793 = vmatprep.subr.mxu0 0.0
      %3794 = vmatpush1.msra.mxu0 0.0
      %3795 = vmatprep.subr.mxu0 0.0
      %3796 = vmatpush1.msra.mxu0 %v3763
      %3797 = vmatprep.subr.mxu0 0.0
      %3798 = vmatpush2.msra.mxu0 0.0
      %3799 = vmatprep.subr.mxu0 0.0
      %3800 = vmatpush2.msra.mxu0 0.0
      %3801 = vmatprep.subr.mxu0 0.0
      %3802 = vmatpush2.msra.mxu0 0.0
      %3803 = vmatprep.subr.mxu0 0.0
      %3804 = vmatpush2.msra.mxu0 0.0
      %3805 = vmatprep.subr.mxu0 0.0
      %3806 = vmatpush2.msra.mxu0 0.0
      %3807 = vmatprep.subr.mxu0 0.0
      %3808 = vmatpush2.msra.mxu0 0.0
      %3809 = vmatprep.subr.mxu0 0.0
      %3810 = vmatpush2.msra.mxu0 0.0
      %3811 = vmatprep.subr.mxu0 0.0
      %3812 = vmatpush2.msra.mxu0 0.0
      %3813 = vmatprep.subr.mxu0 0.0
      %3814 = vmatpush2.msra.mxu0 0.0
      %3815 = vmatprep.subr.mxu0 0.0
      %3816 = vmatpush2.msra.mxu0 0.0
      %3817 = vmatprep.subr.mxu0 0.0
      %3818 = vmatpush2.msra.mxu0 0.0
      %3819 = vmatprep.subr.mxu0 0.0
      %3820 = vmatpush2.msra.mxu0 0.0
      %3821 = vmatprep.subr.mxu0 0.0
      %3822 = vmatpush2.msra.mxu0 0.0
      %3823 = vmatprep.subr.mxu0 0.0
      %3824 = vmatpush2.msra.mxu0 0.0
      %3825 = vmatprep.subr.mxu0 0.0
      %3826 = vmatpush2.msra.mxu0 0.0
      %3827 = vmatprep.subr.mxu0 0.0
      %3828 = vmatpush2.msra.mxu0 0.0
      %3829 = vmatprep.mubr.f32.mxu0 0.0
      %3830 = vmatmul.mubr.f32.gmra.mxu0 %v3670
      %v3831 = vpop.f32.mrf.mxu0
      %v3832 = vadd.f32 %v3511, %v3831
      %v3833 = vpop.f32.mrf.mxu0
      %3834 = vmatprep.mubr.f32.mxu0 0.0
      %3835 = vmatmul.mubr.f32.gmra.mxu0 %v742
      %v3836 = vpop.f32.mrf.mxu0
      %v3837 = vadd.f32 %v3516, %v3836
      %v3838 = vpop.f32.mrf.mxu0
      %3839 = vmatprep.mubr.f32.mxu0 0.0
      %3840 = vmatmul.mubr.f32.gmra.mxu0 %v3673
      %v3841 = vpop.f32.mrf.mxu0
      %v3842 = vadd.f32 %v3521, %v3841
      %v3843 = vpop.f32.mrf.mxu0
      %3844 = vmatprep.mubr.f32.mxu0 0.0
      %3845 = vmatmul.mubr.f32.gmra.mxu0 %v3676
      %v3846 = vpop.f32.mrf.mxu0
      %v3847 = vadd.f32 %v3526, %v3846
      %v3848 = vpop.f32.mrf.mxu0
      %3849 = vmatprep.mubr.f32.mxu0 0.0
      %3850 = vmatmul.mubr.f32.gmra.mxu0 %v3679
      %v3851 = vpop.f32.mrf.mxu0
      %v3852 = vadd.f32 %v3531, %v3851
      %v3853 = vpop.f32.mrf.mxu0
      %3854 = vmatprep.mubr.f32.mxu0 0.0
      %3855 = vmatmul.mubr.f32.gmra.mxu0 %v3682
      %v3856 = vpop.f32.mrf.mxu0
      %v3857 = vadd.f32 %v3536, %v3856
      %v3858 = vpop.f32.mrf.mxu0
      %3859 = vmatprep.mubr.f32.mxu0 0.0
      %3860 = vmatmul.mubr.f32.gmra.mxu0 %v3685
      %v3861 = vpop.f32.mrf.mxu0
      %v3862 = vadd.f32 %v3541, %v3861
      %v3863 = vpop.f32.mrf.mxu0
      %3864 = vmatprep.mubr.f32.mxu0 0.0
      %3865 = vmatmul.mubr.f32.gmra.mxu0 %v3688
      %v3866 = vpop.f32.mrf.mxu0
      %v3867 = vadd.f32 %v3546, %v3866
      %v3868 = vpop.f32.mrf.mxu0
      %3869 = vmatprep.mubr.f32.mxu0 0.0
      %3870 = vmatmul.mubr.f32.gmra.mxu0 %v3691
      %v3871 = vpop.f32.mrf.mxu0
      %v3872 = vadd.f32 %v3551, %v3871
      %v3873 = vpop.f32.mrf.mxu0
      %3874 = vmatprep.mubr.f32.mxu0 0.0
      %3875 = vmatmul.mubr.f32.gmra.mxu0 %v3694
      %v3876 = vpop.f32.mrf.mxu0
      %v3877 = vadd.f32 %v3556, %v3876
      %v3878 = vpop.f32.mrf.mxu0
      %3879 = vmatprep.mubr.f32.mxu0 0.0
      %3880 = vmatmul.mubr.f32.gmra.mxu0 %v3697
      %v3881 = vpop.f32.mrf.mxu0
      %v3882 = vadd.f32 %v3561, %v3881
      %v3883 = vpop.f32.mrf.mxu0
      %3884 = vmatprep.mubr.f32.mxu0 0.0
      %3885 = vmatmul.mubr.f32.gmra.mxu0 %v3700
      %v3886 = vpop.f32.mrf.mxu0
      %v3887 = vadd.f32 %v3566, %v3886
      %v3888 = vpop.f32.mrf.mxu0
      %3889 = vmatprep.mubr.f32.mxu0 0.0
      %3890 = vmatmul.mubr.f32.gmra.mxu0 %v3703
      %v3891 = vpop.f32.mrf.mxu0
      %v3892 = vadd.f32 %v3571, %v3891
      %v3893 = vpop.f32.mrf.mxu0
      %3894 = vmatprep.mubr.f32.mxu0 0.0
      %3895 = vmatmul.mubr.f32.gmra.mxu0 %v3706
      %v3896 = vpop.f32.mrf.mxu0
      %v3897 = vadd.f32 %v3576, %v3896
      %v3898 = vpop.f32.mrf.mxu0
      %3899 = vmatprep.mubr.f32.mxu0 0.0
      %3900 = vmatmul.mubr.f32.gmra.mxu0 %v3709
      %v3901 = vpop.f32.mrf.mxu0
      %v3902 = vadd.f32 %v3581, %v3901
      %v3903 = vpop.f32.mrf.mxu0
      %3904 = vmatprep.mubr.f32.mxu0 0.0
      %3905 = vmatmul.mubr.f32.gmra.mxu0 %v3712
      %v3906 = vpop.f32.mrf.mxu0
      %v3907 = vadd.f32 %v3586, %v3906
      %v3908 = vpop.f32.mrf.mxu0
      %3909 = vmatprep.mubr.f32.mxu0 0.0
      %3910 = vmatmul.mubr.f32.gmra.mxu0 %v3715
      %v3911 = vpop.f32.mrf.mxu0
      %v3912 = vadd.f32 %v3591, %v3911
      %v3913 = vpop.f32.mrf.mxu0
      %3914 = vmatprep.mubr.f32.mxu0 0.0
      %3915 = vmatmul.mubr.f32.gmra.mxu0 %v3718
      %v3916 = vpop.f32.mrf.mxu0
      %v3917 = vadd.f32 %v3596, %v3916
      %v3918 = vpop.f32.mrf.mxu0
      %3919 = vmatprep.mubr.f32.mxu0 0.0
      %3920 = vmatmul.mubr.f32.gmra.mxu0 %v3721
      %v3921 = vpop.f32.mrf.mxu0
      %v3922 = vadd.f32 %v3601, %v3921
      %v3923 = vpop.f32.mrf.mxu0
      %3924 = vmatprep.mubr.f32.mxu0 0.0
      %3925 = vmatmul.mubr.f32.gmra.mxu0 %v3724
      %v3926 = vpop.f32.mrf.mxu0
      %v3927 = vadd.f32 %v3606, %v3926
      %v3928 = vpop.f32.mrf.mxu0
      %3929 = vmatprep.mubr.f32.mxu0 0.0
      %3930 = vmatmul.mubr.f32.gmra.mxu0 %v3727
      %v3931 = vpop.f32.mrf.mxu0
      %v3932 = vadd.f32 %v3611, %v3931
      %v3933 = vpop.f32.mrf.mxu0
      %3934 = vmatprep.mubr.f32.mxu0 0.0
      %3935 = vmatmul.mubr.f32.gmra.mxu0 %v3730
      %v3936 = vpop.f32.mrf.mxu0
      %v3937 = vadd.f32 %v3616, %v3936
      %v3938 = vpop.f32.mrf.mxu0
      %3939 = vmatprep.mubr.f32.mxu0 0.0
      %3940 = vmatmul.mubr.f32.gmra.mxu0 %v3733
      %v3941 = vpop.f32.mrf.mxu0
      %v3942 = vadd.f32 %v3621, %v3941
      %v3943 = vpop.f32.mrf.mxu0
      %3944 = vmatprep.mubr.f32.mxu0 0.0
      %3945 = vmatmul.mubr.f32.gmra.mxu0 %v3736
      %v3946 = vpop.f32.mrf.mxu0
      %v3947 = vadd.f32 %v3626, %v3946
      %v3948 = vpop.f32.mrf.mxu0
      %3949 = vmatprep.mubr.f32.mxu0 0.0
      %3950 = vmatmul.mubr.f32.gmra.mxu0 %v3739
      %v3951 = vpop.f32.mrf.mxu0
      %v3952 = vadd.f32 %v3631, %v3951
      %v3953 = vpop.f32.mrf.mxu0
      %3954 = vmatprep.mubr.f32.mxu0 0.0
      %3955 = vmatmul.mubr.f32.gmra.mxu0 %v3742
      %v3956 = vpop.f32.mrf.mxu0
      %v3957 = vadd.f32 %v3636, %v3956
      %v3958 = vpop.f32.mrf.mxu0
      %3959 = vmatprep.mubr.f32.mxu0 0.0
      %3960 = vmatmul.mubr.f32.gmra.mxu0 %v3745
      %v3961 = vpop.f32.mrf.mxu0
      %v3962 = vadd.f32 %v3641, %v3961
      %v3963 = vpop.f32.mrf.mxu0
      %3964 = vmatprep.mubr.f32.mxu0 0.0
      %3965 = vmatmul.mubr.f32.gmra.mxu0 %v3748
      %v3966 = vpop.f32.mrf.mxu0
      %v3967 = vadd.f32 %v3646, %v3966
      %v3968 = vpop.f32.mrf.mxu0
      %3969 = vmatprep.mubr.f32.mxu0 0.0
      %3970 = vmatmul.mubr.f32.gmra.mxu0 %v3751
      %v3971 = vpop.f32.mrf.mxu0
      %v3972 = vadd.f32 %v3651, %v3971
      %v3973 = vpop.f32.mrf.mxu0
      %3974 = vmatprep.mubr.f32.mxu0 0.0
      %3975 = vmatmul.mubr.f32.gmra.mxu0 %v3754
      %v3976 = vpop.f32.mrf.mxu0
      %v3977 = vadd.f32 %v3656, %v3976
      %v3978 = vpop.f32.mrf.mxu0
      %3979 = vmatprep.mubr.f32.mxu0 0.0
      %3980 = vmatmul.mubr.f32.gmra.mxu0 %v3757
      %v3981 = vpop.f32.mrf.mxu0
      %v3982 = vadd.f32 %v3661, %v3981
      %v3983 = vpop.f32.mrf.mxu0
      %3984 = vmatprep.mubr.f32.mxu0 0.0
      %3985 = vmatmul.mubr.f32.gmra.mxu0 %v3760
      %v3986 = vpop.f32.mrf.mxu0
      %v3987 = vadd.f32 %v3666, %v3986
      %v3988 = vpop.f32.mrf.mxu0
      %3989 = vdwg.mxu0
      %v3990 = vrot.slane %v3224, 1
      %v3991 = vrot.slane %v3225, 1
      %v3992 = vrot.slane %v3226, 1
      %v3993 = vrot.slane %v3227, 1
      %v3994 = vrot.slane %v3228, 1
      %v3995 = vrot.slane %v3229, 1
      %v3996 = vrot.slane %v3230, 1
      %v3997 = vrot.slane %v3231, 1
      %v3998 = vrot.slane %v3232, 1
      %v3999 = vrot.slane %v3233, 1
      %v4000 = vrot.slane %v3234, 1
      %v4001 = vrot.slane %v3235, 1
      %v4002 = vrot.slane %v3236, 1
      %v4003 = vrot.slane %v3237, 1
      %v4004 = vrot.slane %v3238, 1
      %v4005 = vrot.slane %v3239, 1
      %v4006 = vrot.slane %v3240, 1
      %v4007 = vrot.slane %v3241, 1
      %v4008 = vrot.slane %v3242, 1
      %v4009 = vrot.slane %v3243, 1
      %v4010 = vrot.slane %v3244, 1
      %v4011 = vrot.slane %v3245, 1
      %v4012 = vrot.slane %v3246, 1
      %v4013 = vrot.slane %v3247, 1
      %v4014 = vrot.slane %v3248, 1
      %v4015 = vrot.slane %v3249, 1
      %v4016 = vrot.slane %v3250, 1
      %v4017 = vrot.slane %v3251, 1
      %v4018 = vrot.slane %v3252, 1
      %v4019 = vrot.slane %v3253, 1
      %v4020 = vsel %vm1092, %v4018, %v4019
      %v4021 = vsel %vm1092, %v4017, %v4018
      %v4022 = vsel %vm1092, %v4016, %v4017
      %v4023 = vsel %vm1092, %v4015, %v4016
      %v4024 = vsel %vm1092, %v4014, %v4015
      %v4025 = vsel %vm1092, %v4013, %v4014
      %v4026 = vsel %vm1092, %v4012, %v4013
      %v4027 = vsel %vm1092, %v4011, %v4012
      %v4028 = vsel %vm1092, %v4010, %v4011
      %v4029 = vsel %vm1092, %v4009, %v4010
      %v4030 = vsel %vm1092, %v4008, %v4009
      %v4031 = vsel %vm1092, %v4007, %v4008
      %v4032 = vsel %vm1092, %v4006, %v4007
      %v4033 = vsel %vm1092, %v4005, %v4006
      %v4034 = vsel %vm1092, %v4004, %v4005
      %v4035 = vsel %vm1092, %v4003, %v4004
      %v4036 = vsel %vm1092, %v4002, %v4003
      %v4037 = vsel %vm1092, %v4001, %v4002
      %v4038 = vsel %vm1092, %v4000, %v4001
      %v4039 = vsel %vm1092, %v3999, %v4000
      %v4040 = vsel %vm1092, %v3998, %v3999
      %v4041 = vsel %vm1092, %v3997, %v3998
      %v4042 = vsel %vm1092, %v3996, %v3997
      %v4043 = vsel %vm1092, %v3995, %v3996
      %v4044 = vsel %vm1092, %v3994, %v3995
      %v4045 = vsel %vm1092, %v3993, %v3994
      %v4046 = vsel %vm1092, %v3992, %v3993
      %v4047 = vsel %vm1092, %v3991, %v3992
      %v4048 = vsel %vm1092, %v3990, %v3991
      %v4049 = vsel %vm1092, 0.0, %v3990
      %v4050 = vsel %vm1092, %v4019, 0.0
      %v4051 = vsel %vm285, %v4049, 0.0
      %v4052 = vsel %vm284, %v4048, 0.0
      %v4053 = vsel %vm285, %v4047, 0.0
      %v4054 = vsel %vm284, %v4046, 0.0
      %v4055 = vsel %vm285, %v4045, 0.0
      %v4056 = vsel %vm284, %v4044, 0.0
      %v4057 = vsel %vm285, %v4043, 0.0
      %v4058 = vsel %vm284, %v4042, 0.0
      %v4059 = vsel %vm285, %v4041, 0.0
      %v4060 = vsel %vm284, %v4040, 0.0
      %v4061 = vsel %vm285, %v4039, 0.0
      %v4062 = vsel %vm284, %v4038, 0.0
      %v4063 = vsel %vm285, %v4037, 0.0
      %v4064 = vsel %vm284, %v4036, 0.0
      %v4065 = vsel %vm285, %v4035, 0.0
      %v4066 = vsel %vm284, %v4034, 0.0
      %v4067 = vsel %vm285, %v4033, 0.0
      %v4068 = vsel %vm284, %v4032, 0.0
      %v4069 = vsel %vm285, %v4031, 0.0
      %v4070 = vsel %vm284, %v4030, 0.0
      %v4071 = vsel %vm285, %v4029, 0.0
      %v4072 = vsel %vm284, %v4028, 0.0
      %v4073 = vsel %vm285, %v4027, 0.0
      %v4074 = vsel %vm284, %v4026, 0.0
      %v4075 = vsel %vm285, %v4025, 0.0
      %v4076 = vsel %vm284, %v4024, 0.0
      %v4077 = vsel %vm285, %v4023, 0.0
      %v4078 = vsel %vm284, %v4022, 0.0
      %v4079 = vsel %vm285, %v4021, 0.0
      %v4080 = vsel %vm284, %v4020, 0.0
      %v4081 = vsel %vm285, %v4050, 0.0
      %s4082 = scalar_lea.vmem %s4, 8
      %v4083 = vld [vmem:[%s4082] sm:$0xf]
      %v4085 = vsel %vm415, %v4051, 0
      %v4088 = vsel %vm415, %v4052, 0
      %v4091 = vsel %vm415, %v4053, 0
      %v4094 = vsel %vm415, %v4054, 0
      %v4097 = vsel %vm415, %v4055, 0
      %v4100 = vsel %vm415, %v4056, 0
      %v4103 = vsel %vm415, %v4057, 0
      %v4106 = vsel %vm415, %v4058, 0
      %v4109 = vsel %vm415, %v4059, 0
      %v4112 = vsel %vm415, %v4060, 0
      %v4115 = vsel %vm415, %v4061, 0
      %v4118 = vsel %vm415, %v4062, 0
      %v4121 = vsel %vm415, %v4063, 0
      %v4124 = vsel %vm415, %v4064, 0
      %v4127 = vsel %vm415, %v4065, 0
      %v4130 = vsel %vm415, %v4066, 0
      %v4133 = vsel %vm415, %v4067, 0
      %v4136 = vsel %vm415, %v4068, 0
      %v4139 = vsel %vm415, %v4069, 0
      %v4142 = vsel %vm415, %v4070, 0
      %v4145 = vsel %vm415, %v4071, 0
      %v4148 = vsel %vm415, %v4072, 0
      %v4151 = vsel %vm415, %v4073, 0
      %v4154 = vsel %vm415, %v4074, 0
      %v4157 = vsel %vm415, %v4075, 0
      %v4160 = vsel %vm415, %v4076, 0
      %v4163 = vsel %vm415, %v4077, 0
      %v4166 = vsel %vm415, %v4078, 0
      %v4169 = vsel %vm415, %v4079, 0
      %v4172 = vsel %vm415, %v4080, 0
      %v4175 = vsel %vm415, %v4081, 0
      %v4178 = vsel %vm509, %v4083, 0
      %4180 = vmatprep.subr.mxu0 0.0
      %4181 = vmatpush1.msra.mxu0 0.0
      %4182 = vmatprep.subr.mxu0 0.0
      %4183 = vmatpush1.msra.mxu0 0.0
      %4184 = vmatprep.subr.mxu0 0.0
      %4185 = vmatpush1.msra.mxu0 0.0
      %4186 = vmatprep.subr.mxu0 0.0
      %4187 = vmatpush1.msra.mxu0 0.0
      %4188 = vmatprep.subr.mxu0 0.0
      %4189 = vmatpush1.msra.mxu0 0.0
      %4190 = vmatprep.subr.mxu0 0.0
      %4191 = vmatpush1.msra.mxu0 0.0
      %4192 = vmatprep.subr.mxu0 0.0
      %4193 = vmatpush1.msra.mxu0 0.0
      %4194 = vmatprep.subr.mxu0 0.0
      %4195 = vmatpush1.msra.mxu0 0.0
      %4196 = vmatprep.subr.mxu0 0.0
      %4197 = vmatpush1.msra.mxu0 0.0
      %4198 = vmatprep.subr.mxu0 0.0
      %4199 = vmatpush1.msra.mxu0 0.0
      %4200 = vmatprep.subr.mxu0 0.0
      %4201 = vmatpush1.msra.mxu0 0.0
      %4202 = vmatprep.subr.mxu0 0.0
      %4203 = vmatpush1.msra.mxu0 0.0
      %4204 = vmatprep.subr.mxu0 0.0
      %4205 = vmatpush1.msra.mxu0 0.0
      %4206 = vmatprep.subr.mxu0 0.0
      %4207 = vmatpush1.msra.mxu0 0.0
      %4208 = vmatprep.subr.mxu0 0.0
      %4209 = vmatpush1.msra.mxu0 0.0
      %4210 = vmatprep.subr.mxu0 0.0
      %4211 = vmatpush1.msra.mxu0 %v4178
      %4212 = vmatprep.subr.mxu0 0.0
      %4213 = vmatpush2.msra.mxu0 0.0
      %4214 = vmatprep.subr.mxu0 0.0
      %4215 = vmatpush2.msra.mxu0 0.0
      %4216 = vmatprep.subr.mxu0 0.0
      %4217 = vmatpush2.msra.mxu0 0.0
      %4218 = vmatprep.subr.mxu0 0.0
      %4219 = vmatpush2.msra.mxu0 0.0
      %4220 = vmatprep.subr.mxu0 0.0
      %4221 = vmatpush2.msra.mxu0 0.0
      %4222 = vmatprep.subr.mxu0 0.0
      %4223 = vmatpush2.msra.mxu0 0.0
      %4224 = vmatprep.subr.mxu0 0.0
      %4225 = vmatpush2.msra.mxu0 0.0
      %4226 = vmatprep.subr.mxu0 0.0
      %4227 = vmatpush2.msra.mxu0 0.0
      %4228 = vmatprep.subr.mxu0 0.0
      %4229 = vmatpush2.msra.mxu0 0.0
      %4230 = vmatprep.subr.mxu0 0.0
      %4231 = vmatpush2.msra.mxu0 0.0
      %4232 = vmatprep.subr.mxu0 0.0
      %4233 = vmatpush2.msra.mxu0 0.0
      %4234 = vmatprep.subr.mxu0 0.0
      %4235 = vmatpush2.msra.mxu0 0.0
      %4236 = vmatprep.subr.mxu0 0.0
      %4237 = vmatpush2.msra.mxu0 0.0
      %4238 = vmatprep.subr.mxu0 0.0
      %4239 = vmatpush2.msra.mxu0 0.0
      %4240 = vmatprep.subr.mxu0 0.0
      %4241 = vmatpush2.msra.mxu0 0.0
      %4242 = vmatprep.subr.mxu0 0.0
      %4243 = vmatpush2.msra.mxu0 0.0
      %4244 = vmatprep.mubr.f32.mxu0 0.0
      %4245 = vmatmul.mubr.f32.gmra.mxu0 %v1159
      %v4246 = vpop.f32.mrf.mxu0
      %v4247 = vadd.f32 0.0, %v4246
      %v4248 = vpop.f32.mrf.mxu0
      %4249 = vmatprep.mubr.f32.mxu0 0.0
      %4250 = vmatmul.mubr.f32.gmra.mxu0 %v4085
      %v4251 = vpop.f32.mrf.mxu0
      %v4252 = vadd.f32 0.0, %v4251
      %v4253 = vpop.f32.mrf.mxu0
      %4254 = vmatprep.mubr.f32.mxu0 0.0
      %4255 = vmatmul.mubr.f32.gmra.mxu0 %v4088
      %v4256 = vpop.f32.mrf.mxu0
      %v4257 = vadd.f32 0.0, %v4256
      %v4258 = vpop.f32.mrf.mxu0
      %4259 = vmatprep.mubr.f32.mxu0 0.0
      %4260 = vmatmul.mubr.f32.gmra.mxu0 %v4091
      %v4261 = vpop.f32.mrf.mxu0
      %v4262 = vadd.f32 0.0, %v4261
      %v4263 = vpop.f32.mrf.mxu0
      %4264 = vmatprep.mubr.f32.mxu0 0.0
      %4265 = vmatmul.mubr.f32.gmra.mxu0 %v4094
      %v4266 = vpop.f32.mrf.mxu0
      %v4267 = vadd.f32 0.0, %v4266
      %v4268 = vpop.f32.mrf.mxu0
      %4269 = vmatprep.mubr.f32.mxu0 0.0
      %4270 = vmatmul.mubr.f32.gmra.mxu0 %v4097
      %v4271 = vpop.f32.mrf.mxu0
      %v4272 = vadd.f32 0.0, %v4271
      %v4273 = vpop.f32.mrf.mxu0
      %4274 = vmatprep.mubr.f32.mxu0 0.0
      %4275 = vmatmul.mubr.f32.gmra.mxu0 %v4100
      %v4276 = vpop.f32.mrf.mxu0
      %v4277 = vadd.f32 0.0, %v4276
      %v4278 = vpop.f32.mrf.mxu0
      %4279 = vmatprep.mubr.f32.mxu0 0.0
      %4280 = vmatmul.mubr.f32.gmra.mxu0 %v4103
      %v4281 = vpop.f32.mrf.mxu0
      %v4282 = vadd.f32 0.0, %v4281
      %v4283 = vpop.f32.mrf.mxu0
      %4284 = vmatprep.mubr.f32.mxu0 0.0
      %4285 = vmatmul.mubr.f32.gmra.mxu0 %v4106
      %v4286 = vpop.f32.mrf.mxu0
      %v4287 = vadd.f32 0.0, %v4286
      %v4288 = vpop.f32.mrf.mxu0
      %4289 = vmatprep.mubr.f32.mxu0 0.0
      %4290 = vmatmul.mubr.f32.gmra.mxu0 %v4109
      %v4291 = vpop.f32.mrf.mxu0
      %v4292 = vadd.f32 0.0, %v4291
      %v4293 = vpop.f32.mrf.mxu0
      %4294 = vmatprep.mubr.f32.mxu0 0.0
      %4295 = vmatmul.mubr.f32.gmra.mxu0 %v4112
      %v4296 = vpop.f32.mrf.mxu0
      %v4297 = vadd.f32 0.0, %v4296
      %v4298 = vpop.f32.mrf.mxu0
      %4299 = vmatprep.mubr.f32.mxu0 0.0
      %4300 = vmatmul.mubr.f32.gmra.mxu0 %v4115
      %v4301 = vpop.f32.mrf.mxu0
      %v4302 = vadd.f32 0.0, %v4301
      %v4303 = vpop.f32.mrf.mxu0
      %4304 = vmatprep.mubr.f32.mxu0 0.0
      %4305 = vmatmul.mubr.f32.gmra.mxu0 %v4118
      %v4306 = vpop.f32.mrf.mxu0
      %v4307 = vadd.f32 0.0, %v4306
      %v4308 = vpop.f32.mrf.mxu0
      %4309 = vmatprep.mubr.f32.mxu0 0.0
      %4310 = vmatmul.mubr.f32.gmra.mxu0 %v4121
      %v4311 = vpop.f32.mrf.mxu0
      %v4312 = vadd.f32 0.0, %v4311
      %v4313 = vpop.f32.mrf.mxu0
      %4314 = vmatprep.mubr.f32.mxu0 0.0
      %4315 = vmatmul.mubr.f32.gmra.mxu0 %v4124
      %v4316 = vpop.f32.mrf.mxu0
      %v4317 = vadd.f32 0.0, %v4316
      %v4318 = vpop.f32.mrf.mxu0
      %4319 = vmatprep.mubr.f32.mxu0 0.0
      %4320 = vmatmul.mubr.f32.gmra.mxu0 %v4127
      %v4321 = vpop.f32.mrf.mxu0
      %v4322 = vadd.f32 0.0, %v4321
      %v4323 = vpop.f32.mrf.mxu0
      %4324 = vmatprep.mubr.f32.mxu0 0.0
      %4325 = vmatmul.mubr.f32.gmra.mxu0 %v4130
      %v4326 = vpop.f32.mrf.mxu0
      %v4327 = vadd.f32 0.0, %v4326
      %v4328 = vpop.f32.mrf.mxu0
      %4329 = vmatprep.mubr.f32.mxu0 0.0
      %4330 = vmatmul.mubr.f32.gmra.mxu0 %v4133
      %v4331 = vpop.f32.mrf.mxu0
      %v4332 = vadd.f32 0.0, %v4331
      %v4333 = vpop.f32.mrf.mxu0
      %4334 = vmatprep.mubr.f32.mxu0 0.0
      %4335 = vmatmul.mubr.f32.gmra.mxu0 %v4136
      %v4336 = vpop.f32.mrf.mxu0
      %v4337 = vadd.f32 0.0, %v4336
      %v4338 = vpop.f32.mrf.mxu0
      %4339 = vmatprep.mubr.f32.mxu0 0.0
      %4340 = vmatmul.mubr.f32.gmra.mxu0 %v4139
      %v4341 = vpop.f32.mrf.mxu0
      %v4342 = vadd.f32 0.0, %v4341
      %v4343 = vpop.f32.mrf.mxu0
      %4344 = vmatprep.mubr.f32.mxu0 0.0
      %4345 = vmatmul.mubr.f32.gmra.mxu0 %v4142
      %v4346 = vpop.f32.mrf.mxu0
      %v4347 = vadd.f32 0.0, %v4346
      %v4348 = vpop.f32.mrf.mxu0
      %4349 = vmatprep.mubr.f32.mxu0 0.0
      %4350 = vmatmul.mubr.f32.gmra.mxu0 %v4145
      %v4351 = vpop.f32.mrf.mxu0
      %v4352 = vadd.f32 0.0, %v4351
      %v4353 = vpop.f32.mrf.mxu0
      %4354 = vmatprep.mubr.f32.mxu0 0.0
      %4355 = vmatmul.mubr.f32.gmra.mxu0 %v4148
      %v4356 = vpop.f32.mrf.mxu0
      %v4357 = vadd.f32 0.0, %v4356
      %v4358 = vpop.f32.mrf.mxu0
      %4359 = vmatprep.mubr.f32.mxu0 0.0
      %4360 = vmatmul.mubr.f32.gmra.mxu0 %v4151
      %v4361 = vpop.f32.mrf.mxu0
      %v4362 = vadd.f32 0.0, %v4361
      %v4363 = vpop.f32.mrf.mxu0
      %4364 = vmatprep.mubr.f32.mxu0 0.0
      %4365 = vmatmul.mubr.f32.gmra.mxu0 %v4154
      %v4366 = vpop.f32.mrf.mxu0
      %v4367 = vadd.f32 0.0, %v4366
      %v4368 = vpop.f32.mrf.mxu0
      %4369 = vmatprep.mubr.f32.mxu0 0.0
      %4370 = vmatmul.mubr.f32.gmra.mxu0 %v4157
      %v4371 = vpop.f32.mrf.mxu0
      %v4372 = vadd.f32 0.0, %v4371
      %v4373 = vpop.f32.mrf.mxu0
      %4374 = vmatprep.mubr.f32.mxu0 0.0
      %4375 = vmatmul.mubr.f32.gmra.mxu0 %v4160
      %v4376 = vpop.f32.mrf.mxu0
      %v4377 = vadd.f32 0.0, %v4376
      %v4378 = vpop.f32.mrf.mxu0
      %4379 = vmatprep.mubr.f32.mxu0 0.0
      %4380 = vmatmul.mubr.f32.gmra.mxu0 %v4163
      %v4381 = vpop.f32.mrf.mxu0
      %v4382 = vadd.f32 0.0, %v4381
      %v4383 = vpop.f32.mrf.mxu0
      %4384 = vmatprep.mubr.f32.mxu0 0.0
      %4385 = vmatmul.mubr.f32.gmra.mxu0 %v4166
      %v4386 = vpop.f32.mrf.mxu0
      %v4387 = vadd.f32 0.0, %v4386
      %v4388 = vpop.f32.mrf.mxu0
      %4389 = vmatprep.mubr.f32.mxu0 0.0
      %4390 = vmatmul.mubr.f32.gmra.mxu0 %v4169
      %v4391 = vpop.f32.mrf.mxu0
      %v4392 = vadd.f32 0.0, %v4391
      %v4393 = vpop.f32.mrf.mxu0
      %4394 = vmatprep.mubr.f32.mxu0 0.0
      %4395 = vmatmul.mubr.f32.gmra.mxu0 %v4172
      %v4396 = vpop.f32.mrf.mxu0
      %v4397 = vadd.f32 0.0, %v4396
      %v4398 = vpop.f32.mrf.mxu0
      %4399 = vmatprep.mubr.f32.mxu0 0.0
      %4400 = vmatmul.mubr.f32.gmra.mxu0 %v4175
      %v4401 = vpop.f32.mrf.mxu0
      %v4402 = vadd.f32 0.0, %v4401
      %v4403 = vpop.f32.mrf.mxu0
      %4404 = vdwg.mxu0
      %v4405 = vadd.f32 %v3832, %v4247
      %v4406 = vadd.f32 %v3837, %v4252
      %v4407 = vadd.f32 %v3842, %v4257
      %v4408 = vadd.f32 %v3847, %v4262
      %v4409 = vadd.f32 %v3852, %v4267
      %v4410 = vadd.f32 %v3857, %v4272
      %v4411 = vadd.f32 %v3862, %v4277
      %v4412 = vadd.f32 %v3867, %v4282
      %v4413 = vadd.f32 %v3872, %v4287
      %v4414 = vadd.f32 %v3877, %v4292
      %v4415 = vadd.f32 %v3882, %v4297
      %v4416 = vadd.f32 %v3887, %v4302
      %v4417 = vadd.f32 %v3892, %v4307
      %v4418 = vadd.f32 %v3897, %v4312
      %v4419 = vadd.f32 %v3902, %v4317
      %v4420 = vadd.f32 %v3907, %v4322
      %v4421 = vadd.f32 %v3912, %v4327
      %v4422 = vadd.f32 %v3917, %v4332
      %v4423 = vadd.f32 %v3922, %v4337
      %v4424 = vadd.f32 %v3927, %v4342
      %v4425 = vadd.f32 %v3932, %v4347
      %v4426 = vadd.f32 %v3937, %v4352
      %v4427 = vadd.f32 %v3942, %v4357
      %v4428 = vadd.f32 %v3947, %v4362
      %v4429 = vadd.f32 %v3952, %v4367
      %v4430 = vadd.f32 %v3957, %v4372
      %v4431 = vadd.f32 %v3962, %v4377
      %v4432 = vadd.f32 %v3967, %v4382
      %v4433 = vadd.f32 %v3972, %v4387
      %v4434 = vadd.f32 %v3977, %v4392
      %v4435 = vadd.f32 %v3982, %v4397
      %v4436 = vadd.f32 %v3987, %v4402
      %v4437 = vrot.slane %v3254, 7
      %v4438 = vrot.slane %v3255, 7
      %v4439 = vsel %vm348, %v4437, %v4438
      %v4440 = vsel %vm348, %v3285, %v4437
      %v4441 = vsel %vm348, %v4438, %v3256
      %v4442 = vsel %vm282, %v4441, 0.0
      %v4443 = vsel %vm282, %v4440, 0.0
      %v4444 = vsel %vm283, %v4439, 0.0
      %s4445 = scalar_lea.vmem %s4, 12
      %v4446 = vld [vmem:[%s4445] sm:$0xf]
      %v4448 = vsel %vm415, %v4442, 0
      %v4451 = vsel %vm415, %v4443, 0
      %v4454 = vsel %vm415, %v4444, 0
      %v4457 = vsel %vm509, %v4446, 0
      %4459 = vmatprep.subr.mxu0 0.0
      %4460 = vmatpush1.msra.mxu0 0.0
      %4461 = vmatprep.subr.mxu0 0.0
      %4462 = vmatpush1.msra.mxu0 0.0
      %4463 = vmatprep.subr.mxu0 0.0
      %4464 = vmatpush1.msra.mxu0 0.0
      %4465 = vmatprep.subr.mxu0 0.0
      %4466 = vmatpush1.msra.mxu0 0.0
      %4467 = vmatprep.subr.mxu0 0.0
      %4468 = vmatpush1.msra.mxu0 0.0
      %4469 = vmatprep.subr.mxu0 0.0
      %4470 = vmatpush1.msra.mxu0 0.0
      %4471 = vmatprep.subr.mxu0 0.0
      %4472 = vmatpush1.msra.mxu0 0.0
      %4473 = vmatprep.subr.mxu0 0.0
      %4474 = vmatpush1.msra.mxu0 0.0
      %4475 = vmatprep.subr.mxu0 0.0
      %4476 = vmatpush1.msra.mxu0 0.0
      %4477 = vmatprep.subr.mxu0 0.0
      %4478 = vmatpush1.msra.mxu0 0.0
      %4479 = vmatprep.subr.mxu0 0.0
      %4480 = vmatpush1.msra.mxu0 0.0
      %4481 = vmatprep.subr.mxu0 0.0
      %4482 = vmatpush1.msra.mxu0 0.0
      %4483 = vmatprep.subr.mxu0 0.0
      %4484 = vmatpush1.msra.mxu0 0.0
      %4485 = vmatprep.subr.mxu0 0.0
      %4486 = vmatpush1.msra.mxu0 0.0
      %4487 = vmatprep.subr.mxu0 0.0
      %4488 = vmatpush1.msra.mxu0 0.0
      %4489 = vmatprep.subr.mxu0 0.0
      %4490 = vmatpush1.msra.mxu0 %v4457
      %4491 = vmatprep.subr.mxu0 0.0
      %4492 = vmatpush2.msra.mxu0 0.0
      %4493 = vmatprep.subr.mxu0 0.0
      %4494 = vmatpush2.msra.mxu0 0.0
      %4495 = vmatprep.subr.mxu0 0.0
      %4496 = vmatpush2.msra.mxu0 0.0
      %4497 = vmatprep.subr.mxu0 0.0
      %4498 = vmatpush2.msra.mxu0 0.0
      %4499 = vmatprep.subr.mxu0 0.0
      %4500 = vmatpush2.msra.mxu0 0.0
      %4501 = vmatprep.subr.mxu0 0.0
      %4502 = vmatpush2.msra.mxu0 0.0
      %4503 = vmatprep.subr.mxu0 0.0
      %4504 = vmatpush2.msra.mxu0 0.0
      %4505 = vmatprep.subr.mxu0 0.0
      %4506 = vmatpush2.msra.mxu0 0.0
      %4507 = vmatprep.subr.mxu0 0.0
      %4508 = vmatpush2.msra.mxu0 0.0
      %4509 = vmatprep.subr.mxu0 0.0
      %4510 = vmatpush2.msra.mxu0 0.0
      %4511 = vmatprep.subr.mxu0 0.0
      %4512 = vmatpush2.msra.mxu0 0.0
      %4513 = vmatprep.subr.mxu0 0.0
      %4514 = vmatpush2.msra.mxu0 0.0
      %4515 = vmatprep.subr.mxu0 0.0
      %4516 = vmatpush2.msra.mxu0 0.0
      %4517 = vmatprep.subr.mxu0 0.0
      %4518 = vmatpush2.msra.mxu0 0.0
      %4519 = vmatprep.subr.mxu0 0.0
      %4520 = vmatpush2.msra.mxu0 0.0
      %4521 = vmatprep.subr.mxu0 0.0
      %4522 = vmatpush2.msra.mxu0 0.0
      %4523 = vmatprep.mubr.f32.mxu0 0.0
      %4524 = vmatmul.mubr.f32.gmra.mxu0 %v4448
      %v4525 = vpop.f32.mrf.mxu0
      %v4526 = vadd.f32 0.0, %v4525
      %v4527 = vpop.f32.mrf.mxu0
      %4528 = vmatprep.mubr.f32.mxu0 0.0
      %4529 = vmatmul.mubr.f32.gmra.mxu0 %v3676
      %v4530 = vpop.f32.mrf.mxu0
      %v4531 = vadd.f32 0.0, %v4530
      %v4532 = vpop.f32.mrf.mxu0
      %4533 = vmatprep.mubr.f32.mxu0 0.0
      %4534 = vmatmul.mubr.f32.gmra.mxu0 %v3679
      %v4535 = vpop.f32.mrf.mxu0
      %v4536 = vadd.f32 0.0, %v4535
      %v4537 = vpop.f32.mrf.mxu0
      %4538 = vmatprep.mubr.f32.mxu0 0.0
      %4539 = vmatmul.mubr.f32.gmra.mxu0 %v3682
      %v4540 = vpop.f32.mrf.mxu0
      %v4541 = vadd.f32 0.0, %v4540
      %v4542 = vpop.f32.mrf.mxu0
      %4543 = vmatprep.mubr.f32.mxu0 0.0
      %4544 = vmatmul.mubr.f32.gmra.mxu0 %v3685
      %v4545 = vpop.f32.mrf.mxu0
      %v4546 = vadd.f32 0.0, %v4545
      %v4547 = vpop.f32.mrf.mxu0
      %4548 = vmatprep.mubr.f32.mxu0 0.0
      %4549 = vmatmul.mubr.f32.gmra.mxu0 %v3688
      %v4550 = vpop.f32.mrf.mxu0
      %v4551 = vadd.f32 0.0, %v4550
      %v4552 = vpop.f32.mrf.mxu0
      %4553 = vmatprep.mubr.f32.mxu0 0.0
      %4554 = vmatmul.mubr.f32.gmra.mxu0 %v3691
      %v4555 = vpop.f32.mrf.mxu0
      %v4556 = vadd.f32 0.0, %v4555
      %v4557 = vpop.f32.mrf.mxu0
      %4558 = vmatprep.mubr.f32.mxu0 0.0
      %4559 = vmatmul.mubr.f32.gmra.mxu0 %v3694
      %v4560 = vpop.f32.mrf.mxu0
      %v4561 = vadd.f32 0.0, %v4560
      %v4562 = vpop.f32.mrf.mxu0
      %4563 = vmatprep.mubr.f32.mxu0 0.0
      %4564 = vmatmul.mubr.f32.gmra.mxu0 %v3697
      %v4565 = vpop.f32.mrf.mxu0
      %v4566 = vadd.f32 0.0, %v4565
      %v4567 = vpop.f32.mrf.mxu0
      %4568 = vmatprep.mubr.f32.mxu0 0.0
      %4569 = vmatmul.mubr.f32.gmra.mxu0 %v3700
      %v4570 = vpop.f32.mrf.mxu0
      %v4571 = vadd.f32 0.0, %v4570
      %v4572 = vpop.f32.mrf.mxu0
      %4573 = vmatprep.mubr.f32.mxu0 0.0
      %4574 = vmatmul.mubr.f32.gmra.mxu0 %v3703
      %v4575 = vpop.f32.mrf.mxu0
      %v4576 = vadd.f32 0.0, %v4575
      %v4577 = vpop.f32.mrf.mxu0
      %4578 = vmatprep.mubr.f32.mxu0 0.0
      %4579 = vmatmul.mubr.f32.gmra.mxu0 %v3706
      %v4580 = vpop.f32.mrf.mxu0
      %v4581 = vadd.f32 0.0, %v4580
      %v4582 = vpop.f32.mrf.mxu0
      %4583 = vmatprep.mubr.f32.mxu0 0.0
      %4584 = vmatmul.mubr.f32.gmra.mxu0 %v3709
      %v4585 = vpop.f32.mrf.mxu0
      %v4586 = vadd.f32 0.0, %v4585
      %v4587 = vpop.f32.mrf.mxu0
      %4588 = vmatprep.mubr.f32.mxu0 0.0
      %4589 = vmatmul.mubr.f32.gmra.mxu0 %v3712
      %v4590 = vpop.f32.mrf.mxu0
      %v4591 = vadd.f32 0.0, %v4590
      %v4592 = vpop.f32.mrf.mxu0
      %4593 = vmatprep.mubr.f32.mxu0 0.0
      %4594 = vmatmul.mubr.f32.gmra.mxu0 %v3715
      %v4595 = vpop.f32.mrf.mxu0
      %v4596 = vadd.f32 0.0, %v4595
      %v4597 = vpop.f32.mrf.mxu0
      %4598 = vmatprep.mubr.f32.mxu0 0.0
      %4599 = vmatmul.mubr.f32.gmra.mxu0 %v3718
      %v4600 = vpop.f32.mrf.mxu0
      %v4601 = vadd.f32 0.0, %v4600
      %v4602 = vpop.f32.mrf.mxu0
      %4603 = vmatprep.mubr.f32.mxu0 0.0
      %4604 = vmatmul.mubr.f32.gmra.mxu0 %v3721
      %v4605 = vpop.f32.mrf.mxu0
      %v4606 = vadd.f32 0.0, %v4605
      %v4607 = vpop.f32.mrf.mxu0
      %4608 = vmatprep.mubr.f32.mxu0 0.0
      %4609 = vmatmul.mubr.f32.gmra.mxu0 %v3724
      %v4610 = vpop.f32.mrf.mxu0
      %v4611 = vadd.f32 0.0, %v4610
      %v4612 = vpop.f32.mrf.mxu0
      %4613 = vmatprep.mubr.f32.mxu0 0.0
      %4614 = vmatmul.mubr.f32.gmra.mxu0 %v3727
      %v4615 = vpop.f32.mrf.mxu0
      %v4616 = vadd.f32 0.0, %v4615
      %v4617 = vpop.f32.mrf.mxu0
      %4618 = vmatprep.mubr.f32.mxu0 0.0
      %4619 = vmatmul.mubr.f32.gmra.mxu0 %v3730
      %v4620 = vpop.f32.mrf.mxu0
      %v4621 = vadd.f32 0.0, %v4620
      %v4622 = vpop.f32.mrf.mxu0
      %4623 = vmatprep.mubr.f32.mxu0 0.0
      %4624 = vmatmul.mubr.f32.gmra.mxu0 %v3733
      %v4625 = vpop.f32.mrf.mxu0
      %v4626 = vadd.f32 0.0, %v4625
      %v4627 = vpop.f32.mrf.mxu0
      %4628 = vmatprep.mubr.f32.mxu0 0.0
      %4629 = vmatmul.mubr.f32.gmra.mxu0 %v3736
      %v4630 = vpop.f32.mrf.mxu0
      %v4631 = vadd.f32 0.0, %v4630
      %v4632 = vpop.f32.mrf.mxu0
      %4633 = vmatprep.mubr.f32.mxu0 0.0
      %4634 = vmatmul.mubr.f32.gmra.mxu0 %v3739
      %v4635 = vpop.f32.mrf.mxu0
      %v4636 = vadd.f32 0.0, %v4635
      %v4637 = vpop.f32.mrf.mxu0
      %4638 = vmatprep.mubr.f32.mxu0 0.0
      %4639 = vmatmul.mubr.f32.gmra.mxu0 %v3742
      %v4640 = vpop.f32.mrf.mxu0
      %v4641 = vadd.f32 0.0, %v4640
      %v4642 = vpop.f32.mrf.mxu0
      %4643 = vmatprep.mubr.f32.mxu0 0.0
      %4644 = vmatmul.mubr.f32.gmra.mxu0 %v3745
      %v4645 = vpop.f32.mrf.mxu0
      %v4646 = vadd.f32 0.0, %v4645
      %v4647 = vpop.f32.mrf.mxu0
      %4648 = vmatprep.mubr.f32.mxu0 0.0
      %4649 = vmatmul.mubr.f32.gmra.mxu0 %v3748
      %v4650 = vpop.f32.mrf.mxu0
      %v4651 = vadd.f32 0.0, %v4650
      %v4652 = vpop.f32.mrf.mxu0
      %4653 = vmatprep.mubr.f32.mxu0 0.0
      %4654 = vmatmul.mubr.f32.gmra.mxu0 %v3751
      %v4655 = vpop.f32.mrf.mxu0
      %v4656 = vadd.f32 0.0, %v4655
      %v4657 = vpop.f32.mrf.mxu0
      %4658 = vmatprep.mubr.f32.mxu0 0.0
      %4659 = vmatmul.mubr.f32.gmra.mxu0 %v3754
      %v4660 = vpop.f32.mrf.mxu0
      %v4661 = vadd.f32 0.0, %v4660
      %v4662 = vpop.f32.mrf.mxu0
      %4663 = vmatprep.mubr.f32.mxu0 0.0
      %4664 = vmatmul.mubr.f32.gmra.mxu0 %v3757
      %v4665 = vpop.f32.mrf.mxu0
      %v4666 = vadd.f32 0.0, %v4665
      %v4667 = vpop.f32.mrf.mxu0
      %4668 = vmatprep.mubr.f32.mxu0 0.0
      %4669 = vmatmul.mubr.f32.gmra.mxu0 %v3760
      %v4670 = vpop.f32.mrf.mxu0
      %v4671 = vadd.f32 0.0, %v4670
      %v4672 = vpop.f32.mrf.mxu0
      %4673 = vmatprep.mubr.f32.mxu0 0.0
      %4674 = vmatmul.mubr.f32.gmra.mxu0 %v4451
      %v4675 = vpop.f32.mrf.mxu0
      %v4676 = vadd.f32 0.0, %v4675
      %v4677 = vpop.f32.mrf.mxu0
      %4678 = vmatprep.mubr.f32.mxu0 0.0
      %4679 = vmatmul.mubr.f32.gmra.mxu0 %v4454
      %v4680 = vpop.f32.mrf.mxu0
      %v4681 = vadd.f32 0.0, %v4680
      %v4682 = vpop.f32.mrf.mxu0
      %4683 = vdwg.mxu0
      %v4684 = vadd.f32 %v4405, %v4526
      %v4685 = vadd.f32 %v4406, %v4531
      %v4686 = vadd.f32 %v4407, %v4536
      %v4687 = vadd.f32 %v4408, %v4541
      %v4688 = vadd.f32 %v4409, %v4546
      %v4689 = vadd.f32 %v4410, %v4551
      %v4690 = vadd.f32 %v4411, %v4556
      %v4691 = vadd.f32 %v4412, %v4561
      %v4692 = vadd.f32 %v4413, %v4566
      %v4693 = vadd.f32 %v4414, %v4571
      %v4694 = vadd.f32 %v4415, %v4576
      %v4695 = vadd.f32 %v4416, %v4581
      %v4696 = vadd.f32 %v4417, %v4586
      %v4697 = vadd.f32 %v4418, %v4591
      %v4698 = vadd.f32 %v4419, %v4596
      %v4699 = vadd.f32 %v4420, %v4601
      %v4700 = vadd.f32 %v4421, %v4606
      %v4701 = vadd.f32 %v4422, %v4611
      %v4702 = vadd.f32 %v4423, %v4616
      %v4703 = vadd.f32 %v4424, %v4621
      %v4704 = vadd.f32 %v4425, %v4626
      %v4705 = vadd.f32 %v4426, %v4631
      %v4706 = vadd.f32 %v4427, %v4636
      %v4707 = vadd.f32 %v4428, %v4641
      %v4708 = vadd.f32 %v4429, %v4646
      %v4709 = vadd.f32 %v4430, %v4651
      %v4710 = vadd.f32 %v4431, %v4656
      %v4711 = vadd.f32 %v4432, %v4661
      %v4712 = vadd.f32 %v4433, %v4666
      %v4713 = vadd.f32 %v4434, %v4671
      %v4714 = vadd.f32 %v4435, %v4676
      %v4715 = vadd.f32 %v4436, %v4681
      %s4716 = scalar_lea.vmem %s4, 16
      %v4717 = vld [vmem:[%s4716] sm:$0xf]
      %v4719 = vsel %vm415, %v3254, 0
      %v4722 = vsel %vm415, %v3255, 0
      %v4725 = vsel %vm509, %v4717, 0
      %4727 = vmatprep.subr.mxu0 0.0
      %4728 = vmatpush1.msra.mxu0 0.0
      %4729 = vmatprep.subr.mxu0 0.0
      %4730 = vmatpush1.msra.mxu0 0.0
      %4731 = vmatprep.subr.mxu0 0.0
      %4732 = vmatpush1.msra.mxu0 0.0
      %4733 = vmatprep.subr.mxu0 0.0
      %4734 = vmatpush1.msra.mxu0 0.0
      %4735 = vmatprep.subr.mxu0 0.0
      %4736 = vmatpush1.msra.mxu0 0.0
      %4737 = vmatprep.subr.mxu0 0.0
      %4738 = vmatpush1.msra.mxu0 0.0
      %4739 = vmatprep.subr.mxu0 0.0
      %4740 = vmatpush1.msra.mxu0 0.0
      %4741 = vmatprep.subr.mxu0 0.0
      %4742 = vmatpush1.msra.mxu0 0.0
      %4743 = vmatprep.subr.mxu0 0.0
      %4744 = vmatpush1.msra.mxu0 0.0
      %4745 = vmatprep.subr.mxu0 0.0
      %4746 = vmatpush1.msra.mxu0 0.0
      %4747 = vmatprep.subr.mxu0 0.0
      %4748 = vmatpush1.msra.mxu0 0.0
      %4749 = vmatprep.subr.mxu0 0.0
      %4750 = vmatpush1.msra.mxu0 0.0
      %4751 = vmatprep.subr.mxu0 0.0
      %4752 = vmatpush1.msra.mxu0 0.0
      %4753 = vmatprep.subr.mxu0 0.0
      %4754 = vmatpush1.msra.mxu0 0.0
      %4755 = vmatprep.subr.mxu0 0.0
      %4756 = vmatpush1.msra.mxu0 0.0
      %4757 = vmatprep.subr.mxu0 0.0
      %4758 = vmatpush1.msra.mxu0 %v4725
      %4759 = vmatprep.subr.mxu0 0.0
      %4760 = vmatpush2.msra.mxu0 0.0
      %4761 = vmatprep.subr.mxu0 0.0
      %4762 = vmatpush2.msra.mxu0 0.0
      %4763 = vmatprep.subr.mxu0 0.0
      %4764 = vmatpush2.msra.mxu0 0.0
      %4765 = vmatprep.subr.mxu0 0.0
      %4766 = vmatpush2.msra.mxu0 0.0
      %4767 = vmatprep.subr.mxu0 0.0
      %4768 = vmatpush2.msra.mxu0 0.0
      %4769 = vmatprep.subr.mxu0 0.0
      %4770 = vmatpush2.msra.mxu0 0.0
      %4771 = vmatprep.subr.mxu0 0.0
      %4772 = vmatpush2.msra.mxu0 0.0
      %4773 = vmatprep.subr.mxu0 0.0
      %4774 = vmatpush2.msra.mxu0 0.0
      %4775 = vmatprep.subr.mxu0 0.0
      %4776 = vmatpush2.msra.mxu0 0.0
      %4777 = vmatprep.subr.mxu0 0.0
      %4778 = vmatpush2.msra.mxu0 0.0
      %4779 = vmatprep.subr.mxu0 0.0
      %4780 = vmatpush2.msra.mxu0 0.0
      %4781 = vmatprep.subr.mxu0 0.0
      %4782 = vmatpush2.msra.mxu0 0.0
      %4783 = vmatprep.subr.mxu0 0.0
      %4784 = vmatpush2.msra.mxu0 0.0
      %4785 = vmatprep.subr.mxu0 0.0
      %4786 = vmatpush2.msra.mxu0 0.0
      %4787 = vmatprep.subr.mxu0 0.0
      %4788 = vmatpush2.msra.mxu0 0.0
      %4789 = vmatprep.subr.mxu0 0.0
      %4790 = vmatpush2.msra.mxu0 0.0
      %4791 = vmatprep.mubr.f32.mxu0 0.0
      %4792 = vmatmul.mubr.f32.gmra.mxu0 %v3352
      %v4793 = vpop.f32.mrf.mxu0
      %v4794 = vadd.f32 0.0, %v4793
      %v4795 = vpop.f32.mrf.mxu0
      %4796 = vmatprep.mubr.f32.mxu0 0.0
      %4797 = vmatmul.mubr.f32.gmra.mxu0 %v3355
      %v4798 = vpop.f32.mrf.mxu0
      %v4799 = vadd.f32 0.0, %v4798
      %v4800 = vpop.f32.mrf.mxu0
      %4801 = vmatprep.mubr.f32.mxu0 0.0
      %4802 = vmatmul.mubr.f32.gmra.mxu0 %v3358
      %v4803 = vpop.f32.mrf.mxu0
      %v4804 = vadd.f32 0.0, %v4803
      %v4805 = vpop.f32.mrf.mxu0
      %4806 = vmatprep.mubr.f32.mxu0 0.0
      %4807 = vmatmul.mubr.f32.gmra.mxu0 %v3361
      %v4808 = vpop.f32.mrf.mxu0
      %v4809 = vadd.f32 0.0, %v4808
      %v4810 = vpop.f32.mrf.mxu0
      %4811 = vmatprep.mubr.f32.mxu0 0.0
      %4812 = vmatmul.mubr.f32.gmra.mxu0 %v3364
      %v4813 = vpop.f32.mrf.mxu0
      %v4814 = vadd.f32 0.0, %v4813
      %v4815 = vpop.f32.mrf.mxu0
      %4816 = vmatprep.mubr.f32.mxu0 0.0
      %4817 = vmatmul.mubr.f32.gmra.mxu0 %v3367
      %v4818 = vpop.f32.mrf.mxu0
      %v4819 = vadd.f32 0.0, %v4818
      %v4820 = vpop.f32.mrf.mxu0
      %4821 = vmatprep.mubr.f32.mxu0 0.0
      %4822 = vmatmul.mubr.f32.gmra.mxu0 %v3370
      %v4823 = vpop.f32.mrf.mxu0
      %v4824 = vadd.f32 0.0, %v4823
      %v4825 = vpop.f32.mrf.mxu0
      %4826 = vmatprep.mubr.f32.mxu0 0.0
      %4827 = vmatmul.mubr.f32.gmra.mxu0 %v3373
      %v4828 = vpop.f32.mrf.mxu0
      %v4829 = vadd.f32 0.0, %v4828
      %v4830 = vpop.f32.mrf.mxu0
      %4831 = vmatprep.mubr.f32.mxu0 0.0
      %4832 = vmatmul.mubr.f32.gmra.mxu0 %v3376
      %v4833 = vpop.f32.mrf.mxu0
      %v4834 = vadd.f32 0.0, %v4833
      %v4835 = vpop.f32.mrf.mxu0
      %4836 = vmatprep.mubr.f32.mxu0 0.0
      %4837 = vmatmul.mubr.f32.gmra.mxu0 %v3379
      %v4838 = vpop.f32.mrf.mxu0
      %v4839 = vadd.f32 0.0, %v4838
      %v4840 = vpop.f32.mrf.mxu0
      %4841 = vmatprep.mubr.f32.mxu0 0.0
      %4842 = vmatmul.mubr.f32.gmra.mxu0 %v3382
      %v4843 = vpop.f32.mrf.mxu0
      %v4844 = vadd.f32 0.0, %v4843
      %v4845 = vpop.f32.mrf.mxu0
      %4846 = vmatprep.mubr.f32.mxu0 0.0
      %4847 = vmatmul.mubr.f32.gmra.mxu0 %v3385
      %v4848 = vpop.f32.mrf.mxu0
      %v4849 = vadd.f32 0.0, %v4848
      %v4850 = vpop.f32.mrf.mxu0
      %4851 = vmatprep.mubr.f32.mxu0 0.0
      %4852 = vmatmul.mubr.f32.gmra.mxu0 %v3388
      %v4853 = vpop.f32.mrf.mxu0
      %v4854 = vadd.f32 0.0, %v4853
      %v4855 = vpop.f32.mrf.mxu0
      %4856 = vmatprep.mubr.f32.mxu0 0.0
      %4857 = vmatmul.mubr.f32.gmra.mxu0 %v3391
      %v4858 = vpop.f32.mrf.mxu0
      %v4859 = vadd.f32 0.0, %v4858
      %v4860 = vpop.f32.mrf.mxu0
      %4861 = vmatprep.mubr.f32.mxu0 0.0
      %4862 = vmatmul.mubr.f32.gmra.mxu0 %v3394
      %v4863 = vpop.f32.mrf.mxu0
      %v4864 = vadd.f32 0.0, %v4863
      %v4865 = vpop.f32.mrf.mxu0
      %4866 = vmatprep.mubr.f32.mxu0 0.0
      %4867 = vmatmul.mubr.f32.gmra.mxu0 %v3397
      %v4868 = vpop.f32.mrf.mxu0
      %v4869 = vadd.f32 0.0, %v4868
      %v4870 = vpop.f32.mrf.mxu0
      %4871 = vmatprep.mubr.f32.mxu0 0.0
      %4872 = vmatmul.mubr.f32.gmra.mxu0 %v3400
      %v4873 = vpop.f32.mrf.mxu0
      %v4874 = vadd.f32 0.0, %v4873
      %v4875 = vpop.f32.mrf.mxu0
      %4876 = vmatprep.mubr.f32.mxu0 0.0
      %4877 = vmatmul.mubr.f32.gmra.mxu0 %v3403
      %v4878 = vpop.f32.mrf.mxu0
      %v4879 = vadd.f32 0.0, %v4878
      %v4880 = vpop.f32.mrf.mxu0
      %4881 = vmatprep.mubr.f32.mxu0 0.0
      %4882 = vmatmul.mubr.f32.gmra.mxu0 %v3406
      %v4883 = vpop.f32.mrf.mxu0
      %v4884 = vadd.f32 0.0, %v4883
      %v4885 = vpop.f32.mrf.mxu0
      %4886 = vmatprep.mubr.f32.mxu0 0.0
      %4887 = vmatmul.mubr.f32.gmra.mxu0 %v3409
      %v4888 = vpop.f32.mrf.mxu0
      %v4889 = vadd.f32 0.0, %v4888
      %v4890 = vpop.f32.mrf.mxu0
      %4891 = vmatprep.mubr.f32.mxu0 0.0
      %4892 = vmatmul.mubr.f32.gmra.mxu0 %v3412
      %v4893 = vpop.f32.mrf.mxu0
      %v4894 = vadd.f32 0.0, %v4893
      %v4895 = vpop.f32.mrf.mxu0
      %4896 = vmatprep.mubr.f32.mxu0 0.0
      %4897 = vmatmul.mubr.f32.gmra.mxu0 %v3415
      %v4898 = vpop.f32.mrf.mxu0
      %v4899 = vadd.f32 0.0, %v4898
      %v4900 = vpop.f32.mrf.mxu0
      %4901 = vmatprep.mubr.f32.mxu0 0.0
      %4902 = vmatmul.mubr.f32.gmra.mxu0 %v3418
      %v4903 = vpop.f32.mrf.mxu0
      %v4904 = vadd.f32 0.0, %v4903
      %v4905 = vpop.f32.mrf.mxu0
      %4906 = vmatprep.mubr.f32.mxu0 0.0
      %4907 = vmatmul.mubr.f32.gmra.mxu0 %v3421
      %v4908 = vpop.f32.mrf.mxu0
      %v4909 = vadd.f32 0.0, %v4908
      %v4910 = vpop.f32.mrf.mxu0
      %4911 = vmatprep.mubr.f32.mxu0 0.0
      %4912 = vmatmul.mubr.f32.gmra.mxu0 %v3424
      %v4913 = vpop.f32.mrf.mxu0
      %v4914 = vadd.f32 0.0, %v4913
      %v4915 = vpop.f32.mrf.mxu0
      %4916 = vmatprep.mubr.f32.mxu0 0.0
      %4917 = vmatmul.mubr.f32.gmra.mxu0 %v3427
      %v4918 = vpop.f32.mrf.mxu0
      %v4919 = vadd.f32 0.0, %v4918
      %v4920 = vpop.f32.mrf.mxu0
      %4921 = vmatprep.mubr.f32.mxu0 0.0
      %4922 = vmatmul.mubr.f32.gmra.mxu0 %v3430
      %v4923 = vpop.f32.mrf.mxu0
      %v4924 = vadd.f32 0.0, %v4923
      %v4925 = vpop.f32.mrf.mxu0
      %4926 = vmatprep.mubr.f32.mxu0 0.0
      %4927 = vmatmul.mubr.f32.gmra.mxu0 %v3433
      %v4928 = vpop.f32.mrf.mxu0
      %v4929 = vadd.f32 0.0, %v4928
      %v4930 = vpop.f32.mrf.mxu0
      %4931 = vmatprep.mubr.f32.mxu0 0.0
      %4932 = vmatmul.mubr.f32.gmra.mxu0 %v3436
      %v4933 = vpop.f32.mrf.mxu0
      %v4934 = vadd.f32 0.0, %v4933
      %v4935 = vpop.f32.mrf.mxu0
      %4936 = vmatprep.mubr.f32.mxu0 0.0
      %4937 = vmatmul.mubr.f32.gmra.mxu0 %v3439
      %v4938 = vpop.f32.mrf.mxu0
      %v4939 = vadd.f32 0.0, %v4938
      %v4940 = vpop.f32.mrf.mxu0
      %4941 = vmatprep.mubr.f32.mxu0 0.0
      %4942 = vmatmul.mubr.f32.gmra.mxu0 %v4719
      %v4943 = vpop.f32.mrf.mxu0
      %v4944 = vadd.f32 0.0, %v4943
      %v4945 = vpop.f32.mrf.mxu0
      %4946 = vmatprep.mubr.f32.mxu0 0.0
      %4947 = vmatmul.mubr.f32.gmra.mxu0 %v4722
      %v4948 = vpop.f32.mrf.mxu0
      %v4949 = vadd.f32 0.0, %v4948
      %v4950 = vpop.f32.mrf.mxu0
      %4951 = vdwg.mxu0
      %v4952 = vadd.f32 %v4684, %v4794
      %v4953 = vadd.f32 %v4685, %v4799
      %v4954 = vadd.f32 %v4686, %v4804
      %v4955 = vadd.f32 %v4687, %v4809
      %v4956 = vadd.f32 %v4688, %v4814
      %v4957 = vadd.f32 %v4689, %v4819
      %v4958 = vadd.f32 %v4690, %v4824
      %v4959 = vadd.f32 %v4691, %v4829
      %v4960 = vadd.f32 %v4692, %v4834
      %v4961 = vadd.f32 %v4693, %v4839
      %v4962 = vadd.f32 %v4694, %v4844
      %v4963 = vadd.f32 %v4695, %v4849
      %v4964 = vadd.f32 %v4696, %v4854
      %v4965 = vadd.f32 %v4697, %v4859
      %v4966 = vadd.f32 %v4698, %v4864
      %v4967 = vadd.f32 %v4699, %v4869
      %v4968 = vadd.f32 %v4700, %v4874
      %v4969 = vadd.f32 %v4701, %v4879
      %v4970 = vadd.f32 %v4702, %v4884
      %v4971 = vadd.f32 %v4703, %v4889
      %v4972 = vadd.f32 %v4704, %v4894
      %v4973 = vadd.f32 %v4705, %v4899
      %v4974 = vadd.f32 %v4706, %v4904
      %v4975 = vadd.f32 %v4707, %v4909
      %v4976 = vadd.f32 %v4708, %v4914
      %v4977 = vadd.f32 %v4709, %v4919
      %v4978 = vadd.f32 %v4710, %v4924
      %v4979 = vadd.f32 %v4711, %v4929
      %v4980 = vadd.f32 %v4712, %v4934
      %v4981 = vadd.f32 %v4713, %v4939
      %v4982 = vadd.f32 %v4714, %v4944
      %v4983 = vadd.f32 %v4715, %v4949
      %v4984 = vrot.slane %v3254, 1
      %v4985 = vrot.slane %v3255, 1
      %v4986 = vsel %vm1092, %v4984, %v4985
      %v4987 = vsel %vm1092, %v4019, %v4984
      %v4988 = vsel %vm1092, %v4985, %v3990
      %v4989 = vsel %vm285, %v4987, 0.0
      %v4990 = vsel %vm284, %v4986, 0.0
      %v4991 = vsel %vm285, %v4988, 0.0
      %s4992 = scalar_lea.vmem %s4, 20
      %v4993 = vld [vmem:[%s4992] sm:$0xf]
      %v4995 = vsel %vm415, %v4989, 0
      %v4998 = vsel %vm415, %v4990, 0
      %v5001 = vsel %vm415, %v4991, 0
      %v5004 = vsel %vm509, %v4993, 0
      %5006 = vmatprep.subr.mxu0 0.0
      %5007 = vmatpush1.msra.mxu0 0.0
      %5008 = vmatprep.subr.mxu0 0.0
      %5009 = vmatpush1.msra.mxu0 0.0
      %5010 = vmatprep.subr.mxu0 0.0
      %5011 = vmatpush1.msra.mxu0 0.0
      %5012 = vmatprep.subr.mxu0 0.0
      %5013 = vmatpush1.msra.mxu0 0.0
      %5014 = vmatprep.subr.mxu0 0.0
      %5015 = vmatpush1.msra.mxu0 0.0
      %5016 = vmatprep.subr.mxu0 0.0
      %5017 = vmatpush1.msra.mxu0 0.0
      %5018 = vmatprep.subr.mxu0 0.0
      %5019 = vmatpush1.msra.mxu0 0.0
      %5020 = vmatprep.subr.mxu0 0.0
      %5021 = vmatpush1.msra.mxu0 0.0
      %5022 = vmatprep.subr.mxu0 0.0
      %5023 = vmatpush1.msra.mxu0 0.0
      %5024 = vmatprep.subr.mxu0 0.0
      %5025 = vmatpush1.msra.mxu0 0.0
      %5026 = vmatprep.subr.mxu0 0.0
      %5027 = vmatpush1.msra.mxu0 0.0
      %5028 = vmatprep.subr.mxu0 0.0
      %5029 = vmatpush1.msra.mxu0 0.0
      %5030 = vmatprep.subr.mxu0 0.0
      %5031 = vmatpush1.msra.mxu0 0.0
      %5032 = vmatprep.subr.mxu0 0.0
      %5033 = vmatpush1.msra.mxu0 0.0
      %5034 = vmatprep.subr.mxu0 0.0
      %5035 = vmatpush1.msra.mxu0 0.0
      %5036 = vmatprep.subr.mxu0 0.0
      %5037 = vmatpush1.msra.mxu0 %v5004
      %5038 = vmatprep.subr.mxu0 0.0
      %5039 = vmatpush2.msra.mxu0 0.0
      %5040 = vmatprep.subr.mxu0 0.0
      %5041 = vmatpush2.msra.mxu0 0.0
      %5042 = vmatprep.subr.mxu0 0.0
      %5043 = vmatpush2.msra.mxu0 0.0
      %5044 = vmatprep.subr.mxu0 0.0
      %5045 = vmatpush2.msra.mxu0 0.0
      %5046 = vmatprep.subr.mxu0 0.0
      %5047 = vmatpush2.msra.mxu0 0.0
      %5048 = vmatprep.subr.mxu0 0.0
      %5049 = vmatpush2.msra.mxu0 0.0
      %5050 = vmatprep.subr.mxu0 0.0
      %5051 = vmatpush2.msra.mxu0 0.0
      %5052 = vmatprep.subr.mxu0 0.0
      %5053 = vmatpush2.msra.mxu0 0.0
      %5054 = vmatprep.subr.mxu0 0.0
      %5055 = vmatpush2.msra.mxu0 0.0
      %5056 = vmatprep.subr.mxu0 0.0
      %5057 = vmatpush2.msra.mxu0 0.0
      %5058 = vmatprep.subr.mxu0 0.0
      %5059 = vmatpush2.msra.mxu0 0.0
      %5060 = vmatprep.subr.mxu0 0.0
      %5061 = vmatpush2.msra.mxu0 0.0
      %5062 = vmatprep.subr.mxu0 0.0
      %5063 = vmatpush2.msra.mxu0 0.0
      %5064 = vmatprep.subr.mxu0 0.0
      %5065 = vmatpush2.msra.mxu0 0.0
      %5066 = vmatprep.subr.mxu0 0.0
      %5067 = vmatpush2.msra.mxu0 0.0
      %5068 = vmatprep.subr.mxu0 0.0
      %5069 = vmatpush2.msra.mxu0 0.0
      %5070 = vmatprep.mubr.f32.mxu0 0.0
      %5071 = vmatmul.mubr.f32.gmra.mxu0 %v4088
      %v5072 = vpop.f32.mrf.mxu0
      %v5073 = vadd.f32 0.0, %v5072
      %v5074 = vpop.f32.mrf.mxu0
      %5075 = vmatprep.mubr.f32.mxu0 0.0
      %5076 = vmatmul.mubr.f32.gmra.mxu0 %v4091
      %v5077 = vpop.f32.mrf.mxu0
      %v5078 = vadd.f32 0.0, %v5077
      %v5079 = vpop.f32.mrf.mxu0
      %5080 = vmatprep.mubr.f32.mxu0 0.0
      %5081 = vmatmul.mubr.f32.gmra.mxu0 %v4094
      %v5082 = vpop.f32.mrf.mxu0
      %v5083 = vadd.f32 0.0, %v5082
      %v5084 = vpop.f32.mrf.mxu0
      %5085 = vmatprep.mubr.f32.mxu0 0.0
      %5086 = vmatmul.mubr.f32.gmra.mxu0 %v4097
      %v5087 = vpop.f32.mrf.mxu0
      %v5088 = vadd.f32 0.0, %v5087
      %v5089 = vpop.f32.mrf.mxu0
      %5090 = vmatprep.mubr.f32.mxu0 0.0
      %5091 = vmatmul.mubr.f32.gmra.mxu0 %v4100
      %v5092 = vpop.f32.mrf.mxu0
      %v5093 = vadd.f32 0.0, %v5092
      %v5094 = vpop.f32.mrf.mxu0
      %5095 = vmatprep.mubr.f32.mxu0 0.0
      %5096 = vmatmul.mubr.f32.gmra.mxu0 %v4103
      %v5097 = vpop.f32.mrf.mxu0
      %v5098 = vadd.f32 0.0, %v5097
      %v5099 = vpop.f32.mrf.mxu0
      %5100 = vmatprep.mubr.f32.mxu0 0.0
      %5101 = vmatmul.mubr.f32.gmra.mxu0 %v4106
      %v5102 = vpop.f32.mrf.mxu0
      %v5103 = vadd.f32 0.0, %v5102
      %v5104 = vpop.f32.mrf.mxu0
      %5105 = vmatprep.mubr.f32.mxu0 0.0
      %5106 = vmatmul.mubr.f32.gmra.mxu0 %v4109
      %v5107 = vpop.f32.mrf.mxu0
      %v5108 = vadd.f32 0.0, %v5107
      %v5109 = vpop.f32.mrf.mxu0
      %5110 = vmatprep.mubr.f32.mxu0 0.0
      %5111 = vmatmul.mubr.f32.gmra.mxu0 %v4112
      %v5112 = vpop.f32.mrf.mxu0
      %v5113 = vadd.f32 0.0, %v5112
      %v5114 = vpop.f32.mrf.mxu0
      %5115 = vmatprep.mubr.f32.mxu0 0.0
      %5116 = vmatmul.mubr.f32.gmra.mxu0 %v4115
      %v5117 = vpop.f32.mrf.mxu0
      %v5118 = vadd.f32 0.0, %v5117
      %v5119 = vpop.f32.mrf.mxu0
      %5120 = vmatprep.mubr.f32.mxu0 0.0
      %5121 = vmatmul.mubr.f32.gmra.mxu0 %v4118
      %v5122 = vpop.f32.mrf.mxu0
      %v5123 = vadd.f32 0.0, %v5122
      %v5124 = vpop.f32.mrf.mxu0
      %5125 = vmatprep.mubr.f32.mxu0 0.0
      %5126 = vmatmul.mubr.f32.gmra.mxu0 %v4121
      %v5127 = vpop.f32.mrf.mxu0
      %v5128 = vadd.f32 0.0, %v5127
      %v5129 = vpop.f32.mrf.mxu0
      %5130 = vmatprep.mubr.f32.mxu0 0.0
      %5131 = vmatmul.mubr.f32.gmra.mxu0 %v4124
      %v5132 = vpop.f32.mrf.mxu0
      %v5133 = vadd.f32 0.0, %v5132
      %v5134 = vpop.f32.mrf.mxu0
      %5135 = vmatprep.mubr.f32.mxu0 0.0
      %5136 = vmatmul.mubr.f32.gmra.mxu0 %v4127
      %v5137 = vpop.f32.mrf.mxu0
      %v5138 = vadd.f32 0.0, %v5137
      %v5139 = vpop.f32.mrf.mxu0
      %5140 = vmatprep.mubr.f32.mxu0 0.0
      %5141 = vmatmul.mubr.f32.gmra.mxu0 %v4130
      %v5142 = vpop.f32.mrf.mxu0
      %v5143 = vadd.f32 0.0, %v5142
      %v5144 = vpop.f32.mrf.mxu0
      %5145 = vmatprep.mubr.f32.mxu0 0.0
      %5146 = vmatmul.mubr.f32.gmra.mxu0 %v4133
      %v5147 = vpop.f32.mrf.mxu0
      %v5148 = vadd.f32 0.0, %v5147
      %v5149 = vpop.f32.mrf.mxu0
      %5150 = vmatprep.mubr.f32.mxu0 0.0
      %5151 = vmatmul.mubr.f32.gmra.mxu0 %v4136
      %v5152 = vpop.f32.mrf.mxu0
      %v5153 = vadd.f32 0.0, %v5152
      %v5154 = vpop.f32.mrf.mxu0
      %5155 = vmatprep.mubr.f32.mxu0 0.0
      %5156 = vmatmul.mubr.f32.gmra.mxu0 %v4139
      %v5157 = vpop.f32.mrf.mxu0
      %v5158 = vadd.f32 0.0, %v5157
      %v5159 = vpop.f32.mrf.mxu0
      %5160 = vmatprep.mubr.f32.mxu0 0.0
      %5161 = vmatmul.mubr.f32.gmra.mxu0 %v4142
      %v5162 = vpop.f32.mrf.mxu0
      %v5163 = vadd.f32 0.0, %v5162
      %v5164 = vpop.f32.mrf.mxu0
      %5165 = vmatprep.mubr.f32.mxu0 0.0
      %5166 = vmatmul.mubr.f32.gmra.mxu0 %v4145
      %v5167 = vpop.f32.mrf.mxu0
      %v5168 = vadd.f32 0.0, %v5167
      %v5169 = vpop.f32.mrf.mxu0
      %5170 = vmatprep.mubr.f32.mxu0 0.0
      %5171 = vmatmul.mubr.f32.gmra.mxu0 %v4148
      %v5172 = vpop.f32.mrf.mxu0
      %v5173 = vadd.f32 0.0, %v5172
      %v5174 = vpop.f32.mrf.mxu0
      %5175 = vmatprep.mubr.f32.mxu0 0.0
      %5176 = vmatmul.mubr.f32.gmra.mxu0 %v4151
      %v5177 = vpop.f32.mrf.mxu0
      %v5178 = vadd.f32 0.0, %v5177
      %v5179 = vpop.f32.mrf.mxu0
      %5180 = vmatprep.mubr.f32.mxu0 0.0
      %5181 = vmatmul.mubr.f32.gmra.mxu0 %v4154
      %v5182 = vpop.f32.mrf.mxu0
      %v5183 = vadd.f32 0.0, %v5182
      %v5184 = vpop.f32.mrf.mxu0
      %5185 = vmatprep.mubr.f32.mxu0 0.0
      %5186 = vmatmul.mubr.f32.gmra.mxu0 %v4157
      %v5187 = vpop.f32.mrf.mxu0
      %v5188 = vadd.f32 0.0, %v5187
      %v5189 = vpop.f32.mrf.mxu0
      %5190 = vmatprep.mubr.f32.mxu0 0.0
      %5191 = vmatmul.mubr.f32.gmra.mxu0 %v4160
      %v5192 = vpop.f32.mrf.mxu0
      %v5193 = vadd.f32 0.0, %v5192
      %v5194 = vpop.f32.mrf.mxu0
      %5195 = vmatprep.mubr.f32.mxu0 0.0
      %5196 = vmatmul.mubr.f32.gmra.mxu0 %v4163
      %v5197 = vpop.f32.mrf.mxu0
      %v5198 = vadd.f32 0.0, %v5197
      %v5199 = vpop.f32.mrf.mxu0
      %5200 = vmatprep.mubr.f32.mxu0 0.0
      %5201 = vmatmul.mubr.f32.gmra.mxu0 %v4166
      %v5202 = vpop.f32.mrf.mxu0
      %v5203 = vadd.f32 0.0, %v5202
      %v5204 = vpop.f32.mrf.mxu0
      %5205 = vmatprep.mubr.f32.mxu0 0.0
      %5206 = vmatmul.mubr.f32.gmra.mxu0 %v4169
      %v5207 = vpop.f32.mrf.mxu0
      %v5208 = vadd.f32 0.0, %v5207
      %v5209 = vpop.f32.mrf.mxu0
      %5210 = vmatprep.mubr.f32.mxu0 0.0
      %5211 = vmatmul.mubr.f32.gmra.mxu0 %v4172
      %v5212 = vpop.f32.mrf.mxu0
      %v5213 = vadd.f32 0.0, %v5212
      %v5214 = vpop.f32.mrf.mxu0
      %5215 = vmatprep.mubr.f32.mxu0 0.0
      %5216 = vmatmul.mubr.f32.gmra.mxu0 %v4995
      %v5217 = vpop.f32.mrf.mxu0
      %v5218 = vadd.f32 0.0, %v5217
      %v5219 = vpop.f32.mrf.mxu0
      %5220 = vmatprep.mubr.f32.mxu0 0.0
      %5221 = vmatmul.mubr.f32.gmra.mxu0 %v4998
      %v5222 = vpop.f32.mrf.mxu0
      %v5223 = vadd.f32 0.0, %v5222
      %v5224 = vpop.f32.mrf.mxu0
      %5225 = vmatprep.mubr.f32.mxu0 0.0
      %5226 = vmatmul.mubr.f32.gmra.mxu0 %v5001
      %v5227 = vpop.f32.mrf.mxu0
      %v5228 = vadd.f32 0.0, %v5227
      %v5229 = vpop.f32.mrf.mxu0
      %5230 = vdwg.mxu0
      %v5231 = vadd.f32 %v4952, %v5073
      %v5232 = vadd.f32 %v4953, %v5078
      %v5233 = vadd.f32 %v4954, %v5083
      %v5234 = vadd.f32 %v4955, %v5088
      %v5235 = vadd.f32 %v4956, %v5093
      %v5236 = vadd.f32 %v4957, %v5098
      %v5237 = vadd.f32 %v4958, %v5103
      %v5238 = vadd.f32 %v4959, %v5108
      %v5239 = vadd.f32 %v4960, %v5113
      %v5240 = vadd.f32 %v4961, %v5118
      %v5241 = vadd.f32 %v4962, %v5123
      %v5242 = vadd.f32 %v4963, %v5128
      %v5243 = vadd.f32 %v4964, %v5133
      %v5244 = vadd.f32 %v4965, %v5138
      %v5245 = vadd.f32 %v4966, %v5143
      %v5246 = vadd.f32 %v4967, %v5148
      %v5247 = vadd.f32 %v4968, %v5153
      %v5248 = vadd.f32 %v4969, %v5158
      %v5249 = vadd.f32 %v4970, %v5163
      %v5250 = vadd.f32 %v4971, %v5168
      %v5251 = vadd.f32 %v4972, %v5173
      %v5252 = vadd.f32 %v4973, %v5178
      %v5253 = vadd.f32 %v4974, %v5183
      %v5254 = vadd.f32 %v4975, %v5188
      %v5255 = vadd.f32 %v4976, %v5193
      %v5256 = vadd.f32 %v4977, %v5198
      %v5257 = vadd.f32 %v4978, %v5203
      %v5258 = vadd.f32 %v4979, %v5208
      %v5259 = vadd.f32 %v4980, %v5213
      %v5260 = vadd.f32 %v4981, %v5218
      %v5261 = vadd.f32 %v4982, %v5223
      %v5262 = vadd.f32 %v4983, %v5228
      %v5263 = vsel %vm348, %v4438, 0.0
      %v5264 = vsel %vm348, 0.0, %v3258
      %v5265 = vsel %vm282, %v5264, 0.0
      %v5266 = vsel %vm282, %v5263, 0.0
      %s5267 = scalar_lea.vmem %s4, 24
      %v5268 = vld [vmem:[%s5267] sm:$0xf]
      %v5270 = vsel %vm415, %v5265, 0
      %v5273 = vsel %vm415, %v5266, 0
      %v5276 = vsel %vm509, %v5268, 0
      %5278 = vmatprep.subr.mxu0 0.0
      %5279 = vmatpush1.msra.mxu0 0.0
      %5280 = vmatprep.subr.mxu0 0.0
      %5281 = vmatpush1.msra.mxu0 0.0
      %5282 = vmatprep.subr.mxu0 0.0
      %5283 = vmatpush1.msra.mxu0 0.0
      %5284 = vmatprep.subr.mxu0 0.0
      %5285 = vmatpush1.msra.mxu0 0.0
      %5286 = vmatprep.subr.mxu0 0.0
      %5287 = vmatpush1.msra.mxu0 0.0
      %5288 = vmatprep.subr.mxu0 0.0
      %5289 = vmatpush1.msra.mxu0 0.0
      %5290 = vmatprep.subr.mxu0 0.0
      %5291 = vmatpush1.msra.mxu0 0.0
      %5292 = vmatprep.subr.mxu0 0.0
      %5293 = vmatpush1.msra.mxu0 0.0
      %5294 = vmatprep.subr.mxu0 0.0
      %5295 = vmatpush1.msra.mxu0 0.0
      %5296 = vmatprep.subr.mxu0 0.0
      %5297 = vmatpush1.msra.mxu0 0.0
      %5298 = vmatprep.subr.mxu0 0.0
      %5299 = vmatpush1.msra.mxu0 0.0
      %5300 = vmatprep.subr.mxu0 0.0
      %5301 = vmatpush1.msra.mxu0 0.0
      %5302 = vmatprep.subr.mxu0 0.0
      %5303 = vmatpush1.msra.mxu0 0.0
      %5304 = vmatprep.subr.mxu0 0.0
      %5305 = vmatpush1.msra.mxu0 0.0
      %5306 = vmatprep.subr.mxu0 0.0
      %5307 = vmatpush1.msra.mxu0 0.0
      %5308 = vmatprep.subr.mxu0 0.0
      %5309 = vmatpush1.msra.mxu0 %v5276
      %5310 = vmatprep.subr.mxu0 0.0
      %5311 = vmatpush2.msra.mxu0 0.0
      %5312 = vmatprep.subr.mxu0 0.0
      %5313 = vmatpush2.msra.mxu0 0.0
      %5314 = vmatprep.subr.mxu0 0.0
      %5315 = vmatpush2.msra.mxu0 0.0
      %5316 = vmatprep.subr.mxu0 0.0
      %5317 = vmatpush2.msra.mxu0 0.0
      %5318 = vmatprep.subr.mxu0 0.0
      %5319 = vmatpush2.msra.mxu0 0.0
      %5320 = vmatprep.subr.mxu0 0.0
      %5321 = vmatpush2.msra.mxu0 0.0
      %5322 = vmatprep.subr.mxu0 0.0
      %5323 = vmatpush2.msra.mxu0 0.0
      %5324 = vmatprep.subr.mxu0 0.0
      %5325 = vmatpush2.msra.mxu0 0.0
      %5326 = vmatprep.subr.mxu0 0.0
      %5327 = vmatpush2.msra.mxu0 0.0
      %5328 = vmatprep.subr.mxu0 0.0
      %5329 = vmatpush2.msra.mxu0 0.0
      %5330 = vmatprep.subr.mxu0 0.0
      %5331 = vmatpush2.msra.mxu0 0.0
      %5332 = vmatprep.subr.mxu0 0.0
      %5333 = vmatpush2.msra.mxu0 0.0
      %5334 = vmatprep.subr.mxu0 0.0
      %5335 = vmatpush2.msra.mxu0 0.0
      %5336 = vmatprep.subr.mxu0 0.0
      %5337 = vmatpush2.msra.mxu0 0.0
      %5338 = vmatprep.subr.mxu0 0.0
      %5339 = vmatpush2.msra.mxu0 0.0
      %5340 = vmatprep.subr.mxu0 0.0
      %5341 = vmatpush2.msra.mxu0 0.0
      %5342 = vmatprep.mubr.f32.mxu0 0.0
      %5343 = vmatmul.mubr.f32.gmra.mxu0 %v5270
      %v5344 = vpop.f32.mrf.mxu0
      %v5345 = vadd.f32 0.0, %v5344
      %v5346 = vpop.f32.mrf.mxu0
      %5347 = vmatprep.mubr.f32.mxu0 0.0
      %5348 = vmatmul.mubr.f32.gmra.mxu0 %v3682
      %v5349 = vpop.f32.mrf.mxu0
      %v5350 = vadd.f32 0.0, %v5349
      %v5351 = vpop.f32.mrf.mxu0
      %5352 = vmatprep.mubr.f32.mxu0 0.0
      %5353 = vmatmul.mubr.f32.gmra.mxu0 %v3685
      %v5354 = vpop.f32.mrf.mxu0
      %v5355 = vadd.f32 0.0, %v5354
      %v5356 = vpop.f32.mrf.mxu0
      %5357 = vmatprep.mubr.f32.mxu0 0.0
      %5358 = vmatmul.mubr.f32.gmra.mxu0 %v3688
      %v5359 = vpop.f32.mrf.mxu0
      %v5360 = vadd.f32 0.0, %v5359
      %v5361 = vpop.f32.mrf.mxu0
      %5362 = vmatprep.mubr.f32.mxu0 0.0
      %5363 = vmatmul.mubr.f32.gmra.mxu0 %v3691
      %v5364 = vpop.f32.mrf.mxu0
      %v5365 = vadd.f32 0.0, %v5364
      %v5366 = vpop.f32.mrf.mxu0
      %5367 = vmatprep.mubr.f32.mxu0 0.0
      %5368 = vmatmul.mubr.f32.gmra.mxu0 %v3694
      %v5369 = vpop.f32.mrf.mxu0
      %v5370 = vadd.f32 0.0, %v5369
      %v5371 = vpop.f32.mrf.mxu0
      %5372 = vmatprep.mubr.f32.mxu0 0.0
      %5373 = vmatmul.mubr.f32.gmra.mxu0 %v3697
      %v5374 = vpop.f32.mrf.mxu0
      %v5375 = vadd.f32 0.0, %v5374
      %v5376 = vpop.f32.mrf.mxu0
      %5377 = vmatprep.mubr.f32.mxu0 0.0
      %5378 = vmatmul.mubr.f32.gmra.mxu0 %v3700
      %v5379 = vpop.f32.mrf.mxu0
      %v5380 = vadd.f32 0.0, %v5379
      %v5381 = vpop.f32.mrf.mxu0
      %5382 = vmatprep.mubr.f32.mxu0 0.0
      %5383 = vmatmul.mubr.f32.gmra.mxu0 %v3703
      %v5384 = vpop.f32.mrf.mxu0
      %v5385 = vadd.f32 0.0, %v5384
      %v5386 = vpop.f32.mrf.mxu0
      %5387 = vmatprep.mubr.f32.mxu0 0.0
      %5388 = vmatmul.mubr.f32.gmra.mxu0 %v3706
      %v5389 = vpop.f32.mrf.mxu0
      %v5390 = vadd.f32 0.0, %v5389
      %v5391 = vpop.f32.mrf.mxu0
      %5392 = vmatprep.mubr.f32.mxu0 0.0
      %5393 = vmatmul.mubr.f32.gmra.mxu0 %v3709
      %v5394 = vpop.f32.mrf.mxu0
      %v5395 = vadd.f32 0.0, %v5394
      %v5396 = vpop.f32.mrf.mxu0
      %5397 = vmatprep.mubr.f32.mxu0 0.0
      %5398 = vmatmul.mubr.f32.gmra.mxu0 %v3712
      %v5399 = vpop.f32.mrf.mxu0
      %v5400 = vadd.f32 0.0, %v5399
      %v5401 = vpop.f32.mrf.mxu0
      %5402 = vmatprep.mubr.f32.mxu0 0.0
      %5403 = vmatmul.mubr.f32.gmra.mxu0 %v3715
      %v5404 = vpop.f32.mrf.mxu0
      %v5405 = vadd.f32 0.0, %v5404
      %v5406 = vpop.f32.mrf.mxu0
      %5407 = vmatprep.mubr.f32.mxu0 0.0
      %5408 = vmatmul.mubr.f32.gmra.mxu0 %v3718
      %v5409 = vpop.f32.mrf.mxu0
      %v5410 = vadd.f32 0.0, %v5409
      %v5411 = vpop.f32.mrf.mxu0
      %5412 = vmatprep.mubr.f32.mxu0 0.0
      %5413 = vmatmul.mubr.f32.gmra.mxu0 %v3721
      %v5414 = vpop.f32.mrf.mxu0
      %v5415 = vadd.f32 0.0, %v5414
      %v5416 = vpop.f32.mrf.mxu0
      %5417 = vmatprep.mubr.f32.mxu0 0.0
      %5418 = vmatmul.mubr.f32.gmra.mxu0 %v3724
      %v5419 = vpop.f32.mrf.mxu0
      %v5420 = vadd.f32 0.0, %v5419
      %v5421 = vpop.f32.mrf.mxu0
      %5422 = vmatprep.mubr.f32.mxu0 0.0
      %5423 = vmatmul.mubr.f32.gmra.mxu0 %v3727
      %v5424 = vpop.f32.mrf.mxu0
      %v5425 = vadd.f32 0.0, %v5424
      %v5426 = vpop.f32.mrf.mxu0
      %5427 = vmatprep.mubr.f32.mxu0 0.0
      %5428 = vmatmul.mubr.f32.gmra.mxu0 %v3730
      %v5429 = vpop.f32.mrf.mxu0
      %v5430 = vadd.f32 0.0, %v5429
      %v5431 = vpop.f32.mrf.mxu0
      %5432 = vmatprep.mubr.f32.mxu0 0.0
      %5433 = vmatmul.mubr.f32.gmra.mxu0 %v3733
      %v5434 = vpop.f32.mrf.mxu0
      %v5435 = vadd.f32 0.0, %v5434
      %v5436 = vpop.f32.mrf.mxu0
      %5437 = vmatprep.mubr.f32.mxu0 0.0
      %5438 = vmatmul.mubr.f32.gmra.mxu0 %v3736
      %v5439 = vpop.f32.mrf.mxu0
      %v5440 = vadd.f32 0.0, %v5439
      %v5441 = vpop.f32.mrf.mxu0
      %5442 = vmatprep.mubr.f32.mxu0 0.0
      %5443 = vmatmul.mubr.f32.gmra.mxu0 %v3739
      %v5444 = vpop.f32.mrf.mxu0
      %v5445 = vadd.f32 0.0, %v5444
      %v5446 = vpop.f32.mrf.mxu0
      %5447 = vmatprep.mubr.f32.mxu0 0.0
      %5448 = vmatmul.mubr.f32.gmra.mxu0 %v3742
      %v5449 = vpop.f32.mrf.mxu0
      %v5450 = vadd.f32 0.0, %v5449
      %v5451 = vpop.f32.mrf.mxu0
      %5452 = vmatprep.mubr.f32.mxu0 0.0
      %5453 = vmatmul.mubr.f32.gmra.mxu0 %v3745
      %v5454 = vpop.f32.mrf.mxu0
      %v5455 = vadd.f32 0.0, %v5454
      %v5456 = vpop.f32.mrf.mxu0
      %5457 = vmatprep.mubr.f32.mxu0 0.0
      %5458 = vmatmul.mubr.f32.gmra.mxu0 %v3748
      %v5459 = vpop.f32.mrf.mxu0
      %v5460 = vadd.f32 0.0, %v5459
      %v5461 = vpop.f32.mrf.mxu0
      %5462 = vmatprep.mubr.f32.mxu0 0.0
      %5463 = vmatmul.mubr.f32.gmra.mxu0 %v3751
      %v5464 = vpop.f32.mrf.mxu0
      %v5465 = vadd.f32 0.0, %v5464
      %v5466 = vpop.f32.mrf.mxu0
      %5467 = vmatprep.mubr.f32.mxu0 0.0
      %5468 = vmatmul.mubr.f32.gmra.mxu0 %v3754
      %v5469 = vpop.f32.mrf.mxu0
      %v5470 = vadd.f32 0.0, %v5469
      %v5471 = vpop.f32.mrf.mxu0
      %5472 = vmatprep.mubr.f32.mxu0 0.0
      %5473 = vmatmul.mubr.f32.gmra.mxu0 %v3757
      %v5474 = vpop.f32.mrf.mxu0
      %v5475 = vadd.f32 0.0, %v5474
      %v5476 = vpop.f32.mrf.mxu0
      %5477 = vmatprep.mubr.f32.mxu0 0.0
      %5478 = vmatmul.mubr.f32.gmra.mxu0 %v3760
      %v5479 = vpop.f32.mrf.mxu0
      %v5480 = vadd.f32 0.0, %v5479
      %v5481 = vpop.f32.mrf.mxu0
      %5482 = vmatprep.mubr.f32.mxu0 0.0
      %5483 = vmatmul.mubr.f32.gmra.mxu0 %v4451
      %v5484 = vpop.f32.mrf.mxu0
      %v5485 = vadd.f32 0.0, %v5484
      %v5486 = vpop.f32.mrf.mxu0
      %5487 = vmatprep.mubr.f32.mxu0 0.0
      %5488 = vmatmul.mubr.f32.gmra.mxu0 %v4454
      %v5489 = vpop.f32.mrf.mxu0
      %v5490 = vadd.f32 0.0, %v5489
      %v5491 = vpop.f32.mrf.mxu0
      %5492 = vmatprep.mubr.f32.mxu0 0.0
      %5493 = vmatmul.mubr.f32.gmra.mxu0 %v5273
      %v5494 = vpop.f32.mrf.mxu0
      %v5495 = vadd.f32 0.0, %v5494
      %v5496 = vpop.f32.mrf.mxu0
      %5497 = vmatprep.mubr.f32.mxu0 0.0
      %5498 = vmatmul.mubr.f32.gmra.mxu0 %v742
      %v5499 = vpop.f32.mrf.mxu0
      %v5500 = vadd.f32 0.0, %v5499
      %v5501 = vpop.f32.mrf.mxu0
      %5502 = vdwg.mxu0
      %v5503 = vadd.f32 %v5231, %v5345
      %v5504 = vadd.f32 %v5232, %v5350
      %v5505 = vadd.f32 %v5233, %v5355
      %v5506 = vadd.f32 %v5234, %v5360
      %v5507 = vadd.f32 %v5235, %v5365
      %v5508 = vadd.f32 %v5236, %v5370
      %v5509 = vadd.f32 %v5237, %v5375
      %v5510 = vadd.f32 %v5238, %v5380
      %v5511 = vadd.f32 %v5239, %v5385
      %v5512 = vadd.f32 %v5240, %v5390
      %v5513 = vadd.f32 %v5241, %v5395
      %v5514 = vadd.f32 %v5242, %v5400
      %v5515 = vadd.f32 %v5243, %v5405
      %v5516 = vadd.f32 %v5244, %v5410
      %v5517 = vadd.f32 %v5245, %v5415
      %v5518 = vadd.f32 %v5246, %v5420
      %v5519 = vadd.f32 %v5247, %v5425
      %v5520 = vadd.f32 %v5248, %v5430
      %v5521 = vadd.f32 %v5249, %v5435
      %v5522 = vadd.f32 %v5250, %v5440
      %v5523 = vadd.f32 %v5251, %v5445
      %v5524 = vadd.f32 %v5252, %v5450
      %v5525 = vadd.f32 %v5253, %v5455
      %v5526 = vadd.f32 %v5254, %v5460
      %v5527 = vadd.f32 %v5255, %v5465
      %v5528 = vadd.f32 %v5256, %v5470
      %v5529 = vadd.f32 %v5257, %v5475
      %v5530 = vadd.f32 %v5258, %v5480
      %v5531 = vadd.f32 %v5259, %v5485
      %v5532 = vadd.f32 %v5260, %v5490
      %v5533 = vadd.f32 %v5261, %v5495
      %v5534 = vadd.f32 %v5262, %v5500
      %s5535 = scalar_lea.vmem %s4, 28
      %v5536 = vld [vmem:[%s5535] sm:$0xf]
      %v5538 = vsel %vm509, %v5536, 0
      %5540 = vmatprep.subr.mxu0 0.0
      %5541 = vmatpush1.msra.mxu0 0.0
      %5542 = vmatprep.subr.mxu0 0.0
      %5543 = vmatpush1.msra.mxu0 0.0
      %5544 = vmatprep.subr.mxu0 0.0
      %5545 = vmatpush1.msra.mxu0 0.0
      %5546 = vmatprep.subr.mxu0 0.0
      %5547 = vmatpush1.msra.mxu0 0.0
      %5548 = vmatprep.subr.mxu0 0.0
      %5549 = vmatpush1.msra.mxu0 0.0
      %5550 = vmatprep.subr.mxu0 0.0
      %5551 = vmatpush1.msra.mxu0 0.0
      %5552 = vmatprep.subr.mxu0 0.0
      %5553 = vmatpush1.msra.mxu0 0.0
      %5554 = vmatprep.subr.mxu0 0.0
      %5555 = vmatpush1.msra.mxu0 0.0
      %5556 = vmatprep.subr.mxu0 0.0
      %5557 = vmatpush1.msra.mxu0 0.0
      %5558 = vmatprep.subr.mxu0 0.0
      %5559 = vmatpush1.msra.mxu0 0.0
      %5560 = vmatprep.subr.mxu0 0.0
      %5561 = vmatpush1.msra.mxu0 0.0
      %5562 = vmatprep.subr.mxu0 0.0
      %5563 = vmatpush1.msra.mxu0 0.0
      %5564 = vmatprep.subr.mxu0 0.0
      %5565 = vmatpush1.msra.mxu0 0.0
      %5566 = vmatprep.subr.mxu0 0.0
      %5567 = vmatpush1.msra.mxu0 0.0
      %5568 = vmatprep.subr.mxu0 0.0
      %5569 = vmatpush1.msra.mxu0 0.0
      %5570 = vmatprep.subr.mxu0 0.0
      %5571 = vmatpush1.msra.mxu0 %v5538
      %5572 = vmatprep.subr.mxu0 0.0
      %5573 = vmatpush2.msra.mxu0 0.0
      %5574 = vmatprep.subr.mxu0 0.0
      %5575 = vmatpush2.msra.mxu0 0.0
      %5576 = vmatprep.subr.mxu0 0.0
      %5577 = vmatpush2.msra.mxu0 0.0
      %5578 = vmatprep.subr.mxu0 0.0
      %5579 = vmatpush2.msra.mxu0 0.0
      %5580 = vmatprep.subr.mxu0 0.0
      %5581 = vmatpush2.msra.mxu0 0.0
      %5582 = vmatprep.subr.mxu0 0.0
      %5583 = vmatpush2.msra.mxu0 0.0
      %5584 = vmatprep.subr.mxu0 0.0
      %5585 = vmatpush2.msra.mxu0 0.0
      %5586 = vmatprep.subr.mxu0 0.0
      %5587 = vmatpush2.msra.mxu0 0.0
      %5588 = vmatprep.subr.mxu0 0.0
      %5589 = vmatpush2.msra.mxu0 0.0
      %5590 = vmatprep.subr.mxu0 0.0
      %5591 = vmatpush2.msra.mxu0 0.0
      %5592 = vmatprep.subr.mxu0 0.0
      %5593 = vmatpush2.msra.mxu0 0.0
      %5594 = vmatprep.subr.mxu0 0.0
      %5595 = vmatpush2.msra.mxu0 0.0
      %5596 = vmatprep.subr.mxu0 0.0
      %5597 = vmatpush2.msra.mxu0 0.0
      %5598 = vmatprep.subr.mxu0 0.0
      %5599 = vmatpush2.msra.mxu0 0.0
      %5600 = vmatprep.subr.mxu0 0.0
      %5601 = vmatpush2.msra.mxu0 0.0
      %5602 = vmatprep.subr.mxu0 0.0
      %5603 = vmatpush2.msra.mxu0 0.0
      %5604 = vmatprep.mubr.f32.mxu0 0.0
      %5605 = vmatmul.mubr.f32.gmra.mxu0 %v3358
      %v5606 = vpop.f32.mrf.mxu0
      %v5607 = vadd.f32 0.0, %v5606
      %v5608 = vpop.f32.mrf.mxu0
      %5609 = vmatprep.mubr.f32.mxu0 0.0
      %5610 = vmatmul.mubr.f32.gmra.mxu0 %v3361
      %v5611 = vpop.f32.mrf.mxu0
      %v5612 = vadd.f32 0.0, %v5611
      %v5613 = vpop.f32.mrf.mxu0
      %5614 = vmatprep.mubr.f32.mxu0 0.0
      %5615 = vmatmul.mubr.f32.gmra.mxu0 %v3364
      %v5616 = vpop.f32.mrf.mxu0
      %v5617 = vadd.f32 0.0, %v5616
      %v5618 = vpop.f32.mrf.mxu0
      %5619 = vmatprep.mubr.f32.mxu0 0.0
      %5620 = vmatmul.mubr.f32.gmra.mxu0 %v3367
      %v5621 = vpop.f32.mrf.mxu0
      %v5622 = vadd.f32 0.0, %v5621
      %v5623 = vpop.f32.mrf.mxu0
      %5624 = vmatprep.mubr.f32.mxu0 0.0
      %5625 = vmatmul.mubr.f32.gmra.mxu0 %v3370
      %v5626 = vpop.f32.mrf.mxu0
      %v5627 = vadd.f32 0.0, %v5626
      %v5628 = vpop.f32.mrf.mxu0
      %5629 = vmatprep.mubr.f32.mxu0 0.0
      %5630 = vmatmul.mubr.f32.gmra.mxu0 %v3373
      %v5631 = vpop.f32.mrf.mxu0
      %v5632 = vadd.f32 0.0, %v5631
      %v5633 = vpop.f32.mrf.mxu0
      %5634 = vmatprep.mubr.f32.mxu0 0.0
      %5635 = vmatmul.mubr.f32.gmra.mxu0 %v3376
      %v5636 = vpop.f32.mrf.mxu0
      %v5637 = vadd.f32 0.0, %v5636
      %v5638 = vpop.f32.mrf.mxu0
      %5639 = vmatprep.mubr.f32.mxu0 0.0
      %5640 = vmatmul.mubr.f32.gmra.mxu0 %v3379
      %v5641 = vpop.f32.mrf.mxu0
      %v5642 = vadd.f32 0.0, %v5641
      %v5643 = vpop.f32.mrf.mxu0
      %5644 = vmatprep.mubr.f32.mxu0 0.0
      %5645 = vmatmul.mubr.f32.gmra.mxu0 %v3382
      %v5646 = vpop.f32.mrf.mxu0
      %v5647 = vadd.f32 0.0, %v5646
      %v5648 = vpop.f32.mrf.mxu0
      %5649 = vmatprep.mubr.f32.mxu0 0.0
      %5650 = vmatmul.mubr.f32.gmra.mxu0 %v3385
      %v5651 = vpop.f32.mrf.mxu0
      %v5652 = vadd.f32 0.0, %v5651
      %v5653 = vpop.f32.mrf.mxu0
      %5654 = vmatprep.mubr.f32.mxu0 0.0
      %5655 = vmatmul.mubr.f32.gmra.mxu0 %v3388
      %v5656 = vpop.f32.mrf.mxu0
      %v5657 = vadd.f32 0.0, %v5656
      %v5658 = vpop.f32.mrf.mxu0
      %5659 = vmatprep.mubr.f32.mxu0 0.0
      %5660 = vmatmul.mubr.f32.gmra.mxu0 %v3391
      %v5661 = vpop.f32.mrf.mxu0
      %v5662 = vadd.f32 0.0, %v5661
      %v5663 = vpop.f32.mrf.mxu0
      %5664 = vmatprep.mubr.f32.mxu0 0.0
      %5665 = vmatmul.mubr.f32.gmra.mxu0 %v3394
      %v5666 = vpop.f32.mrf.mxu0
      %v5667 = vadd.f32 0.0, %v5666
      %v5668 = vpop.f32.mrf.mxu0
      %5669 = vmatprep.mubr.f32.mxu0 0.0
      %5670 = vmatmul.mubr.f32.gmra.mxu0 %v3397
      %v5671 = vpop.f32.mrf.mxu0
      %v5672 = vadd.f32 0.0, %v5671
      %v5673 = vpop.f32.mrf.mxu0
      %5674 = vmatprep.mubr.f32.mxu0 0.0
      %5675 = vmatmul.mubr.f32.gmra.mxu0 %v3400
      %v5676 = vpop.f32.mrf.mxu0
      %v5677 = vadd.f32 0.0, %v5676
      %v5678 = vpop.f32.mrf.mxu0
      %5679 = vmatprep.mubr.f32.mxu0 0.0
      %5680 = vmatmul.mubr.f32.gmra.mxu0 %v3403
      %v5681 = vpop.f32.mrf.mxu0
      %v5682 = vadd.f32 0.0, %v5681
      %v5683 = vpop.f32.mrf.mxu0
      %5684 = vmatprep.mubr.f32.mxu0 0.0
      %5685 = vmatmul.mubr.f32.gmra.mxu0 %v3406
      %v5686 = vpop.f32.mrf.mxu0
      %v5687 = vadd.f32 0.0, %v5686
      %v5688 = vpop.f32.mrf.mxu0
      %5689 = vmatprep.mubr.f32.mxu0 0.0
      %5690 = vmatmul.mubr.f32.gmra.mxu0 %v3409
      %v5691 = vpop.f32.mrf.mxu0
      %v5692 = vadd.f32 0.0, %v5691
      %v5693 = vpop.f32.mrf.mxu0
      %5694 = vmatprep.mubr.f32.mxu0 0.0
      %5695 = vmatmul.mubr.f32.gmra.mxu0 %v3412
      %v5696 = vpop.f32.mrf.mxu0
      %v5697 = vadd.f32 0.0, %v5696
      %v5698 = vpop.f32.mrf.mxu0
      %5699 = vmatprep.mubr.f32.mxu0 0.0
      %5700 = vmatmul.mubr.f32.gmra.mxu0 %v3415
      %v5701 = vpop.f32.mrf.mxu0
      %v5702 = vadd.f32 0.0, %v5701
      %v5703 = vpop.f32.mrf.mxu0
      %5704 = vmatprep.mubr.f32.mxu0 0.0
      %5705 = vmatmul.mubr.f32.gmra.mxu0 %v3418
      %v5706 = vpop.f32.mrf.mxu0
      %v5707 = vadd.f32 0.0, %v5706
      %v5708 = vpop.f32.mrf.mxu0
      %5709 = vmatprep.mubr.f32.mxu0 0.0
      %5710 = vmatmul.mubr.f32.gmra.mxu0 %v3421
      %v5711 = vpop.f32.mrf.mxu0
      %v5712 = vadd.f32 0.0, %v5711
      %v5713 = vpop.f32.mrf.mxu0
      %5714 = vmatprep.mubr.f32.mxu0 0.0
      %5715 = vmatmul.mubr.f32.gmra.mxu0 %v3424
      %v5716 = vpop.f32.mrf.mxu0
      %v5717 = vadd.f32 0.0, %v5716
      %v5718 = vpop.f32.mrf.mxu0
      %5719 = vmatprep.mubr.f32.mxu0 0.0
      %5720 = vmatmul.mubr.f32.gmra.mxu0 %v3427
      %v5721 = vpop.f32.mrf.mxu0
      %v5722 = vadd.f32 0.0, %v5721
      %v5723 = vpop.f32.mrf.mxu0
      %5724 = vmatprep.mubr.f32.mxu0 0.0
      %5725 = vmatmul.mubr.f32.gmra.mxu0 %v3430
      %v5726 = vpop.f32.mrf.mxu0
      %v5727 = vadd.f32 0.0, %v5726
      %v5728 = vpop.f32.mrf.mxu0
      %5729 = vmatprep.mubr.f32.mxu0 0.0
      %5730 = vmatmul.mubr.f32.gmra.mxu0 %v3433
      %v5731 = vpop.f32.mrf.mxu0
      %v5732 = vadd.f32 0.0, %v5731
      %v5733 = vpop.f32.mrf.mxu0
      %5734 = vmatprep.mubr.f32.mxu0 0.0
      %5735 = vmatmul.mubr.f32.gmra.mxu0 %v3436
      %v5736 = vpop.f32.mrf.mxu0
      %v5737 = vadd.f32 0.0, %v5736
      %v5738 = vpop.f32.mrf.mxu0
      %5739 = vmatprep.mubr.f32.mxu0 0.0
      %5740 = vmatmul.mubr.f32.gmra.mxu0 %v3439
      %v5741 = vpop.f32.mrf.mxu0
      %v5742 = vadd.f32 0.0, %v5741
      %v5743 = vpop.f32.mrf.mxu0
      %5744 = vmatprep.mubr.f32.mxu0 0.0
      %5745 = vmatmul.mubr.f32.gmra.mxu0 %v4719
      %v5746 = vpop.f32.mrf.mxu0
      %v5747 = vadd.f32 0.0, %v5746
      %v5748 = vpop.f32.mrf.mxu0
      %5749 = vmatprep.mubr.f32.mxu0 0.0
      %5750 = vmatmul.mubr.f32.gmra.mxu0 %v4722
      %v5751 = vpop.f32.mrf.mxu0
      %v5752 = vadd.f32 0.0, %v5751
      %v5753 = vpop.f32.mrf.mxu0
      %5754 = vmatprep.mubr.f32.mxu0 0.0
      %5755 = vmatmul.mubr.f32.gmra.mxu0 %v417
      %v5756 = vpop.f32.mrf.mxu0
      %v5757 = vadd.f32 0.0, %v5756
      %v5758 = vpop.f32.mrf.mxu0
      %5759 = vmatprep.mubr.f32.mxu0 0.0
      %5760 = vmatmul.mubr.f32.gmra.mxu0 %v417
      %v5761 = vpop.f32.mrf.mxu0
      %v5762 = vadd.f32 0.0, %v5761
      %v5763 = vpop.f32.mrf.mxu0
      %5764 = vdwg.mxu0
      %v5765 = vadd.f32 %v5503, %v5607
      %v5766 = vadd.f32 %v5504, %v5612
      %v5767 = vadd.f32 %v5505, %v5617
      %v5768 = vadd.f32 %v5506, %v5622
      %v5769 = vadd.f32 %v5507, %v5627
      %v5770 = vadd.f32 %v5508, %v5632
      %v5771 = vadd.f32 %v5509, %v5637
      %v5772 = vadd.f32 %v5510, %v5642
      %v5773 = vadd.f32 %v5511, %v5647
      %v5774 = vadd.f32 %v5512, %v5652
      %v5775 = vadd.f32 %v5513, %v5657
      %v5776 = vadd.f32 %v5514, %v5662
      %v5777 = vadd.f32 %v5515, %v5667
      %v5778 = vadd.f32 %v5516, %v5672
      %v5779 = vadd.f32 %v5517, %v5677
      %v5780 = vadd.f32 %v5518, %v5682
      %v5781 = vadd.f32 %v5519, %v5687
      %v5782 = vadd.f32 %v5520, %v5692
      %v5783 = vadd.f32 %v5521, %v5697
      %v5784 = vadd.f32 %v5522, %v5702
      %v5785 = vadd.f32 %v5523, %v5707
      %v5786 = vadd.f32 %v5524, %v5712
      %v5787 = vadd.f32 %v5525, %v5717
      %v5788 = vadd.f32 %v5526, %v5722
      %v5789 = vadd.f32 %v5527, %v5727
      %v5790 = vadd.f32 %v5528, %v5732
      %v5791 = vadd.f32 %v5529, %v5737
      %v5792 = vadd.f32 %v5530, %v5742
      %v5793 = vadd.f32 %v5531, %v5747
      %v5794 = vadd.f32 %v5532, %v5752
      %v5795 = vadd.f32 %v5533, %v5757
      %v5796 = vadd.f32 %v5534, %v5762
      %v5797 = vsel %vm1092, %v4985, 0.0
      %v5798 = vsel %vm1092, 0.0, %v3992
      %v5799 = vsel %vm285, %v5797, 0.0
      %v5800 = vsel %vm285, %v5798, 0.0
      %s5801 = scalar_lea.vmem %s4, 32
      %v5802 = vld [vmem:[%s5801] sm:$0xf]
      %v5804 = vsel %vm415, %v5799, 0
      %v5807 = vsel %vm415, %v5800, 0
      %v5810 = vsel %vm509, %v5802, 0
      %5812 = vmatprep.subr.mxu0 0.0
      %5813 = vmatpush1.msra.mxu0 0.0
      %5814 = vmatprep.subr.mxu0 0.0
      %5815 = vmatpush1.msra.mxu0 0.0
      %5816 = vmatprep.subr.mxu0 0.0
      %5817 = vmatpush1.msra.mxu0 0.0
      %5818 = vmatprep.subr.mxu0 0.0
      %5819 = vmatpush1.msra.mxu0 0.0
      %5820 = vmatprep.subr.mxu0 0.0
      %5821 = vmatpush1.msra.mxu0 0.0
      %5822 = vmatprep.subr.mxu0 0.0
      %5823 = vmatpush1.msra.mxu0 0.0
      %5824 = vmatprep.subr.mxu0 0.0
      %5825 = vmatpush1.msra.mxu0 0.0
      %5826 = vmatprep.subr.mxu0 0.0
      %5827 = vmatpush1.msra.mxu0 0.0
      %5828 = vmatprep.subr.mxu0 0.0
      %5829 = vmatpush1.msra.mxu0 0.0
      %5830 = vmatprep.subr.mxu0 0.0
      %5831 = vmatpush1.msra.mxu0 0.0
      %5832 = vmatprep.subr.mxu0 0.0
      %5833 = vmatpush1.msra.mxu0 0.0
      %5834 = vmatprep.subr.mxu0 0.0
      %5835 = vmatpush1.msra.mxu0 0.0
      %5836 = vmatprep.subr.mxu0 0.0
      %5837 = vmatpush1.msra.mxu0 0.0
      %5838 = vmatprep.subr.mxu0 0.0
      %5839 = vmatpush1.msra.mxu0 0.0
      %5840 = vmatprep.subr.mxu0 0.0
      %5841 = vmatpush1.msra.mxu0 0.0
      %5842 = vmatprep.subr.mxu0 0.0
      %5843 = vmatpush1.msra.mxu0 %v5810
      %5844 = vmatprep.subr.mxu0 0.0
      %5845 = vmatpush2.msra.mxu0 0.0
      %5846 = vmatprep.subr.mxu0 0.0
      %5847 = vmatpush2.msra.mxu0 0.0
      %5848 = vmatprep.subr.mxu0 0.0
      %5849 = vmatpush2.msra.mxu0 0.0
      %5850 = vmatprep.subr.mxu0 0.0
      %5851 = vmatpush2.msra.mxu0 0.0
      %5852 = vmatprep.subr.mxu0 0.0
      %5853 = vmatpush2.msra.mxu0 0.0
      %5854 = vmatprep.subr.mxu0 0.0
      %5855 = vmatpush2.msra.mxu0 0.0
      %5856 = vmatprep.subr.mxu0 0.0
      %5857 = vmatpush2.msra.mxu0 0.0
      %5858 = vmatprep.subr.mxu0 0.0
      %5859 = vmatpush2.msra.mxu0 0.0
      %5860 = vmatprep.subr.mxu0 0.0
      %5861 = vmatpush2.msra.mxu0 0.0
      %5862 = vmatprep.subr.mxu0 0.0
      %5863 = vmatpush2.msra.mxu0 0.0
      %5864 = vmatprep.subr.mxu0 0.0
      %5865 = vmatpush2.msra.mxu0 0.0
      %5866 = vmatprep.subr.mxu0 0.0
      %5867 = vmatpush2.msra.mxu0 0.0
      %5868 = vmatprep.subr.mxu0 0.0
      %5869 = vmatpush2.msra.mxu0 0.0
      %5870 = vmatprep.subr.mxu0 0.0
      %5871 = vmatpush2.msra.mxu0 0.0
      %5872 = vmatprep.subr.mxu0 0.0
      %5873 = vmatpush2.msra.mxu0 0.0
      %5874 = vmatprep.subr.mxu0 0.0
      %5875 = vmatpush2.msra.mxu0 0.0
      %5876 = vmatprep.mubr.f32.mxu0 0.0
      %5877 = vmatmul.mubr.f32.gmra.mxu0 %v4094
      %v5878 = vpop.f32.mrf.mxu0
      %v5879 = vadd.f32 0.0, %v5878
      %v5880 = vpop.f32.mrf.mxu0
      %5881 = vmatprep.mubr.f32.mxu0 0.0
      %5882 = vmatmul.mubr.f32.gmra.mxu0 %v4097
      %v5883 = vpop.f32.mrf.mxu0
      %v5884 = vadd.f32 0.0, %v5883
      %v5885 = vpop.f32.mrf.mxu0
      %5886 = vmatprep.mubr.f32.mxu0 0.0
      %5887 = vmatmul.mubr.f32.gmra.mxu0 %v4100
      %v5888 = vpop.f32.mrf.mxu0
      %v5889 = vadd.f32 0.0, %v5888
      %v5890 = vpop.f32.mrf.mxu0
      %5891 = vmatprep.mubr.f32.mxu0 0.0
      %5892 = vmatmul.mubr.f32.gmra.mxu0 %v4103
      %v5893 = vpop.f32.mrf.mxu0
      %v5894 = vadd.f32 0.0, %v5893
      %v5895 = vpop.f32.mrf.mxu0
      %5896 = vmatprep.mubr.f32.mxu0 0.0
      %5897 = vmatmul.mubr.f32.gmra.mxu0 %v4106
      %v5898 = vpop.f32.mrf.mxu0
      %v5899 = vadd.f32 0.0, %v5898
      %v5900 = vpop.f32.mrf.mxu0
      %5901 = vmatprep.mubr.f32.mxu0 0.0
      %5902 = vmatmul.mubr.f32.gmra.mxu0 %v4109
      %v5903 = vpop.f32.mrf.mxu0
      %v5904 = vadd.f32 0.0, %v5903
      %v5905 = vpop.f32.mrf.mxu0
      %5906 = vmatprep.mubr.f32.mxu0 0.0
      %5907 = vmatmul.mubr.f32.gmra.mxu0 %v4112
      %v5908 = vpop.f32.mrf.mxu0
      %v5909 = vadd.f32 0.0, %v5908
      %v5910 = vpop.f32.mrf.mxu0
      %5911 = vmatprep.mubr.f32.mxu0 0.0
      %5912 = vmatmul.mubr.f32.gmra.mxu0 %v4115
      %v5913 = vpop.f32.mrf.mxu0
      %v5914 = vadd.f32 0.0, %v5913
      %v5915 = vpop.f32.mrf.mxu0
      %5916 = vmatprep.mubr.f32.mxu0 0.0
      %5917 = vmatmul.mubr.f32.gmra.mxu0 %v4118
      %v5918 = vpop.f32.mrf.mxu0
      %v5919 = vadd.f32 0.0, %v5918
      %v5920 = vpop.f32.mrf.mxu0
      %5921 = vmatprep.mubr.f32.mxu0 0.0
      %5922 = vmatmul.mubr.f32.gmra.mxu0 %v4121
      %v5923 = vpop.f32.mrf.mxu0
      %v5924 = vadd.f32 0.0, %v5923
      %v5925 = vpop.f32.mrf.mxu0
      %5926 = vmatprep.mubr.f32.mxu0 0.0
      %5927 = vmatmul.mubr.f32.gmra.mxu0 %v4124
      %v5928 = vpop.f32.mrf.mxu0
      %v5929 = vadd.f32 0.0, %v5928
      %v5930 = vpop.f32.mrf.mxu0
      %5931 = vmatprep.mubr.f32.mxu0 0.0
      %5932 = vmatmul.mubr.f32.gmra.mxu0 %v4127
      %v5933 = vpop.f32.mrf.mxu0
      %v5934 = vadd.f32 0.0, %v5933
      %v5935 = vpop.f32.mrf.mxu0
      %5936 = vmatprep.mubr.f32.mxu0 0.0
      %5937 = vmatmul.mubr.f32.gmra.mxu0 %v4130
      %v5938 = vpop.f32.mrf.mxu0
      %v5939 = vadd.f32 0.0, %v5938
      %v5940 = vpop.f32.mrf.mxu0
      %5941 = vmatprep.mubr.f32.mxu0 0.0
      %5942 = vmatmul.mubr.f32.gmra.mxu0 %v4133
      %v5943 = vpop.f32.mrf.mxu0
      %v5944 = vadd.f32 0.0, %v5943
      %v5945 = vpop.f32.mrf.mxu0
      %5946 = vmatprep.mubr.f32.mxu0 0.0
      %5947 = vmatmul.mubr.f32.gmra.mxu0 %v4136
      %v5948 = vpop.f32.mrf.mxu0
      %v5949 = vadd.f32 0.0, %v5948
      %v5950 = vpop.f32.mrf.mxu0
      %5951 = vmatprep.mubr.f32.mxu0 0.0
      %5952 = vmatmul.mubr.f32.gmra.mxu0 %v4139
      %v5953 = vpop.f32.mrf.mxu0
      %v5954 = vadd.f32 0.0, %v5953
      %v5955 = vpop.f32.mrf.mxu0
      %5956 = vmatprep.mubr.f32.mxu0 0.0
      %5957 = vmatmul.mubr.f32.gmra.mxu0 %v4142
      %v5958 = vpop.f32.mrf.mxu0
      %v5959 = vadd.f32 0.0, %v5958
      %v5960 = vpop.f32.mrf.mxu0
      %5961 = vmatprep.mubr.f32.mxu0 0.0
      %5962 = vmatmul.mubr.f32.gmra.mxu0 %v4145
      %v5963 = vpop.f32.mrf.mxu0
      %v5964 = vadd.f32 0.0, %v5963
      %v5965 = vpop.f32.mrf.mxu0
      %5966 = vmatprep.mubr.f32.mxu0 0.0
      %5967 = vmatmul.mubr.f32.gmra.mxu0 %v4148
      %v5968 = vpop.f32.mrf.mxu0
      %v5969 = vadd.f32 0.0, %v5968
      %v5970 = vpop.f32.mrf.mxu0
      %5971 = vmatprep.mubr.f32.mxu0 0.0
      %5972 = vmatmul.mubr.f32.gmra.mxu0 %v4151
      %v5973 = vpop.f32.mrf.mxu0
      %v5974 = vadd.f32 0.0, %v5973
      %v5975 = vpop.f32.mrf.mxu0
      %5976 = vmatprep.mubr.f32.mxu0 0.0
      %5977 = vmatmul.mubr.f32.gmra.mxu0 %v4154
      %v5978 = vpop.f32.mrf.mxu0
      %v5979 = vadd.f32 0.0, %v5978
      %v5980 = vpop.f32.mrf.mxu0
      %5981 = vmatprep.mubr.f32.mxu0 0.0
      %5982 = vmatmul.mubr.f32.gmra.mxu0 %v4157
      %v5983 = vpop.f32.mrf.mxu0
      %v5984 = vadd.f32 0.0, %v5983
      %v5985 = vpop.f32.mrf.mxu0
      %5986 = vmatprep.mubr.f32.mxu0 0.0
      %5987 = vmatmul.mubr.f32.gmra.mxu0 %v4160
      %v5988 = vpop.f32.mrf.mxu0
      %v5989 = vadd.f32 0.0, %v5988
      %v5990 = vpop.f32.mrf.mxu0
      %5991 = vmatprep.mubr.f32.mxu0 0.0
      %5992 = vmatmul.mubr.f32.gmra.mxu0 %v4163
      %v5993 = vpop.f32.mrf.mxu0
      %v5994 = vadd.f32 0.0, %v5993
      %v5995 = vpop.f32.mrf.mxu0
      %5996 = vmatprep.mubr.f32.mxu0 0.0
      %5997 = vmatmul.mubr.f32.gmra.mxu0 %v4166
      %v5998 = vpop.f32.mrf.mxu0
      %v5999 = vadd.f32 0.0, %v5998
      %v6000 = vpop.f32.mrf.mxu0
      %6001 = vmatprep.mubr.f32.mxu0 0.0
      %6002 = vmatmul.mubr.f32.gmra.mxu0 %v4169
      %v6003 = vpop.f32.mrf.mxu0
      %v6004 = vadd.f32 0.0, %v6003
      %v6005 = vpop.f32.mrf.mxu0
      %6006 = vmatprep.mubr.f32.mxu0 0.0
      %6007 = vmatmul.mubr.f32.gmra.mxu0 %v4172
      %v6008 = vpop.f32.mrf.mxu0
      %v6009 = vadd.f32 0.0, %v6008
      %v6010 = vpop.f32.mrf.mxu0
      %6011 = vmatprep.mubr.f32.mxu0 0.0
      %6012 = vmatmul.mubr.f32.gmra.mxu0 %v4995
      %v6013 = vpop.f32.mrf.mxu0
      %v6014 = vadd.f32 0.0, %v6013
      %v6015 = vpop.f32.mrf.mxu0
      %6016 = vmatprep.mubr.f32.mxu0 0.0
      %6017 = vmatmul.mubr.f32.gmra.mxu0 %v4998
      %v6018 = vpop.f32.mrf.mxu0
      %v6019 = vadd.f32 0.0, %v6018
      %v6020 = vpop.f32.mrf.mxu0
      %6021 = vmatprep.mubr.f32.mxu0 0.0
      %6022 = vmatmul.mubr.f32.gmra.mxu0 %v5804
      %v6023 = vpop.f32.mrf.mxu0
      %v6024 = vadd.f32 0.0, %v6023
      %v6025 = vpop.f32.mrf.mxu0
      %6026 = vmatprep.mubr.f32.mxu0 0.0
      %6027 = vmatmul.mubr.f32.gmra.mxu0 %v1159
      %v6028 = vpop.f32.mrf.mxu0
      %v6029 = vadd.f32 0.0, %v6028
      %v6030 = vpop.f32.mrf.mxu0
      %6031 = vmatprep.mubr.f32.mxu0 0.0
      %6032 = vmatmul.mubr.f32.gmra.mxu0 %v5807
      %v6033 = vpop.f32.mrf.mxu0
      %v6034 = vadd.f32 0.0, %v6033
      %v6035 = vpop.f32.mrf.mxu0
      %6036 = vdwg.mxu0
      %v6037 = vadd.f32 %v5765, %v5879
      %v6038 = vadd.f32 %v5766, %v5884
      %v6039 = vadd.f32 %v5767, %v5889
      %v6040 = vadd.f32 %v5768, %v5894
      %v6041 = vadd.f32 %v5769, %v5899
      %v6042 = vadd.f32 %v5770, %v5904
      %v6043 = vadd.f32 %v5771, %v5909
      %v6044 = vadd.f32 %v5772, %v5914
      %v6045 = vadd.f32 %v5773, %v5919
      %v6046 = vadd.f32 %v5774, %v5924
      %v6047 = vadd.f32 %v5775, %v5929
      %v6048 = vadd.f32 %v5776, %v5934
      %v6049 = vadd.f32 %v5777, %v5939
      %v6050 = vadd.f32 %v5778, %v5944
      %v6051 = vadd.f32 %v5779, %v5949
      %v6052 = vadd.f32 %v5780, %v5954
      %v6053 = vadd.f32 %v5781, %v5959
      %v6054 = vadd.f32 %v5782, %v5964
      %v6055 = vadd.f32 %v5783, %v5969
      %v6056 = vadd.f32 %v5784, %v5974
      %v6057 = vadd.f32 %v5785, %v5979
      %v6058 = vadd.f32 %v5786, %v5984
      %v6059 = vadd.f32 %v5787, %v5989
      %v6060 = vadd.f32 %v5788, %v5994
      %v6061 = vadd.f32 %v5789, %v5999
      %v6062 = vadd.f32 %v5790, %v6004
      %v6063 = vadd.f32 %v5791, %v6009
      %v6064 = vadd.f32 %v5792, %v6014
      %v6065 = vadd.f32 %v5793, %v6019
      %v6066 = vadd.f32 %v5794, %v6024
      %v6067 = vadd.f32 %v5795, %v6029
      %v6068 = vadd.f32 %v5796, %v6034
      %v6069 = vld [vmem:[%s5] sm:$0x1]
      %v6071 = vlaneseq
      %v6072 = vshrl.u32 %v6071, 7
      %v6073 = vsub.s32 0, %v6072
      %v6074 = vrot.slane %v6069, %v6073
      %v6076 = vmul.f32 %v6037, %v6074
      %v6077 = vmul.f32 %v6038, %v6074
      %v6078 = vmul.f32 %v6039, %v6074
      %v6079 = vmul.f32 %v6040, %v6074
      %v6080 = vmul.f32 %v6041, %v6074
      %v6081 = vmul.f32 %v6042, %v6074
      %v6082 = vmul.f32 %v6043, %v6074
      %v6083 = vmul.f32 %v6044, %v6074
      %v6084 = vmul.f32 %v6045, %v6074
      %v6085 = vmul.f32 %v6046, %v6074
      %v6086 = vmul.f32 %v6047, %v6074
      %v6087 = vmul.f32 %v6048, %v6074
      %v6088 = vmul.f32 %v6049, %v6074
      %v6089 = vmul.f32 %v6050, %v6074
      %v6090 = vmul.f32 %v6051, %v6074
      %v6091 = vmul.f32 %v6052, %v6074
      %v6092 = vmul.f32 %v6053, %v6074
      %v6093 = vmul.f32 %v6054, %v6074
      %v6094 = vmul.f32 %v6055, %v6074
      %v6095 = vmul.f32 %v6056, %v6074
      %v6096 = vmul.f32 %v6057, %v6074
      %v6097 = vmul.f32 %v6058, %v6074
      %v6098 = vmul.f32 %v6059, %v6074
      %v6099 = vmul.f32 %v6060, %v6074
      %v6100 = vmul.f32 %v6061, %v6074
      %v6101 = vmul.f32 %v6062, %v6074
      %v6102 = vmul.f32 %v6063, %v6074
      %v6103 = vmul.f32 %v6064, %v6074
      %v6104 = vmul.f32 %v6065, %v6074
      %v6105 = vmul.f32 %v6066, %v6074
      %v6106 = vmul.f32 %v6067, %v6074
      %v6107 = vmul.f32 %v6068, %v6074
      %v6108 = vld [vmem:[%s6] sm:$0x1]
      %v6110 = vlaneseq
      %v6111 = vshrl.u32 %v6110, 7
      %v6112 = vsub.s32 0, %v6111
      %v6113 = vrot.slane %v6108, %v6112
      %v6115 = vadd.f32 %v6076, %v6113
      %v6116 = vadd.f32 %v6077, %v6113
      %v6117 = vadd.f32 %v6078, %v6113
      %v6118 = vadd.f32 %v6079, %v6113
      %v6119 = vadd.f32 %v6080, %v6113
      %v6120 = vadd.f32 %v6081, %v6113
      %v6121 = vadd.f32 %v6082, %v6113
      %v6122 = vadd.f32 %v6083, %v6113
      %v6123 = vadd.f32 %v6084, %v6113
      %v6124 = vadd.f32 %v6085, %v6113
      %v6125 = vadd.f32 %v6086, %v6113
      %v6126 = vadd.f32 %v6087, %v6113
      %v6127 = vadd.f32 %v6088, %v6113
      %v6128 = vadd.f32 %v6089, %v6113
      %v6129 = vadd.f32 %v6090, %v6113
      %v6130 = vadd.f32 %v6091, %v6113
      %v6131 = vadd.f32 %v6092, %v6113
      %v6132 = vadd.f32 %v6093, %v6113
      %v6133 = vadd.f32 %v6094, %v6113
      %v6134 = vadd.f32 %v6095, %v6113
      %v6135 = vadd.f32 %v6096, %v6113
      %v6136 = vadd.f32 %v6097, %v6113
      %v6137 = vadd.f32 %v6098, %v6113
      %v6138 = vadd.f32 %v6099, %v6113
      %v6139 = vadd.f32 %v6100, %v6113
      %v6140 = vadd.f32 %v6101, %v6113
      %v6141 = vadd.f32 %v6102, %v6113
      %v6142 = vadd.f32 %v6103, %v6113
      %v6143 = vadd.f32 %v6104, %v6113
      %v6144 = vadd.f32 %v6105, %v6113
      %v6145 = vadd.f32 %v6106, %v6113
      %v6146 = vadd.f32 %v6107, %v6113
      %v6147 = vadd.f32 %v286, %v6115
      %v6148 = vadd.f32 %v287, %v6116
      %v6149 = vadd.f32 %v288, %v6117
      %v6150 = vadd.f32 %v289, %v6118
      %v6151 = vadd.f32 %v290, %v6119
      %v6152 = vadd.f32 %v291, %v6120
      %v6153 = vadd.f32 %v292, %v6121
      %v6154 = vadd.f32 %v293, %v6122
      %v6155 = vadd.f32 %v294, %v6123
      %v6156 = vadd.f32 %v295, %v6124
      %v6157 = vadd.f32 %v296, %v6125
      %v6158 = vadd.f32 %v297, %v6126
      %v6159 = vadd.f32 %v298, %v6127
      %v6160 = vadd.f32 %v299, %v6128
      %v6161 = vadd.f32 %v300, %v6129
      %v6162 = vadd.f32 %v301, %v6130
      %v6163 = vadd.f32 %v302, %v6131
      %v6164 = vadd.f32 %v303, %v6132
      %v6165 = vadd.f32 %v304, %v6133
      %v6166 = vadd.f32 %v305, %v6134
      %v6167 = vadd.f32 %v306, %v6135
      %v6168 = vadd.f32 %v307, %v6136
      %v6169 = vadd.f32 %v308, %v6137
      %v6170 = vadd.f32 %v309, %v6138
      %v6171 = vadd.f32 %v310, %v6139
      %v6172 = vadd.f32 %v311, %v6140
      %v6173 = vadd.f32 %v312, %v6141
      %v6174 = vadd.f32 %v313, %v6142
      %v6175 = vadd.f32 %v314, %v6143
      %v6176 = vadd.f32 %v315, %v6144
      %v6177 = vadd.f32 %v316, %v6145
      %v6178 = vadd.f32 %v317, %v6146
      %v6179 = vmax.f32 %v6147, 0.0
      %v6180 = vmax.f32 %v6148, 0.0
      %v6181 = vmax.f32 %v6149, 0.0
      %v6182 = vmax.f32 %v6150, 0.0
      %v6183 = vmax.f32 %v6151, 0.0
      %v6184 = vmax.f32 %v6152, 0.0
      %v6185 = vmax.f32 %v6153, 0.0
      %v6186 = vmax.f32 %v6154, 0.0
      %v6187 = vmax.f32 %v6155, 0.0
      %v6188 = vmax.f32 %v6156, 0.0
      %v6189 = vmax.f32 %v6157, 0.0
      %v6190 = vmax.f32 %v6158, 0.0
      %v6191 = vmax.f32 %v6159, 0.0
      %v6192 = vmax.f32 %v6160, 0.0
      %v6193 = vmax.f32 %v6161, 0.0
      %v6194 = vmax.f32 %v6162, 0.0
      %v6195 = vmax.f32 %v6163, 0.0
      %v6196 = vmax.f32 %v6164, 0.0
      %v6197 = vmax.f32 %v6165, 0.0
      %v6198 = vmax.f32 %v6166, 0.0
      %v6199 = vmax.f32 %v6167, 0.0
      %v6200 = vmax.f32 %v6168, 0.0
      %v6201 = vmax.f32 %v6169, 0.0
      %v6202 = vmax.f32 %v6170, 0.0
      %v6203 = vmax.f32 %v6171, 0.0
      %v6204 = vmax.f32 %v6172, 0.0
      %v6205 = vmax.f32 %v6173, 0.0
      %v6206 = vmax.f32 %v6174, 0.0
      %v6207 = vmax.f32 %v6175, 0.0
      %v6208 = vmax.f32 %v6176, 0.0
      %v6209 = vmax.f32 %v6177, 0.0
      %v6210 = vmax.f32 %v6178, 0.0
      %6211 = vst.msk [vmem:[%s278] sm:$0xff] %vm415, %v6179
      %6212 = vst.msk [vmem:[%s278 + $0x8] sm:$0xff] %vm415, %v6180
      %6213 = vst.msk [vmem:[%s278 + $0x10] sm:$0xff] %vm415, %v6181
      %6214 = vst.msk [vmem:[%s278 + $0x18] sm:$0xff] %vm415, %v6182
      %6215 = vst.msk [vmem:[%s278 + $0x20] sm:$0xff] %vm415, %v6183
      %6216 = vst.msk [vmem:[%s278 + $0x28] sm:$0xff] %vm415, %v6184
      %6217 = vst.msk [vmem:[%s278 + $0x30] sm:$0xff] %vm415, %v6185
      %6218 = vst.msk [vmem:[%s278 + $0x38] sm:$0xff] %vm415, %v6186
      %6219 = vst.msk [vmem:[%s278 + $0x40] sm:$0xff] %vm415, %v6187
      %6220 = vst.msk [vmem:[%s278 + $0x48] sm:$0xff] %vm415, %v6188
      %6221 = vst.msk [vmem:[%s278 + $0x50] sm:$0xff] %vm415, %v6189
      %6222 = vst.msk [vmem:[%s278 + $0x58] sm:$0xff] %vm415, %v6190
      %6223 = vst.msk [vmem:[%s278 + $0x60] sm:$0xff] %vm415, %v6191
      %6224 = vst.msk [vmem:[%s278 + $0x68] sm:$0xff] %vm415, %v6192
      %6225 = vst.msk [vmem:[%s278 + $0x70] sm:$0xff] %vm415, %v6193
      %6226 = vst.msk [vmem:[%s278 + $0x78] sm:$0xff] %vm415, %v6194
      %6227 = vst.msk [vmem:[%s278 + $0x80] sm:$0xff] %vm415, %v6195
      %6228 = vst.msk [vmem:[%s278 + $0x88] sm:$0xff] %vm415, %v6196
      %6229 = vst.msk [vmem:[%s278 + $0x90] sm:$0xff] %vm415, %v6197
      %6230 = vst.msk [vmem:[%s278 + $0x98] sm:$0xff] %vm415, %v6198
      %6231 = vst.msk [vmem:[%s278 + $0xa0] sm:$0xff] %vm415, %v6199
      %6232 = vst.msk [vmem:[%s278 + $0xa8] sm:$0xff] %vm415, %v6200
      %6233 = vst.msk [vmem:[%s278 + $0xb0] sm:$0xff] %vm415, %v6201
      %6234 = vst.msk [vmem:[%s278 + $0xb8] sm:$0xff] %vm415, %v6202
      %6235 = vst.msk [vmem:[%s278 + $0xc0] sm:$0xff] %vm415, %v6203
      %6236 = vst.msk [vmem:[%s278 + $0xc8] sm:$0xff] %vm415, %v6204
      %6237 = vst.msk [vmem:[%s278 + $0xd0] sm:$0xff] %vm415, %v6205
      %6238 = vst.msk [vmem:[%s278 + $0xd8] sm:$0xff] %vm415, %v6206
      %6239 = vst.msk [vmem:[%s278 + $0xe0] sm:$0xff] %vm415, %v6207
      %6240 = vst.msk [vmem:[%s278 + $0xe8] sm:$0xff] %vm415, %v6208
      %6241 = vst.msk [vmem:[%s278 + $0xf0] sm:$0xff] %vm415, %v6209
      %6242 = vst.msk [vmem:[%s278 + $0xf8] sm:$0xff] %vm415, %v6210
      %p6243 = scmp.lt.s32.totalorder %s18, 1
      %s6244 = scalar_select %p6243, %s18, 1
      %s6245 = smul.addr %s6244, 32
      %s6246 = smul.addr %s6245, 8
      %s6247 = scalar_lea.vmem %s7, %s6246
      // Predicated region
      $region49: #{tpu_custom_call.1} parent=47 // pred_check
        %p6248 = pneg %p188
      $region50: #{tpu_custom_call.1} parent=47 // pred_check_branch
        %6250 = sbr.rel (%p6248) target = $region52
      $region51: #{tpu_custom_call.1} parent=47 // pred_region
        _
      $region52: #{tpu_custom_call.1} parent=47 // pred_fallthru
        _
    $region48: #{tpu_custom_call.1} parent=5 // pred_fallthru
      _
    %p6251 = scmp.le.s32.totalorder 2, %s13
    // Predicated region
    $region53: #{tpu_custom_call.1} parent=5 // pred_check
      %p6252 = pneg %p6251
    $region54: #{tpu_custom_call.1} parent=5 // pred_check_branch
      %6254 = sbr.rel (%p6252) target = $region56
    $region55: #{tpu_custom_call.1} parent=5 // pred_region
      %s6255 = ssub.s32 %s13, 2
      // Predicated region
      $region57: #{tpu_custom_call.1} parent=55 // pred_check
        %p6256 = pneg %p194
      $region58: #{tpu_custom_call.1} parent=55 // pred_check_branch
        %6258 = sbr.rel (%p6256) target = $region60
      $region59: #{tpu_custom_call.1} parent=55 // pred_region
        %p6259 = scmp.lt.s32.totalorder %s19, 1
        %s6260 = scalar_select %p6259, %s19, 1
        %s6261 = smul.addr %s6260, 32
        %s6262 = smul.addr %s6261, 8
        %s6263 = scalar_lea.vmem %s7, %s6262
      $region60: #{tpu_custom_call.1} parent=55 // pred_fallthru
        _
    $region56: #{tpu_custom_call.1} parent=5 // pred_fallthru
      _
  $region6: #{tpu_custom_call.1} parent=0 // loop_footer
    %s17 = sadd.s32 1, %s13
  $region7: #{tpu_custom_call.1} parent=0 // loop_footer_branch
    %12 = sbr.rel target = $region3
  $region8: #{tpu_custom_call.1} parent=0 // loop_exit
    _

</llo_original>
